<compile_context>
chip_gen: v7x
topology: tpu7x:2x2x1
jax: 0.10.0
libtpu: 0.0.40
codegen_flags: <defaults>
</compile_context>

<pallas_src>
import math
import functools

import jax
import jax.numpy as jnp
from jax import lax
from jax.experimental import pallas as pl
from jax.experimental.pallas import tpu as pltpu


# ----------------------------------------------------------------------------
# Tile picking: biggest candidate that evenly divides `dim`, else the full dim
# (full-dim blocks always satisfy the (8, 128) BlockSpec constraint).
# ----------------------------------------------------------------------------
def _pick_tile(dim, candidates):
    for c in candidates:
        if c <= dim and dim % c == 0:
            return c
    return dim


def _pick_head_group(n_heads, head_dim, max_heads=8, max_lanes=1024):
    """Heads processed per flash-attention grid step.

    Prefer the largest group (<= max_heads) whose lane width nh*head_dim is a
    multiple of 128 (unmasked lane-dense loads/stores) and small enough to keep
    the double-buffered Q/K/V VMEM footprint modest (v7x has 64 MiB physical).
    Fall back to all heads: block == full proj dim, which is always legal.
    """
    for nh in range(min(n_heads, max_heads), 0, -1):
        if n_heads % nh:
            continue
        lanes = nh * head_dim
        if lanes % 128 == 0 and lanes <= max_lanes:
            return nh
    return n_heads


# ----------------------------------------------------------------------------
# Kernel 1: tiled matmul (+ optional bias), f32 accumulator in VMEM scratch.
# ----------------------------------------------------------------------------
def _matmul_bias_kernel(x_ref, w_ref, b_ref, o_ref, acc_ref):
    @pl.when(pl.program_id(2) == 0)
    def _():
        acc_ref[...] = jnp.zeros_like(acc_ref)

    acc_ref[...] += jnp.dot(x_ref[...], w_ref[...],
                            preferred_element_type=jnp.float32)

    @pl.when(pl.program_id(2) == pl.num_programs(2) - 1)
    def _():
        o_ref[...] = (acc_ref[...] + b_ref[...].astype(jnp.float32)).astype(o_ref.dtype)


def _matmul_nobias_kernel(x_ref, w_ref, o_ref, acc_ref):
    @pl.when(pl.program_id(2) == 0)
    def _():
        acc_ref[...] = jnp.zeros_like(acc_ref)

    acc_ref[...] += jnp.dot(x_ref[...], w_ref[...],
                            preferred_element_type=jnp.float32)

    @pl.when(pl.program_id(2) == pl.num_programs(2) - 1)
    def _():
        o_ref[...] = acc_ref[...].astype(o_ref.dtype)


def tiled_matmul(x, w, bias=None):
    """x: [M, K], w: [K, N], bias: [N] or None -> [M, N]."""
    M, K = x.shape
    K2, N = w.shape
    assert K == K2

    # Larger tiles (v5e/v6e feedback): worst case ~11 MiB double-buffered, well
    # under the 64 MiB limit below (and under v7x physical VMEM).
    tm = _pick_tile(M, (512, 256, 128, 64, 32, 16, 8))
    tn = _pick_tile(N, (512, 256, 128))
    tk = _pick_tile(K, (1024, 512, 256, 128))
    grid = (M // tm, N // tn, K // tk)

    in_specs = [
        pl.BlockSpec((tm, tk), lambda i, j, k: (i, k)),
        pl.BlockSpec((tk, tn), lambda i, j, k: (k, j)),
    ]
    operands = [x, w]
    if bias is not None:
        in_specs.append(pl.BlockSpec((1, tn), lambda i, j, k: (0, j)))
        operands.append(bias.reshape(1, N))
        kernel = _matmul_bias_kernel
    else:
        kernel = _matmul_nobias_kernel

    itemsize = x.dtype.itemsize
    cost = pl.CostEstimate(
        flops=int(2 * M * N * K),
        transcendentals=0,
        bytes_accessed=int((M * K + K * N + M * N) * itemsize),
    )

    return pl.pallas_call(
        kernel,
        out_shape=jax.ShapeDtypeStruct((M, N), x.dtype),
        grid_spec=pltpu.PrefetchScalarGridSpec(
            num_scalar_prefetch=0,
            grid=grid,
            in_specs=in_specs,
            out_specs=pl.BlockSpec((tm, tn), lambda i, j, k: (i, j)),
            scratch_shapes=[pltpu.VMEM((tm, tn), jnp.float32)],
        ),
        compiler_params=pltpu.CompilerParams(
            dimension_semantics=("parallel", "parallel", "arbitrary"),
            vmem_limit_bytes=64 * 1024 * 1024,
        ),
        cost_estimate=cost,
    )(*operands)


# ----------------------------------------------------------------------------
# Kernel 2: flash-style attention core over head groups.
#   grid = (batch, head_group, s/tq, s/tkv), kv axis last ("arbitrary").
#   Q/K/V are indexed straight out of the projection output [s, b, 3, 1, n*d]
#   via BlockSpec index_maps (section 0/1/2); Q already carries the 1/sqrt(d)
#   scaling (folded into the weights). Online softmax in fp32; accumulator is a
#   lane-dense (tq, nh*d) scratch so the epilogue is ONE lane-dense store written
#   directly in the [s, b, proj] output layout.
# ----------------------------------------------------------------------------
def _flash_attn_kernel(q_ref, k_ref, v_ref, mask_ref, o_ref,
                       m_sc, l_sc, acc_sc, *, nh, d):
    kv = pl.program_id(3)

    @pl.when(kv == 0)
    def _():
        m_sc[...] = jnp.full_like(m_sc, -jnp.inf)
        l_sc[...] = jnp.zeros_like(l_sc)
        acc_sc[...] = jnp.zeros_like(acc_sc)

    # Mask tile shared by all heads in the group; True/nonzero == masked -> -10000.0.
    mask = mask_ref[0] != 0                              # [tq, tkv]
    neg = jnp.float32(-10000.0)
    # TODO(synk): kv-tile skipping for causal masks is not applied so that arbitrary
    # (padding-type) masks keep the exact -10000 / uniform-row reference semantics.

    for h in range(nh):                                  # static unroll over head group
        lo = h * d
        q_h = q_ref[:, 0, 0, 0, lo:lo + d]               # [tq, d]  (pre-scaled by 1/sqrt(d))
        k_h = k_ref[:, 0, 0, 0, lo:lo + d]               # [tkv, d]
        v_h = v_ref[:, 0, 0, 0, lo:lo + d]               # [tkv, d]

        # Q K^T as a last-axis contraction (no explicit transpose of K).
        s_h = lax.dot_general(q_h, k_h, (((1,), (1,)), ((), ())),
                              preferred_element_type=jnp.float32)   # [tq, tkv]
        s_h = jnp.where(mask, neg, s_h)

        # Online softmax (fp32, attention_softmax_in_fp32=True).
        m_prev = m_sc[:, h:h + 1]
        m_new = jnp.maximum(m_prev, jnp.max(s_h, axis=-1, keepdims=True))
        alpha = jnp.exp(m_prev - m_new)
        p_h = jnp.exp(s_h - m_new)
        l_sc[:, h:h + 1] = alpha * l_sc[:, h:h + 1] + jnp.sum(p_h, axis=-1, keepdims=True)
        acc_sc[:, lo:lo + d] = alpha * acc_sc[:, lo:lo + d] + jnp.dot(
            p_h.astype(v_h.dtype), v_h, preferred_element_type=jnp.float32)
        m_sc[:, h:h + 1] = m_new

    # TODO(synk): attention dropout runs with p=0.0 (deterministic); torch's stateful
    # CUDA RNG tracker has no direct Pallas equivalent.

    @pl.when(kv == pl.num_programs(3) - 1)
    def _():
        inv_l = pl.reciprocal(l_sc[...], approx=True)    # [tq, nh], EUP reciprocal
        for h in range(nh):
            lo = h * d
            acc_sc[:, lo:lo + d] = acc_sc[:, lo:lo + d] * inv_l[:, h:h + 1]
        # Single lane-dense store, directly in the [s, b, proj] output layout.
        o_ref[:, 0, 0, :] = acc_sc[...].astype(o_ref.dtype)


def flash_attention(qkv, mask, *, n_heads, head_dim):
    """qkv: [s, b, 3, 1, n*d] (sections q|k|v, heads contiguous in the last dim);
    mask: [b, s, s] int8 (nonzero == masked). Returns context [s, b, 1, n*d]."""
    s, b, three, one, proj = qkv.shape
    assert three == 3 and one == 1 and proj == n_heads * head_dim
    d = head_dim
    nh = _pick_head_group(n_heads, d)
    nhd = nh * d

    tq = _pick_tile(s, (256, 128, 64, 32, 16, 8))
    tkv = _pick_tile(s, (512, 256, 128))
    grid = (b, n_heads // nh, s // tq, s // tkv)

    kernel = functools.partial(_flash_attn_kernel, nh=nh, d=d)

    itemsize = qkv.dtype.itemsize
    cost = pl.CostEstimate(
        flops=int(4 * b * n_heads * s * s * d),
        transcendentals=int(b * n_heads * s * s),
        bytes_accessed=int(4 * b * s * proj * itemsize + b * s * s),
    )

    return pl.pallas_call(
        kernel,
        out_shape=jax.ShapeDtypeStruct((s, b, 1, proj), qkv.dtype),
        grid_spec=pltpu.PrefetchScalarGridSpec(
            num_scalar_prefetch=0,
            grid=grid,
            in_specs=[
                # Same qkv buffer passed three times; index_map picks section 0/1/2
                # and the head-group slice -- the layout change is done by the DMA.
                pl.BlockSpec((tq, 1, 1, 1, nhd),
                             lambda bi, hg, qi, ki: (qi, bi, 0, 0, hg)),
                pl.BlockSpec((tkv, 1, 1, 1, nhd),
                             lambda bi, hg, qi, ki: (ki, bi, 1, 0, hg)),
                pl.BlockSpec((tkv, 1, 1, 1, nhd),
                             lambda bi, hg, qi, ki: (ki, bi, 2, 0, hg)),
                pl.BlockSpec((1, tq, tkv),
                             lambda bi, hg, qi, ki: (bi, qi, ki)),
            ],
            out_specs=pl.BlockSpec((tq, 1, 1, nhd),
                                   lambda bi, hg, qi, ki: (qi, bi, 0, hg)),
            scratch_shapes=[
                pltpu.VMEM((tq, nh), jnp.float32),     # running max per (row, head)
                pltpu.VMEM((tq, nh), jnp.float32),     # running sum per (row, head)
                pltpu.VMEM((tq, nhd), jnp.float32),    # lane-dense accumulator
            ],
        ),
        compiler_params=pltpu.CompilerParams(
            dimension_semantics=("parallel", "parallel", "parallel", "arbitrary"),
            vmem_limit_bytes=48 * 1024 * 1024,
        ),
        cost_estimate=cost,
    )(qkv, qkv, qkv, mask)


# ----------------------------------------------------------------------------
# One-time parameter transform into the kernel layout.
# ----------------------------------------------------------------------------
def prepare_attention_params(params, *, n_heads, head_dim, layer_number=1,
                             apply_query_key_layer_scaling=True):
    """Reorder qkv output columns from Megatron's per-head interleave [n, (q|k|v), d]
    to section-major [(q|k|v), n, d] (so the projection output slices into contiguous
    q|k|v slabs with zero data movement), and fold the 1/sqrt(d) softmax scaling into
    the Q section (the query_key_layer_scaling coeff cancels: 1/(sqrt(d)*coeff)*coeff)."""
    del layer_number, apply_query_key_layer_scaling   # coeff cancels exactly
    h = params["w_qkv"].shape[0]
    d = head_dim
    proj = n_heads * d

    w = params["w_qkv"].reshape(h, n_heads, 3, d)
    w = jnp.transpose(w, (0, 2, 1, 3)).reshape(h, 3 * proj)
    bq = params["b_qkv"].reshape(n_heads, 3, d)
    bq = jnp.transpose(bq, (1, 0, 2)).reshape(3 * proj)

    scale = 1.0 / math.sqrt(d)
    w = w.at[:, :proj].multiply(scale)
    bq = bq.at[:proj].multiply(scale)
    return {"w_qkv": w, "b_qkv": bq,
            "w_dense": params["w_dense"], "b_dense": params["b_dense"]}


# ----------------------------------------------------------------------------
# Forward pass wrapper: all inter-kernel reshapes are free (row-major views).
# ----------------------------------------------------------------------------
def parallel_attention_forward(hidden_states, attention_mask, kparams,
                               *, n_heads, head_dim):
    """hidden_states: [s, b, h]; attention_mask: [b, 1, s, s] bool (True == masked).
    kparams: kernel-layout params from prepare_attention_params.
    Returns (output [s, b, h], dense_bias [h])  (RowParallelLinear skip_bias_add)."""
    s, b, h = hidden_states.shape
    proj = n_heads * head_dim

    # --- query_key_value: ColumnParallelLinear(h, 3*proj), bias added ---
    x2d = hidden_states.reshape(s * b, h)
    mixed = tiled_matmul(x2d, kparams["w_qkv"], kparams["b_qkv"])    # [s*b, q|k|v]

    # Free reshape: sections and heads are already contiguous in the columns.
    qkv = mixed.reshape(s, b, 3, 1, proj)

    mask = attention_mask[:, 0].astype(jnp.int8)                     # [b, s, s]
    ctx = flash_attention(qkv, mask, n_heads=n_heads, head_dim=head_dim)  # [s, b, 1, proj]

    # --- dense: RowParallelLinear(proj, h), skip_bias_add=True -> bias-free matmul ---
    ctx2d = ctx.reshape(s * b, proj)                                 # free reshape
    out2d = tiled_matmul(ctx2d, kparams["w_dense"], None)
    return out2d.reshape(s, b, h), kparams["b_dense"]


# ----------------------------------------------------------------------------
# Deterministic parameter init (mirrors init_method_normal / zero biases),
# stored in the Megatron/torch column layout (per-head interleaved q|k|v).
# ----------------------------------------------------------------------------
def init_params(key, hidden, n_heads, head_dim, sigma=0.02, dtype=jnp.float32):
    proj = n_heads * head_dim
    k1, k2 = jax.random.split(key)
    return {
        # layout: [in_features, out_features] (pre-transposed vs torch [out, in]);
        # bf16 dtype is supported end-to-end (matmuls accumulate in f32).
        "w_qkv": (sigma * jax.random.normal(k1, (hidden, 3 * proj))).astype(dtype),
        "b_qkv": jnp.zeros((3 * proj,), dtype=dtype),
        "w_dense": (sigma * jax.random.normal(k2, (proj, hidden))).astype(dtype),
        "b_dense": jnp.zeros((hidden,), dtype=dtype),  # returned, not added (skip_bias_add)
    }


# ----------------------------------------------------------------------------
# Pure-JAX reference (mirrors the torch forward exactly, using the ORIGINAL
# Megatron-layout params) for a sanity check.
# ----------------------------------------------------------------------------
def reference_forward(hidden_states, attention_mask, params,
                      *, n_heads, head_dim, layer_number=1):
    s, b, h = hidden_states.shape
    proj = n_heads * head_dim
    x = hidden_states.reshape(s * b, h)
    mixed = (x @ params["w_qkv"] + params["b_qkv"]).reshape(s, b, n_heads, 3, head_dim)
    q = jnp.transpose(mixed[..., 0, :], (1, 2, 0, 3))   # [b, n, s, d]
    k = jnp.transpose(mixed[..., 1, :], (1, 2, 0, 3))
    v = jnp.transpose(mixed[..., 2, :], (1, 2, 0, 3))
    coeff = float(max(1, layer_number))
    norm_factor = math.sqrt(head_dim) * coeff
    scores = jnp.einsum('bnqd,bnkd->bnqk', q, k) / norm_factor
    scores = scores * coeff
    scores = jnp.where(attention_mask, jnp.float32(-10000.0), scores)
    probs = jax.nn.softmax(scores.astype(jnp.float32), axis=-1)
    ctx = jnp.einsum('bnqk,bnkd->bnqd', probs, v.astype(jnp.float32))
    ctx = jnp.transpose(ctx, (2, 0, 1, 3)).reshape(s * b, proj).astype(hidden_states.dtype)
    out = (ctx @ params["w_dense"]).reshape(s, b, h)
    return out, params["b_dense"]


if __name__ == "__main__":
    seq, batch, hidden = 8, 2, 32
    n_heads, head_dim = 4, 8

    key = jax.random.PRNGKey(0)
    k_x, k_p = jax.random.split(key)

    hidden_states = jax.random.normal(k_x, (seq, batch, hidden), dtype=jnp.float32)
    # causal attention mask: True above the diagonal => masked out
    causal = jnp.triu(jnp.ones((seq, seq), dtype=jnp.bool_), k=1)
    attention_mask = jnp.broadcast_to(causal[None, None], (batch, 1, seq, seq))

    params = init_params(k_p, hidden, n_heads, head_dim)
    # One-time parameter transform into the kernel layout (outside the hot path).
    kparams = prepare_attention_params(params, n_heads=n_heads, head_dim=head_dim,
                                       layer_number=1)

    fwd = jax.jit(functools.partial(parallel_attention_forward,
                                    n_heads=n_heads, head_dim=head_dim))
    output, bias = fwd(hidden_states, attention_mask, kparams)

    jax.block_until_ready(output)
    jax.block_until_ready(bias)
    assert output.shape == (seq, batch, hidden)
    assert bias.shape == (hidden,)

    # Numerical sanity check against the plain-JAX reference (original params).
    ref_out, ref_bias = reference_forward(
        hidden_states, attention_mask, params,
        n_heads=n_heads, head_dim=head_dim, layer_number=1)
    assert jnp.allclose(output, ref_out, atol=1e-2, rtol=1e-2), \
        float(jnp.max(jnp.abs(output - ref_out)))
    assert jnp.allclose(bias, ref_bias)

    print("KERNEL_OK")
</pallas_src>

<mosaic_0001>
module attributes {stable_mosaic.version = 11 : i64} {
  func.func @_matmul_bias_kernel(%arg0: i32, %arg1: i32, %arg2: i32, %arg3: memref<16x32xf32, #tpu.memory_space<vmem>>, %arg4: memref<32x96xf32, #tpu.memory_space<vmem>>, %arg5: memref<1x96xf32, #tpu.memory_space<vmem>>, %arg6: memref<16x96xf32, #tpu.memory_space<vmem>>, %arg7: memref<16x96xf32, #tpu.memory_space<vmem>>) attributes {dimension_semantics = [#tpu.dimension_semantics<parallel>, #tpu.dimension_semantics<parallel>, #tpu.dimension_semantics<arbitrary>], iteration_bounds = array<i64: 1, 1, 1>, scalar_prefetch = 0 : i64, scratch_operands = 1 : i64, tpu.core_type = #tpu.core_type<tc>, window_params = [{transform_indices = @transform_0, window_bounds = array<i64: 16, 32>}, {transform_indices = @transform_1, window_bounds = array<i64: 32, 96>}, {transform_indices = @transform_2, window_bounds = array<i64: 1, 96>}, {transform_indices = @transform_3, window_bounds = array<i64: 16, 96>}]} {
    %c0_i32 = arith.constant 0 : i32
    %0 = arith.cmpi eq, %arg2, %c0_i32 : i32
    %1 = arith.extui %0 : i1 to i32
    %c0_i32_0 = arith.constant 0 : i32
    %2 = arith.cmpi ne, %1, %c0_i32_0 : i32
    scf.if %2 {
      %cst_10 = arith.constant 0.000000e+00 : f32
      %12 = vector.broadcast %cst_10 : f32 to vector<16x96xf32>
      %c0_11 = arith.constant 0 : index
      %c0_12 = arith.constant 0 : index
      %13 = vector.load %arg7[%c0_11, %c0_12] : memref<16x96xf32, #tpu.memory_space<vmem>>, vector<16x96xf32>
      tpu.vector_store %arg7[%c0_11, %c0_12], %12 {strides = array<i32>} : memref<16x96xf32, #tpu.memory_space<vmem>>, vector<16x96xf32>,
    } else {
    }
    %c0 = arith.constant 0 : index
    %c0_1 = arith.constant 0 : index
    %3 = vector.load %arg7[%c0, %c0_1] : memref<16x96xf32, #tpu.memory_space<vmem>>, vector<16x96xf32>
    %c0_2 = arith.constant 0 : index
    %c0_3 = arith.constant 0 : index
    %4 = vector.load %arg3[%c0_2, %c0_3] : memref<16x32xf32, #tpu.memory_space<vmem>>, vector<16x32xf32>
    %c0_4 = arith.constant 0 : index
    %c0_5 = arith.constant 0 : index
    %5 = vector.load %arg4[%c0_4, %c0_5] : memref<32x96xf32, #tpu.memory_space<vmem>>, vector<32x96xf32>
    %cst = arith.constant dense<0.000000e+00> : vector<16x96xf32>
    %6 = tpu.matmul %4, %5, %cst {dimension_numbers = #tpu.dot_dimension_numbers<[1], [0], [0], [1], [0, 0, 1, 1], [], []>} : vector<16x32xf32>, vector<32x96xf32>, vector<16x96xf32> -> vector<16x96xf32>
    %7 = arith.addf %3, %6 : vector<16x96xf32>
    %c0_6 = arith.constant 0 : index
    %c0_7 = arith.constant 0 : index
    %8 = vector.load %arg7[%c0_6, %c0_7] : memref<16x96xf32, #tpu.memory_space<vmem>>, vector<16x96xf32>
    tpu.vector_store %arg7[%c0_6, %c0_7], %7 {strides = array<i32>} : memref<16x96xf32, #tpu.memory_space<vmem>>, vector<16x96xf32>,
    %c0_i32_8 = arith.constant 0 : i32
    %9 = arith.cmpi eq, %arg2, %c0_i32_8 : i32
    %10 = arith.extui %9 : i1 to i32
    %c0_i32_9 = arith.constant 0 : i32
    %11 = arith.cmpi ne, %10, %c0_i32_9 : i32
    scf.if %11 {
      %c0_10 = arith.constant 0 : index
      %c0_11 = arith.constant 0 : index
      %12 = vector.load %arg7[%c0_10, %c0_11] : memref<16x96xf32, #tpu.memory_space<vmem>>, vector<16x96xf32>
      %c0_12 = arith.constant 0 : index
      %c0_13 = arith.constant 0 : index
      %13 = vector.load %arg5[%c0_12, %c0_13] : memref<1x96xf32, #tpu.memory_space<vmem>>, vector<1x96xf32>
      %14 = vector.broadcast %13 : vector<1x96xf32> to vector<16x96xf32>
      %15 = arith.addf %12, %14 : vector<16x96xf32>
      %c0_14 = arith.constant 0 : index
      %c0_15 = arith.constant 0 : index
      %16 = vector.load %arg6[%c0_14, %c0_15] : memref<16x96xf32, #tpu.memory_space<vmem>>, vector<16x96xf32>
      tpu.vector_store %arg6[%c0_14, %c0_15], %15 {strides = array<i32>} : memref<16x96xf32, #tpu.memory_space<vmem>>, vector<16x96xf32>,
    } else {
    }
    return
  }
  func.func @transform_0(%arg0: i32, %arg1: i32, %arg2: i32) -> (i32, i32) {
    %c0_i32 = arith.constant 0 : i32
    return %arg0, %arg2 : i32, i32
  }
  func.func @transform_1(%arg0: i32, %arg1: i32, %arg2: i32) -> (i32, i32) {
    %c0_i32 = arith.constant 0 : i32
    return %arg2, %arg1 : i32, i32
  }
  func.func @transform_2(%arg0: i32, %arg1: i32, %arg2: i32) -> (i32, i32) {
    %c0_i32 = arith.constant 0 : i32
    %c0_i32_0 = arith.constant 0 : i32
    return %c0_i32, %arg1 : i32, i32
  }
  func.func @transform_3(%arg0: i32, %arg1: i32, %arg2: i32) -> (i32, i32) {
    %c0_i32 = arith.constant 0 : i32
    return %arg0, %arg1 : i32, i32
  }
}

module attributes {stable_mosaic.version = 11 : i64} {
  func.func @_flash_attn_kernel(%arg0: i32, %arg1: i32, %arg2: i32, %arg3: i32, %arg4: memref<8x1x1x1x32xf32, #tpu.memory_space<vmem>>, %arg5: memref<8x1x1x1x32xf32, #tpu.memory_space<vmem>>, %arg6: memref<8x1x1x1x32xf32, #tpu.memory_space<vmem>>, %arg7: memref<1x8x8xi8, #tpu.memory_space<vmem>>, %arg8: memref<8x1x1x32xf32, #tpu.memory_space<vmem>>, %arg9: memref<8x4xf32, #tpu.memory_space<vmem>>, %arg10: memref<8x4xf32, #tpu.memory_space<vmem>>, %arg11: memref<8x32xf32, #tpu.memory_space<vmem>>) attributes {dimension_semantics = [#tpu.dimension_semantics<parallel>, #tpu.dimension_semantics<parallel>, #tpu.dimension_semantics<parallel>, #tpu.dimension_semantics<arbitrary>], iteration_bounds = array<i64: 2, 1, 1, 1>, scalar_prefetch = 0 : i64, scratch_operands = 3 : i64, tpu.core_type = #tpu.core_type<tc>, window_params = [{transform_indices = @transform_0, window_bounds = array<i64: 8, 1, 1, 1, 32>}, {transform_indices = @transform_1, window_bounds = array<i64: 8, 1, 1, 1, 32>}, {transform_indices = @transform_2, window_bounds = array<i64: 8, 1, 1, 1, 32>}, {transform_indices = @transform_3, window_bounds = array<i64: 1, 8, 8>}, {transform_indices = @transform_4, window_bounds = array<i64: 8, 1, 1, 32>}]} {
    %c0_i32 = arith.constant 0 : i32
    %0 = arith.cmpi eq, %arg3, %c0_i32 : i32
    %1 = arith.extui %0 : i1 to i32
    %c0_i32_0 = arith.constant 0 : i32
    %2 = arith.cmpi ne, %1, %c0_i32_0 : i32
    scf.if %2 {
      %cst_126 = arith.constant 0xFF800000 : f32
      %134 = vector.broadcast %cst_126 : f32 to vector<8x4xf32>
      %c0_127 = arith.constant 0 : index
      %c0_128 = arith.constant 0 : index
      %135 = vector.load %arg9[%c0_127, %c0_128] : memref<8x4xf32, #tpu.memory_space<vmem>>, vector<8x4xf32>
      tpu.vector_store %arg9[%c0_127, %c0_128], %134 {strides = array<i32>} : memref<8x4xf32, #tpu.memory_space<vmem>>, vector<8x4xf32>,
      %cst_129 = arith.constant 0.000000e+00 : f32
      %136 = vector.broadcast %cst_129 : f32 to vector<8x4xf32>
      %c0_130 = arith.constant 0 : index
      %c0_131 = arith.constant 0 : index
      %137 = vector.load %arg10[%c0_130, %c0_131] : memref<8x4xf32, #tpu.memory_space<vmem>>, vector<8x4xf32>
      tpu.vector_store %arg10[%c0_130, %c0_131], %136 {strides = array<i32>} : memref<8x4xf32, #tpu.memory_space<vmem>>, vector<8x4xf32>,
      %cst_132 = arith.constant 0.000000e+00 : f32
      %138 = vector.broadcast %cst_132 : f32 to vector<8x32xf32>
      %c0_133 = arith.constant 0 : index
      %c0_134 = arith.constant 0 : index
      %139 = vector.load %arg11[%c0_133, %c0_134] : memref<8x32xf32, #tpu.memory_space<vmem>>, vector<8x32xf32>
      tpu.vector_store %arg11[%c0_133, %c0_134], %138 {strides = array<i32>} : memref<8x32xf32, #tpu.memory_space<vmem>>, vector<8x32xf32>,
    } else {
    }
    %c0 = arith.constant 0 : index
    %c0_1 = arith.constant 0 : index
    %c0_2 = arith.constant 0 : index
    %3 = vector.load %arg7[%c0, %c0_1, %c0_2] : memref<1x8x8xi8, #tpu.memory_space<vmem>>, vector<1x8x8xi8>
    %4 = vector.shape_cast %3 : vector<1x8x8xi8> to vector<8x8xi8>
    %c0_i8 = arith.constant 0 : i8
    %5 = vector.broadcast %c0_i8 : i8 to vector<8x8xi8>
    %6 = arith.cmpi ne, %4, %5 : vector<8x8xi8>
    %c0_3 = arith.constant 0 : index
    %c0_4 = arith.constant 0 : index
    %c0_5 = arith.constant 0 : index
    %c0_6 = arith.constant 0 : index
    %c0_7 = arith.constant 0 : index
    %7 = vector.load %arg4[%c0_3, %c0_4, %c0_5, %c0_6, %c0_7] : memref<8x1x1x1x32xf32, #tpu.memory_space<vmem>>, vector<8x1x1x1x8xf32>
    %8 = vector.shape_cast %7 : vector<8x1x1x1x8xf32> to vector<8x8xf32>
    %c0_8 = arith.constant 0 : index
    %c0_9 = arith.constant 0 : index
    %c0_10 = arith.constant 0 : index
    %c0_11 = arith.constant 0 : index
    %c0_12 = arith.constant 0 : index
    %9 = vector.load %arg5[%c0_8, %c0_9, %c0_10, %c0_11, %c0_12] : memref<8x1x1x1x32xf32, #tpu.memory_space<vmem>>, vector<8x1x1x1x8xf32>
    %10 = vector.shape_cast %9 : vector<8x1x1x1x8xf32> to vector<8x8xf32>
    %c0_13 = arith.constant 0 : index
    %c0_14 = arith.constant 0 : index
    %c0_15 = arith.constant 0 : index
    %c0_16 = arith.constant 0 : index
    %c0_17 = arith.constant 0 : index
    %11 = vector.load %arg6[%c0_13, %c0_14, %c0_15, %c0_16, %c0_17] : memref<8x1x1x1x32xf32, #tpu.memory_space<vmem>>, vector<8x1x1x1x8xf32>
    %12 = vector.shape_cast %11 : vector<8x1x1x1x8xf32> to vector<8x8xf32>
    %cst = arith.constant dense<0.000000e+00> : vector<8x8xf32>
    %13 = tpu.matmul %8, %10, %cst {dimension_numbers = #tpu.dot_dimension_numbers<[1], [1], [0], [0], [0, 0, 1, 0], [], []>} : vector<8x8xf32>, vector<8x8xf32>, vector<8x8xf32> -> vector<8x8xf32>
    %cst_18 = arith.constant -1.000000e+04 : f32
    %14 = vector.broadcast %cst_18 : f32 to vector<8x8xf32>
    %15 = arith.select %6, %14, %13 : vector<8x8xi1>, vector<8x8xf32>
    %c0_19 = arith.constant 0 : index
    %c0_20 = arith.constant 0 : index
    %16 = vector.load %arg9[%c0_19, %c0_20] : memref<8x4xf32, #tpu.memory_space<vmem>>, vector<8x1xf32>
    %cst_21 = arith.constant dense<0xFF800000> : vector<8xf32>
    %17 = vector.multi_reduction <maximumf>, %15, %cst_21 [1] : vector<8x8xf32> to vector<8xf32>
    %18 = vector.shape_cast %17 : vector<8xf32> to vector<8x1xf32>
    %19 = arith.maximumf %16, %18 : vector<8x1xf32>
    %20 = arith.subf %16, %19 : vector<8x1xf32>
    %21 = math.exp %20 : vector<8x1xf32>
    %22 = vector.broadcast %19 : vector<8x1xf32> to vector<8x8xf32>
    %23 = arith.subf %15, %22 : vector<8x8xf32>
    %24 = math.exp %23 : vector<8x8xf32>
    %c0_22 = arith.constant 0 : index
    %c0_23 = arith.constant 0 : index
    %25 = vector.load %arg10[%c0_22, %c0_23] : memref<8x4xf32, #tpu.memory_space<vmem>>, vector<8x1xf32>
    %26 = arith.mulf %21, %25 : vector<8x1xf32>
    %cst_24 = arith.constant dense<0.000000e+00> : vector<8xf32>
    %27 = vector.multi_reduction <add>, %24, %cst_24 [1] : vector<8x8xf32> to vector<8xf32>
    %28 = vector.shape_cast %27 : vector<8xf32> to vector<8x1xf32>
    %29 = arith.addf %26, %28 : vector<8x1xf32>
    %c0_25 = arith.constant 0 : index
    %c0_26 = arith.constant 0 : index
    %30 = vector.load %arg10[%c0_25, %c0_26] : memref<8x4xf32, #tpu.memory_space<vmem>>, vector<8x1xf32>
    tpu.vector_store %arg10[%c0_25, %c0_26], %29 {strides = array<i32>} : memref<8x4xf32, #tpu.memory_space<vmem>>, vector<8x1xf32>,
    %c0_27 = arith.constant 0 : index
    %c0_28 = arith.constant 0 : index
    %31 = vector.load %arg11[%c0_27, %c0_28] : memref<8x32xf32, #tpu.memory_space<vmem>>, vector<8x8xf32>
    %32 = vector.broadcast %21 : vector<8x1xf32> to vector<8x8xf32>
    %33 = arith.mulf %32, %31 : vector<8x8xf32>
    %cst_29 = arith.constant dense<0.000000e+00> : vector<8x8xf32>
    %34 = tpu.matmul %24, %12, %cst_29 {dimension_numbers = #tpu.dot_dimension_numbers<[1], [0], [0], [1], [0, 0, 1, 1], [], []>} : vector<8x8xf32>, vector<8x8xf32>, vector<8x8xf32> -> vector<8x8xf32>
    %35 = arith.addf %33, %34 : vector<8x8xf32>
    %c0_30 = arith.constant 0 : index
    %c0_31 = arith.constant 0 : index
    %36 = vector.load %arg11[%c0_30, %c0_31] : memref<8x32xf32, #tpu.memory_space<vmem>>, vector<8x8xf32>
    tpu.vector_store %arg11[%c0_30, %c0_31], %35 {strides = array<i32>} : memref<8x32xf32, #tpu.memory_space<vmem>>, vector<8x8xf32>,
    %c0_32 = arith.constant 0 : index
    %c0_33 = arith.constant 0 : index
    %37 = vector.load %arg9[%c0_32, %c0_33] : memref<8x4xf32, #tpu.memory_space<vmem>>, vector<8x1xf32>
    tpu.vector_store %arg9[%c0_32, %c0_33], %19 {strides = array<i32>} : memref<8x4xf32, #tpu.memory_space<vmem>>, vector<8x1xf32>,
    %c0_34 = arith.constant 0 : index
    %c0_35 = arith.constant 0 : index
    %c0_36 = arith.constant 0 : index
    %c0_37 = arith.constant 0 : index
    %c8 = arith.constant 8 : index
    %38 = vector.load %arg4[%c0_34, %c0_35, %c0_36, %c0_37, %c8] : memref<8x1x1x1x32xf32, #tpu.memory_space<vmem>>, vector<8x1x1x1x8xf32>
    %39 = vector.shape_cast %38 : vector<8x1x1x1x8xf32> to vector<8x8xf32>
    %c0_38 = arith.constant 0 : index
    %c0_39 = arith.constant 0 : index
    %c0_40 = arith.constant 0 : index
    %c0_41 = arith.constant 0 : index
    %c8_42 = arith.constant 8 : index
    %40 = vector.load %arg5[%c0_38, %c0_39, %c0_40, %c0_41, %c8_42] : memref<8x1x1x1x32xf32, #tpu.memory_space<vmem>>, vector<8x1x1x1x8xf32>
    %41 = vector.shape_cast %40 : vector<8x1x1x1x8xf32> to vector<8x8xf32>
    %c0_43 = arith.constant 0 : index
    %c0_44 = arith.constant 0 : index
    %c0_45 = arith.constant 0 : index
    %c0_46 = arith.constant 0 : index
    %c8_47 = arith.constant 8 : index
    %42 = vector.load %arg6[%c0_43, %c0_44, %c0_45, %c0_46, %c8_47] : memref<8x1x1x1x32xf32, #tpu.memory_space<vmem>>, vector<8x1x1x1x8xf32>
    %43 = vector.shape_cast %42 : vector<8x1x1x1x8xf32> to vector<8x8xf32>
    %cst_48 = arith.constant dense<0.000000e+00> : vector<8x8xf32>
    %44 = tpu.matmul %39, %41, %cst_48 {dimension_numbers = #tpu.dot_dimension_numbers<[1], [1], [0], [0], [0, 0, 1, 0], [], []>} : vector<8x8xf32>, vector<8x8xf32>, vector<8x8xf32> -> vector<8x8xf32>
    %cst_49 = arith.constant -1.000000e+04 : f32
    %45 = vector.broadcast %cst_49 : f32 to vector<8x8xf32>
    %46 = arith.select %6, %45, %44 : vector<8x8xi1>, vector<8x8xf32>
    %c0_50 = arith.constant 0 : index
    %c1 = arith.constant 1 : index
    %47 = vector.load %arg9[%c0_50, %c1] : memref<8x4xf32, #tpu.memory_space<vmem>>, vector<8x1xf32>
    %cst_51 = arith.constant dense<0xFF800000> : vector<8xf32>
    %48 = vector.multi_reduction <maximumf>, %46, %cst_51 [1] : vector<8x8xf32> to vector<8xf32>
    %49 = vector.shape_cast %48 : vector<8xf32> to vector<8x1xf32>
    %50 = arith.maximumf %47, %49 : vector<8x1xf32>
    %51 = arith.subf %47, %50 : vector<8x1xf32>
    %52 = math.exp %51 : vector<8x1xf32>
    %53 = vector.broadcast %50 : vector<8x1xf32> to vector<8x8xf32>
    %54 = arith.subf %46, %53 : vector<8x8xf32>
    %55 = math.exp %54 : vector<8x8xf32>
    %c0_52 = arith.constant 0 : index
    %c1_53 = arith.constant 1 : index
    %56 = vector.load %arg10[%c0_52, %c1_53] : memref<8x4xf32, #tpu.memory_space<vmem>>, vector<8x1xf32>
    %57 = arith.mulf %52, %56 : vector<8x1xf32>
    %cst_54 = arith.constant dense<0.000000e+00> : vector<8xf32>
    %58 = vector.multi_reduction <add>, %55, %cst_54 [1] : vector<8x8xf32> to vector<8xf32>
    %59 = vector.shape_cast %58 : vector<8xf32> to vector<8x1xf32>
    %60 = arith.addf %57, %59 : vector<8x1xf32>
    %c0_55 = arith.constant 0 : index
    %c1_56 = arith.constant 1 : index
    %61 = vector.load %arg10[%c0_55, %c1_56] : memref<8x4xf32, #tpu.memory_space<vmem>>, vector<8x1xf32>
    tpu.vector_store %arg10[%c0_55, %c1_56], %60 {strides = array<i32>} : memref<8x4xf32, #tpu.memory_space<vmem>>, vector<8x1xf32>,
    %c0_57 = arith.constant 0 : index
    %c8_58 = arith.constant 8 : index
    %62 = vector.load %arg11[%c0_57, %c8_58] : memref<8x32xf32, #tpu.memory_space<vmem>>, vector<8x8xf32>
    %63 = vector.broadcast %52 : vector<8x1xf32> to vector<8x8xf32>
    %64 = arith.mulf %63, %62 : vector<8x8xf32>
    %cst_59 = arith.constant dense<0.000000e+00> : vector<8x8xf32>
    %65 = tpu.matmul %55, %43, %cst_59 {dimension_numbers = #tpu.dot_dimension_numbers<[1], [0], [0], [1], [0, 0, 1, 1], [], []>} : vector<8x8xf32>, vector<8x8xf32>, vector<8x8xf32> -> vector<8x8xf32>
    %66 = arith.addf %64, %65 : vector<8x8xf32>
    %c0_60 = arith.constant 0 : index
    %c8_61 = arith.constant 8 : index
    %67 = vector.load %arg11[%c0_60, %c8_61] : memref<8x32xf32, #tpu.memory_space<vmem>>, vector<8x8xf32>
    tpu.vector_store %arg11[%c0_60, %c8_61], %66 {strides = array<i32>} : memref<8x32xf32, #tpu.memory_space<vmem>>, vector<8x8xf32>,
    %c0_62 = arith.constant 0 : index
    %c1_63 = arith.constant 1 : index
    %68 = vector.load %arg9[%c0_62, %c1_63] : memref<8x4xf32, #tpu.memory_space<vmem>>, vector<8x1xf32>
    tpu.vector_store %arg9[%c0_62, %c1_63], %50 {strides = array<i32>} : memref<8x4xf32, #tpu.memory_space<vmem>>, vector<8x1xf32>,
    %c0_64 = arith.constant 0 : index
    %c0_65 = arith.constant 0 : index
    %c0_66 = arith.constant 0 : index
    %c0_67 = arith.constant 0 : index
    %c16 = arith.constant 16 : index
    %69 = vector.load %arg4[%c0_64, %c0_65, %c0_66, %c0_67, %c16] : memref<8x1x1x1x32xf32, #tpu.memory_space<vmem>>, vector<8x1x1x1x8xf32>
    %70 = vector.shape_cast %69 : vector<8x1x1x1x8xf32> to vector<8x8xf32>
    %c0_68 = arith.constant 0 : index
    %c0_69 = arith.constant 0 : index
    %c0_70 = arith.constant 0 : index
    %c0_71 = arith.constant 0 : index
    %c16_72 = arith.constant 16 : index
    %71 = vector.load %arg5[%c0_68, %c0_69, %c0_70, %c0_71, %c16_72] : memref<8x1x1x1x32xf32, #tpu.memory_space<vmem>>, vector<8x1x1x1x8xf32>
    %72 = vector.shape_cast %71 : vector<8x1x1x1x8xf32> to vector<8x8xf32>
    %c0_73 = arith.constant 0 : index
    %c0_74 = arith.constant 0 : index
    %c0_75 = arith.constant 0 : index
    %c0_76 = arith.constant 0 : index
    %c16_77 = arith.constant 16 : index
    %73 = vector.load %arg6[%c0_73, %c0_74, %c0_75, %c0_76, %c16_77] : memref<8x1x1x1x32xf32, #tpu.memory_space<vmem>>, vector<8x1x1x1x8xf32>
    %74 = vector.shape_cast %73 : vector<8x1x1x1x8xf32> to vector<8x8xf32>
    %cst_78 = arith.constant dense<0.000000e+00> : vector<8x8xf32>
    %75 = tpu.matmul %70, %72, %cst_78 {dimension_numbers = #tpu.dot_dimension_numbers<[1], [1], [0], [0], [0, 0, 1, 0], [], []>} : vector<8x8xf32>, vector<8x8xf32>, vector<8x8xf32> -> vector<8x8xf32>
    %cst_79 = arith.constant -1.000000e+04 : f32
    %76 = vector.broadcast %cst_79 : f32 to vector<8x8xf32>
    %77 = arith.select %6, %76, %75 : vector<8x8xi1>, vector<8x8xf32>
    %c0_80 = arith.constant 0 : index
    %c2 = arith.constant 2 : index
    %78 = vector.load %arg9[%c0_80, %c2] : memref<8x4xf32, #tpu.memory_space<vmem>>, vector<8x1xf32>
    %cst_81 = arith.constant dense<0xFF800000> : vector<8xf32>
    %79 = vector.multi_reduction <maximumf>, %77, %cst_81 [1] : vector<8x8xf32> to vector<8xf32>
    %80 = vector.shape_cast %79 : vector<8xf32> to vector<8x1xf32>
    %81 = arith.maximumf %78, %80 : vector<8x1xf32>
    %82 = arith.subf %78, %81 : vector<8x1xf32>
    %83 = math.exp %82 : vector<8x1xf32>
    %84 = vector.broadcast %81 : vector<8x1xf32> to vector<8x8xf32>
    %85 = arith.subf %77, %84 : vector<8x8xf32>
    %86 = math.exp %85 : vector<8x8xf32>
    %c0_82 = arith.constant 0 : index
    %c2_83 = arith.constant 2 : index
    %87 = vector.load %arg10[%c0_82, %c2_83] : memref<8x4xf32, #tpu.memory_space<vmem>>, vector<8x1xf32>
    %88 = arith.mulf %83, %87 : vector<8x1xf32>
    %cst_84 = arith.constant dense<0.000000e+00> : vector<8xf32>
    %89 = vector.multi_reduction <add>, %86, %cst_84 [1] : vector<8x8xf32> to vector<8xf32>
    %90 = vector.shape_cast %89 : vector<8xf32> to vector<8x1xf32>
    %91 = arith.addf %88, %90 : vector<8x1xf32>
    %c0_85 = arith.constant 0 : index
    %c2_86 = arith.constant 2 : index
    %92 = vector.load %arg10[%c0_85, %c2_86] : memref<8x4xf32, #tpu.memory_space<vmem>>, vector<8x1xf32>
    tpu.vector_store %arg10[%c0_85, %c2_86], %91 {strides = array<i32>} : memref<8x4xf32, #tpu.memory_space<vmem>>, vector<8x1xf32>,
    %c0_87 = arith.constant 0 : index
    %c16_88 = arith.constant 16 : index
    %93 = vector.load %arg11[%c0_87, %c16_88] : memref<8x32xf32, #tpu.memory_space<vmem>>, vector<8x8xf32>
    %94 = vector.broadcast %83 : vector<8x1xf32> to vector<8x8xf32>
    %95 = arith.mulf %94, %93 : vector<8x8xf32>
    %cst_89 = arith.constant dense<0.000000e+00> : vector<8x8xf32>
    %96 = tpu.matmul %86, %74, %cst_89 {dimension_numbers = #tpu.dot_dimension_numbers<[1], [0], [0], [1], [0, 0, 1, 1], [], []>} : vector<8x8xf32>, vector<8x8xf32>, vector<8x8xf32> -> vector<8x8xf32>
    %97 = arith.addf %95, %96 : vector<8x8xf32>
    %c0_90 = arith.constant 0 : index
    %c16_91 = arith.constant 16 : index
    %98 = vector.load %arg11[%c0_90, %c16_91] : memref<8x32xf32, #tpu.memory_space<vmem>>, vector<8x8xf32>
    tpu.vector_store %arg11[%c0_90, %c16_91], %97 {strides = array<i32>} : memref<8x32xf32, #tpu.memory_space<vmem>>, vector<8x8xf32>,
    %c0_92 = arith.constant 0 : index
    %c2_93 = arith.constant 2 : index
    %99 = vector.load %arg9[%c0_92, %c2_93] : memref<8x4xf32, #tpu.memory_space<vmem>>, vector<8x1xf32>
    tpu.vector_store %arg9[%c0_92, %c2_93], %81 {strides = array<i32>} : memref<8x4xf32, #tpu.memory_space<vmem>>, vector<8x1xf32>,
    %c0_94 = arith.constant 0 : index
    %c0_95 = arith.constant 0 : index
    %c0_96 = arith.constant 0 : index
    %c0_97 = arith.constant 0 : index
    %c24 = arith.constant 24 : index
    %100 = vector.load %arg4[%c0_94, %c0_95, %c0_96, %c0_97, %c24] : memref<8x1x1x1x32xf32, #tpu.memory_space<vmem>>, vector<8x1x1x1x8xf32>
    %101 = vector.shape_cast %100 : vector<8x1x1x1x8xf32> to vector<8x8xf32>
    %c0_98 = arith.constant 0 : index
    %c0_99 = arith.constant 0 : index
    %c0_100 = arith.constant 0 : index
    %c0_101 = arith.constant 0 : index
    %c24_102 = arith.constant 24 : index
    %102 = vector.load %arg5[%c0_98, %c0_99, %c0_100, %c0_101, %c24_102] : memref<8x1x1x1x32xf32, #tpu.memory_space<vmem>>, vector<8x1x1x1x8xf32>
    %103 = vector.shape_cast %102 : vector<8x1x1x1x8xf32> to vector<8x8xf32>
    %c0_103 = arith.constant 0 : index
    %c0_104 = arith.constant 0 : index
    %c0_105 = arith.constant 0 : index
    %c0_106 = arith.constant 0 : index
    %c24_107 = arith.constant 24 : index
    %104 = vector.load %arg6[%c0_103, %c0_104, %c0_105, %c0_106, %c24_107] : memref<8x1x1x1x32xf32, #tpu.memory_space<vmem>>, vector<8x1x1x1x8xf32>
    %105 = vector.shape_cast %104 : vector<8x1x1x1x8xf32> to vector<8x8xf32>
    %cst_108 = arith.constant dense<0.000000e+00> : vector<8x8xf32>
    %106 = tpu.matmul %101, %103, %cst_108 {dimension_numbers = #tpu.dot_dimension_numbers<[1], [1], [0], [0], [0, 0, 1, 0], [], []>} : vector<8x8xf32>, vector<8x8xf32>, vector<8x8xf32> -> vector<8x8xf32>
    %cst_109 = arith.constant -1.000000e+04 : f32
    %107 = vector.broadcast %cst_109 : f32 to vector<8x8xf32>
    %108 = arith.select %6, %107, %106 : vector<8x8xi1>, vector<8x8xf32>
    %c0_110 = arith.constant 0 : index
    %c3 = arith.constant 3 : index
    %109 = vector.load %arg9[%c0_110, %c3] : memref<8x4xf32, #tpu.memory_space<vmem>>, vector<8x1xf32>
    %cst_111 = arith.constant dense<0xFF800000> : vector<8xf32>
    %110 = vector.multi_reduction <maximumf>, %108, %cst_111 [1] : vector<8x8xf32> to vector<8xf32>
    %111 = vector.shape_cast %110 : vector<8xf32> to vector<8x1xf32>
    %112 = arith.maximumf %109, %111 : vector<8x1xf32>
    %113 = arith.subf %109, %112 : vector<8x1xf32>
    %114 = math.exp %113 : vector<8x1xf32>
    %115 = vector.broadcast %112 : vector<8x1xf32> to vector<8x8xf32>
    %116 = arith.subf %108, %115 : vector<8x8xf32>
    %117 = math.exp %116 : vector<8x8xf32>
    %c0_112 = arith.constant 0 : index
    %c3_113 = arith.constant 3 : index
    %118 = vector.load %arg10[%c0_112, %c3_113] : memref<8x4xf32, #tpu.memory_space<vmem>>, vector<8x1xf32>
    %119 = arith.mulf %114, %118 : vector<8x1xf32>
    %cst_114 = arith.constant dense<0.000000e+00> : vector<8xf32>
    %120 = vector.multi_reduction <add>, %117, %cst_114 [1] : vector<8x8xf32> to vector<8xf32>
    %121 = vector.shape_cast %120 : vector<8xf32> to vector<8x1xf32>
    %122 = arith.addf %119, %121 : vector<8x1xf32>
    %c0_115 = arith.constant 0 : index
    %c3_116 = arith.constant 3 : index
    %123 = vector.load %arg10[%c0_115, %c3_116] : memref<8x4xf32, #tpu.memory_space<vmem>>, vector<8x1xf32>
    tpu.vector_store %arg10[%c0_115, %c3_116], %122 {strides = array<i32>} : memref<8x4xf32, #tpu.memory_space<vmem>>, vector<8x1xf32>,
    %c0_117 = arith.constant 0 : index
    %c24_118 = arith.constant 24 : index
    %124 = vector.load %arg11[%c0_117, %c24_118] : memref<8x32xf32, #tpu.memory_space<vmem>>, vector<8x8xf32>
    %125 = vector.broadcast %114 : vector<8x1xf32> to vector<8x8xf32>
    %126 = arith.mulf %125, %124 : vector<8x8xf32>
    %cst_119 = arith.constant dense<0.000000e+00> : vector<8x8xf32>
    %127 = tpu.matmul %117, %105, %cst_119 {dimension_numbers = #tpu.dot_dimension_numbers<[1], [0], [0], [1], [0, 0, 1, 1], [], []>} : vector<8x8xf32>, vector<8x8xf32>, vector<8x8xf32> -> vector<8x8xf32>
    %128 = arith.addf %126, %127 : vector<8x8xf32>
    %c0_120 = arith.constant 0 : index
    %c24_121 = arith.constant 24 : index
    %129 = vector.load %arg11[%c0_120, %c24_121] : memref<8x32xf32, #tpu.memory_space<vmem>>, vector<8x8xf32>
    tpu.vector_store %arg11[%c0_120, %c24_121], %128 {strides = array<i32>} : memref<8x32xf32, #tpu.memory_space<vmem>>, vector<8x8xf32>,
    %c0_122 = arith.constant 0 : index
    %c3_123 = arith.constant 3 : index
    %130 = vector.load %arg9[%c0_122, %c3_123] : memref<8x4xf32, #tpu.memory_space<vmem>>, vector<8x1xf32>
    tpu.vector_store %arg9[%c0_122, %c3_123], %112 {strides = array<i32>} : memref<8x4xf32, #tpu.memory_space<vmem>>, vector<8x1xf32>,
    %c0_i32_124 = arith.constant 0 : i32
    %131 = arith.cmpi eq, %arg3, %c0_i32_124 : i32
    %132 = arith.extui %131 : i1 to i32
    %c0_i32_125 = arith.constant 0 : i32
    %133 = arith.cmpi ne, %132, %c0_i32_125 : i32
    scf.if %133 {
      %c0_126 = arith.constant 0 : index
      %c0_127 = arith.constant 0 : index
      %134 = vector.load %arg10[%c0_126, %c0_127] : memref<8x4xf32, #tpu.memory_space<vmem>>, vector<8x4xf32>
      %135 = tpu.reciprocal %134 {approx = true} : vector<8x4xf32> -> vector<8x4xf32>
      %c0_128 = arith.constant 0 : index
      %c0_129 = arith.constant 0 : index
      %136 = vector.load %arg11[%c0_128, %c0_129] : memref<8x32xf32, #tpu.memory_space<vmem>>, vector<8x8xf32>
      %137 = vector.extract_strided_slice %135 {offsets = [0, 0], sizes = [8, 1], strides = [1, 1]} : vector<8x4xf32> to vector<8x1xf32>
      %138 = vector.broadcast %137 : vector<8x1xf32> to vector<8x8xf32>
      %139 = arith.mulf %136, %138 : vector<8x8xf32>
      %c0_130 = arith.constant 0 : index
      %c0_131 = arith.constant 0 : index
      %140 = vector.load %arg11[%c0_130, %c0_131] : memref<8x32xf32, #tpu.memory_space<vmem>>, vector<8x8xf32>
      tpu.vector_store %arg11[%c0_130, %c0_131], %139 {strides = array<i32>} : memref<8x32xf32, #tpu.memory_space<vmem>>, vector<8x8xf32>,
      %c0_132 = arith.constant 0 : index
      %c8_133 = arith.constant 8 : index
      %141 = vector.load %arg11[%c0_132, %c8_133] : memref<8x32xf32, #tpu.memory_space<vmem>>, vector<8x8xf32>
      %142 = vector.extract_strided_slice %135 {offsets = [0, 1], sizes = [8, 1], strides = [1, 1]} : vector<8x4xf32> to vector<8x1xf32>
      %143 = vector.broadcast %142 : vector<8x1xf32> to vector<8x8xf32>
      %144 = arith.mulf %141, %143 : vector<8x8xf32>
      %c0_134 = arith.constant 0 : index
      %c8_135 = arith.constant 8 : index
      %145 = vector.load %arg11[%c0_134, %c8_135] : memref<8x32xf32, #tpu.memory_space<vmem>>, vector<8x8xf32>
      tpu.vector_store %arg11[%c0_134, %c8_135], %144 {strides = array<i32>} : memref<8x32xf32, #tpu.memory_space<vmem>>, vector<8x8xf32>,
      %c0_136 = arith.constant 0 : index
      %c16_137 = arith.constant 16 : index
      %146 = vector.load %arg11[%c0_136, %c16_137] : memref<8x32xf32, #tpu.memory_space<vmem>>, vector<8x8xf32>
      %147 = vector.extract_strided_slice %135 {offsets = [0, 2], sizes = [8, 1], strides = [1, 1]} : vector<8x4xf32> to vector<8x1xf32>
      %148 = vector.broadcast %147 : vector<8x1xf32> to vector<8x8xf32>
      %149 = arith.mulf %146, %148 : vector<8x8xf32>
      %c0_138 = arith.constant 0 : index
      %c16_139 = arith.constant 16 : index
      %150 = vector.load %arg11[%c0_138, %c16_139] : memref<8x32xf32, #tpu.memory_space<vmem>>, vector<8x8xf32>
      tpu.vector_store %arg11[%c0_138, %c16_139], %149 {strides = array<i32>} : memref<8x32xf32, #tpu.memory_space<vmem>>, vector<8x8xf32>,
      %c0_140 = arith.constant 0 : index
      %c24_141 = arith.constant 24 : index
      %151 = vector.load %arg11[%c0_140, %c24_141] : memref<8x32xf32, #tpu.memory_space<vmem>>, vector<8x8xf32>
      %152 = vector.extract_strided_slice %135 {offsets = [0, 3], sizes = [8, 1], strides = [1, 1]} : vector<8x4xf32> to vector<8x1xf32>
      %153 = vector.broadcast %152 : vector<8x1xf32> to vector<8x8xf32>
      %154 = arith.mulf %151, %153 : vector<8x8xf32>
      %c0_142 = arith.constant 0 : index
      %c24_143 = arith.constant 24 : index
      %155 = vector.load %arg11[%c0_142, %c24_143] : memref<8x32xf32, #tpu.memory_space<vmem>>, vector<8x8xf32>
      tpu.vector_store %arg11[%c0_142, %c24_143], %154 {strides = array<i32>} : memref<8x32xf32, #tpu.memory_space<vmem>>, vector<8x8xf32>,
      %c0_144 = arith.constant 0 : index
      %c0_145 = arith.constant 0 : index
      %156 = vector.load %arg11[%c0_144, %c0_145] : memref<8x32xf32, #tpu.memory_space<vmem>>, vector<8x32xf32>
      %c0_146 = arith.constant 0 : index
      %c0_147 = arith.constant 0 : index
      %c0_148 = arith.constant 0 : index
      %c0_149 = arith.constant 0 : index
      %157 = vector.load %arg8[%c0_146, %c0_147, %c0_148, %c0_149] : memref<8x1x1x32xf32, #tpu.memory_space<vmem>>, vector<8x1x1x32xf32>
      %158 = vector.shape_cast %157 : vector<8x1x1x32xf32> to vector<8x32xf32>
      %159 = vector.shape_cast %156 : vector<8x32xf32> to vector<8x1x1x32xf32>
      tpu.vector_store %arg8[%c0_146, %c0_147, %c0_148, %c0_149], %159 {strides = array<i32>} : memref<8x1x1x32xf32, #tpu.memory_space<vmem>>, vector<8x1x1x32xf32>,
    } else {
    }
    return
  }
  func.func @transform_0(%arg0: i32, %arg1: i32, %arg2: i32, %arg3: i32) -> (i32, i32, i32, i32, i32) {
    %c0_i32 = arith.constant 0 : i32
    %c0_i32_0 = arith.constant 0 : i32
    %c0_i32_1 = arith.constant 0 : i32
    return %arg2, %arg0, %c0_i32, %c0_i32_0, %arg1 : i32, i32, i32, i32, i32
  }
  func.func @transform_1(%arg0: i32, %arg1: i32, %arg2: i32, %arg3: i32) -> (i32, i32, i32, i32, i32) {
    %c1_i32 = arith.constant 1 : i32
    %c0_i32 = arith.constant 0 : i32
    %c0_i32_0 = arith.constant 0 : i32
    return %arg3, %arg0, %c1_i32, %c0_i32, %arg1 : i32, i32, i32, i32, i32
  }
  func.func @transform_2(%arg0: i32, %arg1: i32, %arg2: i32, %arg3: i32) -> (i32, i32, i32, i32, i32) {
    %c2_i32 = arith.constant 2 : i32
    %c0_i32 = arith.constant 0 : i32
    %c0_i32_0 = arith.constant 0 : i32
    return %arg3, %arg0, %c2_i32, %c0_i32, %arg1 : i32, i32, i32, i32, i32
  }
  func.func @transform_3(%arg0: i32, %arg1: i32, %arg2: i32, %arg3: i32) -> (i32, i32, i32) {
    %c0_i32 = arith.constant 0 : i32
    return %arg0, %arg2, %arg3 : i32, i32, i32
  }
  func.func @transform_4(%arg0: i32, %arg1: i32, %arg2: i32, %arg3: i32) -> (i32, i32, i32, i32) {
    %c0_i32 = arith.constant 0 : i32
    %c0_i32_0 = arith.constant 0 : i32
    return %arg2, %arg0, %c0_i32, %arg1 : i32, i32, i32, i32
  }
}

module attributes {stable_mosaic.version = 11 : i64} {
  func.func @_matmul_nobias_kernel(%arg0: i32, %arg1: i32, %arg2: i32, %arg3: memref<16x32xf32, #tpu.memory_space<vmem>>, %arg4: memref<32x32xf32, #tpu.memory_space<vmem>>, %arg5: memref<16x32xf32, #tpu.memory_space<vmem>>, %arg6: memref<16x32xf32, #tpu.memory_space<vmem>>) attributes {dimension_semantics = [#tpu.dimension_semantics<parallel>, #tpu.dimension_semantics<parallel>, #tpu.dimension_semantics<arbitrary>], iteration_bounds = array<i64: 1, 1, 1>, scalar_prefetch = 0 : i64, scratch_operands = 1 : i64, tpu.core_type = #tpu.core_type<tc>, window_params = [{transform_indices = @transform_0, window_bounds = array<i64: 16, 32>}, {transform_indices = @transform_1, window_bounds = array<i64: 32, 32>}, {transform_indices = @transform_2, window_bounds = array<i64: 16, 32>}]} {
    %c0_i32 = arith.constant 0 : i32
    %0 = arith.cmpi eq, %arg2, %c0_i32 : i32
    %1 = arith.extui %0 : i1 to i32
    %c0_i32_0 = arith.constant 0 : i32
    %2 = arith.cmpi ne, %1, %c0_i32_0 : i32
    scf.if %2 {
      %cst_10 = arith.constant 0.000000e+00 : f32
      %12 = vector.broadcast %cst_10 : f32 to vector<16x32xf32>
      %c0_11 = arith.constant 0 : index
      %c0_12 = arith.constant 0 : index
      %13 = vector.load %arg6[%c0_11, %c0_12] : memref<16x32xf32, #tpu.memory_space<vmem>>, vector<16x32xf32>
      tpu.vector_store %arg6[%c0_11, %c0_12], %12 {strides = array<i32>} : memref<16x32xf32, #tpu.memory_space<vmem>>, vector<16x32xf32>,
    } else {
    }
    %c0 = arith.constant 0 : index
    %c0_1 = arith.constant 0 : index
    %3 = vector.load %arg6[%c0, %c0_1] : memref<16x32xf32, #tpu.memory_space<vmem>>, vector<16x32xf32>
    %c0_2 = arith.constant 0 : index
    %c0_3 = arith.constant 0 : index
    %4 = vector.load %arg3[%c0_2, %c0_3] : memref<16x32xf32, #tpu.memory_space<vmem>>, vector<16x32xf32>
    %c0_4 = arith.constant 0 : index
    %c0_5 = arith.constant 0 : index
    %5 = vector.load %arg4[%c0_4, %c0_5] : memref<32x32xf32, #tpu.memory_space<vmem>>, vector<32x32xf32>
    %cst = arith.constant dense<0.000000e+00> : vector<16x32xf32>
    %6 = tpu.matmul %4, %5, %cst {dimension_numbers = #tpu.dot_dimension_numbers<[1], [0], [0], [1], [0, 0, 1, 1], [], []>} : vector<16x32xf32>, vector<32x32xf32>, vector<16x32xf32> -> vector<16x32xf32>
    %7 = arith.addf %3, %6 : vector<16x32xf32>
    %c0_6 = arith.constant 0 : index
    %c0_7 = arith.constant 0 : index
    %8 = vector.load %arg6[%c0_6, %c0_7] : memref<16x32xf32, #tpu.memory_space<vmem>>, vector<16x32xf32>
    tpu.vector_store %arg6[%c0_6, %c0_7], %7 {strides = array<i32>} : memref<16x32xf32, #tpu.memory_space<vmem>>, vector<16x32xf32>,
    %c0_i32_8 = arith.constant 0 : i32
    %9 = arith.cmpi eq, %arg2, %c0_i32_8 : i32
    %10 = arith.extui %9 : i1 to i32
    %c0_i32_9 = arith.constant 0 : i32
    %11 = arith.cmpi ne, %10, %c0_i32_9 : i32
    scf.if %11 {
      %c0_10 = arith.constant 0 : index
      %c0_11 = arith.constant 0 : index
      %12 = vector.load %arg6[%c0_10, %c0_11] : memref<16x32xf32, #tpu.memory_space<vmem>>, vector<16x32xf32>
      %c0_12 = arith.constant 0 : index
      %c0_13 = arith.constant 0 : index
      %13 = vector.load %arg5[%c0_12, %c0_13] : memref<16x32xf32, #tpu.memory_space<vmem>>, vector<16x32xf32>
      tpu.vector_store %arg5[%c0_12, %c0_13], %12 {strides = array<i32>} : memref<16x32xf32, #tpu.memory_space<vmem>>, vector<16x32xf32>,
    } else {
    }
    return
  }
  func.func @transform_0(%arg0: i32, %arg1: i32, %arg2: i32) -> (i32, i32) {
    %c0_i32 = arith.constant 0 : i32
    return %arg0, %arg2 : i32, i32
  }
  func.func @transform_1(%arg0: i32, %arg1: i32, %arg2: i32) -> (i32, i32) {
    %c0_i32 = arith.constant 0 : i32
    return %arg2, %arg1 : i32, i32
  }
  func.func @transform_2(%arg0: i32, %arg1: i32, %arg2: i32) -> (i32, i32) {
    %c0_i32 = arith.constant 0 : i32
    return %arg0, %arg1 : i32, i32
  }
}

</mosaic_0001>

<llo_original>
// kernel: parallel_attention_forward.5
$region0: #{parallel_attention_forward.5}
  #allocation0 [shape = 'u32[]', space=smem, size = 0x4, offset = 0x4, fixed_abs, tag = 'smem constant byte address 0x4 - core index']
  #allocation1 [shape = 'u32[144,128]{1,0:T(1,128)}', space=vmem, size = 0x12000, scoped, tag = 'internal scratch']
  #allocation2 [shape = 'f32[16,32]{1,0:T(8,128)}', space=vmem, size = 0x2000, scoped, tag = 'scratch operand']
  %s0 = inlined_call_operand.hbm [shape: f32[16,32], index: 0, kind: input, shape index: {}]
  %s1 = inlined_call_operand.hbm [shape: f32[32,32], index: 1, kind: input, shape index: {}]
  %s2 = inlined_call_operand.hbm [shape: f32[16,32], index: 2, kind: output, shape index: {}]
  %s3 = sld [smem:[#allocation0]]
  $region34: #{parallel_attention_forward.5} parent=0
    _
  %s5 = ssub.s32 1, %s3
  %s6 = scalar_select 0, %s5, %s3
  $region1: #{parallel_attention_forward.5} parent=0
    #allocation3 [shape = 'u8[8192]{0}', space=vmem, size = 0x2000, scoped, tag = 'input window, operand 0, single buffered']
    #allocation4 [shape = 's32[1]{0}', space=sflag, size = 0x4, scoped, tag = 'scoped memory for parallel_attention_forward.5']
    #allocation5 [shape = 's32[1]{0}', space=sflag, size = 0x4, scoped, tag = 'scoped memory for parallel_attention_forward.5']
    #allocation6 [shape = 'u8[16384]{0}', space=vmem, size = 0x4000, scoped, tag = 'input window, operand 1, single buffered']
    #allocation7 [shape = 's32[1]{0}', space=sflag, size = 0x4, scoped, tag = 'scoped memory for parallel_attention_forward.5']
    #allocation8 [shape = 'u8[8192]{0}', space=vmem, size = 0x2000, scoped, tag = 'output window, operand 0, single buffered']
    %7 = vsyncpa [#allocation4], 0
    %8 = vsyncpa [#allocation7], 0
    %9 = vsyncpa [#allocation5], 0
    // Predicated region
    $region2: #{parallel_attention_forward.5} parent=1 // pred_check
      _
    $region3: #{parallel_attention_forward.5} parent=1 // pred_check_branch
      %11 = sbr.rel (0) target = $region5
    $region4: #{parallel_attention_forward.5} parent=1 // pred_region
      %s13 = ssub.s32 256, 256
      %14 = vsyncadd [#allocation4], %s13
      %s15 = sshll.u32 [#allocation3], 4
      %s16 = int_to_ptr.vmem [resolvable:$true] %s15
      %21 = dma.hbm_to_vmem [thread:$0]  %s0, 256, %s16, [#allocation4], 128, 128, 8
    $region5: #{parallel_attention_forward.5} parent=1 // pred_fallthru
      _
    // Predicated region
    $region6: #{parallel_attention_forward.5} parent=1 // pred_check
      _
    $region7: #{parallel_attention_forward.5} parent=1 // pred_check_branch
      %23 = sbr.rel (0) target = $region9
    $region8: #{parallel_attention_forward.5} parent=1 // pred_region
      %s25 = ssub.s32 512, 512
      %26 = vsyncadd [#allocation7], %s25
      %s27 = sshll.u32 [#allocation6], 4
      %s28 = int_to_ptr.vmem [resolvable:$true] %s27
      %33 = dma.hbm_to_vmem [thread:$0]  %s1, 512, %s28, [#allocation7], 128, 128, 8
    $region9: #{parallel_attention_forward.5} parent=1 // pred_fallthru
      _
    // Predicated region
    $region10: #{parallel_attention_forward.5} parent=1 // pred_check
      _
    $region11: #{parallel_attention_forward.5} parent=1 // pred_check_branch
      %35 = sbr.rel (0) target = $region13
    $region12: #{parallel_attention_forward.5} parent=1 // pred_region
      %36 = dma.done [#allocation4], 256
    $region13: #{parallel_attention_forward.5} parent=1 // pred_fallthru
      _
    // Predicated region
    $region14: #{parallel_attention_forward.5} parent=1 // pred_check
      _
    $region15: #{parallel_attention_forward.5} parent=1 // pred_check_branch
      %38 = sbr.rel (0) target = $region17
    $region16: #{parallel_attention_forward.5} parent=1 // pred_region
      %39 = dma.done [#allocation7], 512
    $region17: #{parallel_attention_forward.5} parent=1 // pred_fallthru
      _
    %p40 = scmp.eq.s32.totalorder 0, 0
    // Predicated region
    $region18: #{parallel_attention_forward.5} parent=1 // pred_check
      %p41 = pneg %p40
    $region19: #{parallel_attention_forward.5} parent=1 // pred_check_branch
      %43 = sbr.rel (%p41) target = $region21
    $region20: #{parallel_attention_forward.5} parent=1 // pred_region
      %vm44 = vcmask 261120
      %45 = vst.msk [vmem:[#allocation2] sm:$0xff] %vm44, 0.0
      %46 = vst.msk [vmem:[#allocation2 + $0x8] sm:$0xff] %vm44, 0.0
    $region21: #{parallel_attention_forward.5} parent=1 // pred_fallthru
      _
    %v47 = vld [vmem:[#allocation2] sm:$0xff]
    %v48 = vld [vmem:[#allocation2 + $0x8] sm:$0xff]
    %v49 = vld [vmem:[#allocation3] sm:$0xff]
    %v50 = vld [vmem:[#allocation3 + $0x8] sm:$0xff]
    %v51 = vld [vmem:[#allocation6] sm:$0xff]
    %v52 = vld [vmem:[#allocation6 + $0x8] sm:$0xff]
    %v53 = vld [vmem:[#allocation6 + $0x10] sm:$0xff]
    %v54 = vld [vmem:[#allocation6 + $0x18] sm:$0xff]
    %vm55 = vcmask 261120
    %v57 = vsel %vm55, %v49, 0
    %v60 = vsel %vm55, %v50, 0
    %62 = vmatprep.subr.mxu0 0.0
    %63 = vmatpush1.msra.mxu0 %v51
    %64 = vmatprep.subr.mxu0 0.0
    %65 = vmatpush1.msra.mxu0 %v52
    %66 = vmatprep.subr.mxu0 0.0
    %67 = vmatpush1.msra.mxu0 %v53
    %68 = vmatprep.subr.mxu0 0.0
    %69 = vmatpush1.msra.mxu0 %v54
    %70 = vmatprep.subr.mxu0 0.0
    %71 = vmatpush1.msra.mxu0 0.0
    %72 = vmatprep.subr.mxu0 0.0
    %73 = vmatpush1.msra.mxu0 0.0
    %74 = vmatprep.subr.mxu0 0.0
    %75 = vmatpush1.msra.mxu0 0.0
    %76 = vmatprep.subr.mxu0 0.0
    %77 = vmatpush1.msra.mxu0 0.0
    %78 = vmatprep.subr.mxu0 0.0
    %79 = vmatpush1.msra.mxu0 0.0
    %80 = vmatprep.subr.mxu0 0.0
    %81 = vmatpush1.msra.mxu0 0.0
    %82 = vmatprep.subr.mxu0 0.0
    %83 = vmatpush1.msra.mxu0 0.0
    %84 = vmatprep.subr.mxu0 0.0
    %85 = vmatpush1.msra.mxu0 0.0
    %86 = vmatprep.subr.mxu0 0.0
    %87 = vmatpush1.msra.mxu0 0.0
    %88 = vmatprep.subr.mxu0 0.0
    %89 = vmatpush1.msra.mxu0 0.0
    %90 = vmatprep.subr.mxu0 0.0
    %91 = vmatpush1.msra.mxu0 0.0
    %92 = vmatprep.subr.mxu0 0.0
    %93 = vmatpush1.msra.mxu0 0.0
    %94 = vmatprep.subr.mxu0 0.0
    %95 = vmatpush1.msra.mxu0 0.0
    %96 = vmatprep.subr.mxu0 0.0
    %97 = vmatpush1.msra.mxu0 0.0
    %98 = vmatprep.subr.mxu0 0.0
    %99 = vmatpush1.msra.mxu0 0.0
    %100 = vmatprep.subr.mxu0 0.0
    %101 = vmatpush1.msra.mxu0 0.0
    %102 = vmatprep.subr.mxu0 0.0
    %103 = vmatpush1.msra.mxu0 0.0
    %104 = vmatprep.subr.mxu0 0.0
    %105 = vmatpush1.msra.mxu0 0.0
    %106 = vmatprep.subr.mxu0 0.0
    %107 = vmatpush1.msra.mxu0 0.0
    %108 = vmatprep.subr.mxu0 0.0
    %109 = vmatpush1.msra.mxu0 0.0
    %110 = vmatprep.subr.mxu0 0.0
    %111 = vmatpush1.msra.mxu0 0.0
    %112 = vmatprep.subr.mxu0 0.0
    %113 = vmatpush1.msra.mxu0 0.0
    %114 = vmatprep.subr.mxu0 0.0
    %115 = vmatpush1.msra.mxu0 0.0
    %116 = vmatprep.subr.mxu0 0.0
    %117 = vmatpush1.msra.mxu0 0.0
    %118 = vmatprep.subr.mxu0 0.0
    %119 = vmatpush1.msra.mxu0 0.0
    %120 = vmatprep.subr.mxu0 0.0
    %121 = vmatpush1.msra.mxu0 0.0
    %122 = vmatprep.subr.mxu0 0.0
    %123 = vmatpush1.msra.mxu0 0.0
    %124 = vmatprep.subr.mxu0 0.0
    %125 = vmatpush1.msra.mxu0 0.0
    %126 = vmatprep.mubr.f32.mxu0 0.0
    %127 = vmatmul.mubr.f32.gmra.mrb[0].mxu0 %v57
    %v128 = vpop.f32.mrb[0].mxu0
    %v129 = vadd.f32 0.0, %v128
    %v130 = vpop.f32.mrb[0].mxu0
    %131 = vmatprep.mubr.f32.mxu0 0.0
    %132 = vmatmul.mubr.f32.gmra.mrb[0].mxu0 %v60
    %v133 = vpop.f32.mrb[0].mxu0
    %v134 = vadd.f32 0.0, %v133
    %v135 = vpop.f32.mrb[0].mxu0
    %136 = vdwg.mxu0
    %v137 = vadd.f32 %v47, %v129
    %v138 = vadd.f32 %v48, %v134
    %139 = vst.msk [vmem:[#allocation2] sm:$0xff] %vm55, %v137
    %140 = vst.msk [vmem:[#allocation2 + $0x8] sm:$0xff] %vm55, %v138
    // Predicated region
    $region22: #{parallel_attention_forward.5} parent=1 // pred_check
      %p141 = pneg %p40
    $region23: #{parallel_attention_forward.5} parent=1 // pred_check_branch
      %143 = sbr.rel (%p141) target = $region25
    $region24: #{parallel_attention_forward.5} parent=1 // pred_region
      %v144 = vld [vmem:[#allocation2] sm:$0xff]
      %v145 = vld [vmem:[#allocation2 + $0x8] sm:$0xff]
      %146 = vst.msk [vmem:[#allocation8] sm:$0xff] %vm55, %v144
      %147 = vst.msk [vmem:[#allocation8 + $0x8] sm:$0xff] %vm55, %v145
    $region25: #{parallel_attention_forward.5} parent=1 // pred_fallthru
      _
    // Predicated region
    $region26: #{parallel_attention_forward.5} parent=1 // pred_check
      _
    $region27: #{parallel_attention_forward.5} parent=1 // pred_check_branch
      %149 = sbr.rel (0) target = $region29
    $region28: #{parallel_attention_forward.5} parent=1 // pred_region
      %s151 = ssub.s32 256, 256
      %152 = vsyncadd [#allocation5], %s151
      %s153 = sshll.u32 [#allocation8], 4
      %s154 = int_to_ptr.vmem [resolvable:$true] %s153
      %159 = dma.vmem_to_hbm [thread:$0]  %s154, 256, %s2, [#allocation5], 128, 128, 8
    $region29: #{parallel_attention_forward.5} parent=1 // pred_fallthru
      _
    // Predicated region
    $region30: #{parallel_attention_forward.5} parent=1 // pred_check
      _
    $region31: #{parallel_attention_forward.5} parent=1 // pred_check_branch
      %161 = sbr.rel (0) target = $region33
    $region32: #{parallel_attention_forward.5} parent=1 // pred_region
      %162 = dma.done [#allocation5], 256
    $region33: #{parallel_attention_forward.5} parent=1 // pred_fallthru
      _
    %163 = vsyncpa [#allocation4], 1
    %164 = vsyncpa [#allocation7], 1
    %165 = vsyncpa [#allocation5], 1

// kernel: parallel_attention_forward.3
$region0: #{parallel_attention_forward.3}
  #allocation0 [shape = 'u32[]', space=smem, size = 0x4, offset = 0x4, fixed_abs, tag = 'smem constant byte address 0x4 - core index']
  #allocation1 [shape = 'u32[144,128]{1,0:T(1,128)}', space=vmem, size = 0x12000, scoped, tag = 'internal scratch']
  #allocation2 [shape = 'f32[16,96]{1,0:T(8,128)}', space=vmem, size = 0x2000, scoped, tag = 'scratch operand']
  %s0 = inlined_call_operand.hbm [shape: f32[16,32], index: 0, kind: input, shape index: {}]
  %s1 = inlined_call_operand.hbm [shape: f32[32,96], index: 1, kind: input, shape index: {}]
  %s2 = inlined_call_operand.hbm [shape: f32[1,96], index: 2, kind: input, shape index: {}]
  %s3 = inlined_call_operand.hbm [shape: f32[16,96], index: 3, kind: output, shape index: {}]
  %s4 = sld [smem:[#allocation0]]
  $region42: #{parallel_attention_forward.3} parent=0
    _
  %s6 = ssub.s32 1, %s4
  %s7 = scalar_select 0, %s6, %s4
  $region1: #{parallel_attention_forward.3} parent=0
    #allocation3 [shape = 'u8[8192]{0}', space=vmem, size = 0x2000, scoped, tag = 'input window, operand 0, single buffered']
    #allocation4 [shape = 's32[1]{0}', space=sflag, size = 0x4, scoped, tag = 'scoped memory for parallel_attention_forward.3']
    #allocation5 [shape = 's32[1]{0}', space=sflag, size = 0x4, scoped, tag = 'scoped memory for parallel_attention_forward.3']
    #allocation6 [shape = 'u8[16384]{0}', space=vmem, size = 0x4000, scoped, tag = 'input window, operand 1, single buffered']
    #allocation7 [shape = 's32[1]{0}', space=sflag, size = 0x4, scoped, tag = 'scoped memory for parallel_attention_forward.3']
    #allocation8 [shape = 'u8[512]{0}', space=vmem, size = 0x400, scoped, tag = 'input window, operand 2, single buffered']
    #allocation9 [shape = 'u8[8192]{0}', space=vmem, size = 0x2000, scoped, tag = 'output window, operand 0, single buffered']
    %8 = vsyncpa [#allocation4], 0
    %9 = vsyncpa [#allocation7], 0
    %10 = vsyncpa [#allocation5], 0
    // Predicated region
    $region2: #{parallel_attention_forward.3} parent=1 // pred_check
      _
    $region3: #{parallel_attention_forward.3} parent=1 // pred_check_branch
      %12 = sbr.rel (0) target = $region5
    $region4: #{parallel_attention_forward.3} parent=1 // pred_region
      %s14 = ssub.s32 256, 256
      %15 = vsyncadd [#allocation4], %s14
      %s16 = sshll.u32 [#allocation3], 4
      %s17 = int_to_ptr.vmem [resolvable:$true] %s16
      %22 = dma.hbm_to_vmem [thread:$0]  %s0, 256, %s17, [#allocation4], 128, 128, 8
    $region5: #{parallel_attention_forward.3} parent=1 // pred_fallthru
      _
    // Predicated region
    $region6: #{parallel_attention_forward.3} parent=1 // pred_check
      _
    $region7: #{parallel_attention_forward.3} parent=1 // pred_check_branch
      %24 = sbr.rel (0) target = $region9
    $region8: #{parallel_attention_forward.3} parent=1 // pred_region
      %s26 = ssub.s32 512, 512
      %27 = vsyncadd [#allocation7], %s26
      %s28 = sshll.u32 [#allocation6], 4
      %s29 = int_to_ptr.vmem [resolvable:$true] %s28
      %34 = dma.hbm_to_vmem [thread:$0]  %s1, 512, %s29, [#allocation7], 128, 128, 8
    $region9: #{parallel_attention_forward.3} parent=1 // pred_fallthru
      _
    // Predicated region
    $region10: #{parallel_attention_forward.3} parent=1 // pred_check
      _
    $region11: #{parallel_attention_forward.3} parent=1 // pred_check_branch
      %36 = sbr.rel (0) target = $region13
    $region12: #{parallel_attention_forward.3} parent=1 // pred_region
      %s38 = ssub.s32 16, 16
      %39 = vsyncadd [#allocation7], %s38
      %s41 = sshll.u32 [#allocation8], 4
      %s42 = int_to_ptr.vmem [resolvable:$true] %s41
      %44 = dma.hbm_to_vmem [thread:$0]  %s2, 16, %s42, [#allocation7]
    $region13: #{parallel_attention_forward.3} parent=1 // pred_fallthru
      _
    // Predicated region
    $region14: #{parallel_attention_forward.3} parent=1 // pred_check
      _
    $region15: #{parallel_attention_forward.3} parent=1 // pred_check_branch
      %46 = sbr.rel (0) target = $region17
    $region16: #{parallel_attention_forward.3} parent=1 // pred_region
      %47 = dma.done [#allocation4], 256
    $region17: #{parallel_attention_forward.3} parent=1 // pred_fallthru
      _
    // Predicated region
    $region18: #{parallel_attention_forward.3} parent=1 // pred_check
      _
    $region19: #{parallel_attention_forward.3} parent=1 // pred_check_branch
      %49 = sbr.rel (0) target = $region21
    $region20: #{parallel_attention_forward.3} parent=1 // pred_region
      %50 = dma.done [#allocation7], 512
    $region21: #{parallel_attention_forward.3} parent=1 // pred_fallthru
      _
    // Predicated region
    $region22: #{parallel_attention_forward.3} parent=1 // pred_check
      _
    $region23: #{parallel_attention_forward.3} parent=1 // pred_check_branch
      %52 = sbr.rel (0) target = $region25
    $region24: #{parallel_attention_forward.3} parent=1 // pred_region
      %53 = dma.done [#allocation7], 16
    $region25: #{parallel_attention_forward.3} parent=1 // pred_fallthru
      _
    %p54 = scmp.eq.s32.totalorder 0, 0
    // Predicated region
    $region26: #{parallel_attention_forward.3} parent=1 // pred_check
      %p55 = pneg %p54
    $region27: #{parallel_attention_forward.3} parent=1 // pred_check_branch
      %57 = sbr.rel (%p55) target = $region29
    $region28: #{parallel_attention_forward.3} parent=1 // pred_region
      %vm58 = vcmask 785408
      %59 = vst.msk [vmem:[#allocation2] sm:$0xff] %vm58, 0.0
      %60 = vst.msk [vmem:[#allocation2 + $0x8] sm:$0xff] %vm58, 0.0
    $region29: #{parallel_attention_forward.3} parent=1 // pred_fallthru
      _
    %v61 = vld [vmem:[#allocation2] sm:$0xff]
    %v62 = vld [vmem:[#allocation2 + $0x8] sm:$0xff]
    %v63 = vld [vmem:[#allocation3] sm:$0xff]
    %v64 = vld [vmem:[#allocation3 + $0x8] sm:$0xff]
    %v65 = vld [vmem:[#allocation6] sm:$0xff]
    %v66 = vld [vmem:[#allocation6 + $0x8] sm:$0xff]
    %v67 = vld [vmem:[#allocation6 + $0x10] sm:$0xff]
    %v68 = vld [vmem:[#allocation6 + $0x18] sm:$0xff]
    %vm69 = vcmask 261120
    %v71 = vsel %vm69, %v63, 0
    %v74 = vsel %vm69, %v64, 0
    %76 = vmatprep.subr.mxu0 0.0
    %77 = vmatpush1.msra.mxu0 %v65
    %78 = vmatprep.subr.mxu0 0.0
    %79 = vmatpush1.msra.mxu0 %v66
    %80 = vmatprep.subr.mxu0 0.0
    %81 = vmatpush1.msra.mxu0 %v67
    %82 = vmatprep.subr.mxu0 0.0
    %83 = vmatpush1.msra.mxu0 %v68
    %84 = vmatprep.subr.mxu0 0.0
    %85 = vmatpush1.msra.mxu0 0.0
    %86 = vmatprep.subr.mxu0 0.0
    %87 = vmatpush1.msra.mxu0 0.0
    %88 = vmatprep.subr.mxu0 0.0
    %89 = vmatpush1.msra.mxu0 0.0
    %90 = vmatprep.subr.mxu0 0.0
    %91 = vmatpush1.msra.mxu0 0.0
    %92 = vmatprep.subr.mxu0 0.0
    %93 = vmatpush1.msra.mxu0 0.0
    %94 = vmatprep.subr.mxu0 0.0
    %95 = vmatpush1.msra.mxu0 0.0
    %96 = vmatprep.subr.mxu0 0.0
    %97 = vmatpush1.msra.mxu0 0.0
    %98 = vmatprep.subr.mxu0 0.0
    %99 = vmatpush1.msra.mxu0 0.0
    %100 = vmatprep.subr.mxu0 0.0
    %101 = vmatpush1.msra.mxu0 0.0
    %102 = vmatprep.subr.mxu0 0.0
    %103 = vmatpush1.msra.mxu0 0.0
    %104 = vmatprep.subr.mxu0 0.0
    %105 = vmatpush1.msra.mxu0 0.0
    %106 = vmatprep.subr.mxu0 0.0
    %107 = vmatpush1.msra.mxu0 0.0
    %108 = vmatprep.subr.mxu0 0.0
    %109 = vmatpush1.msra.mxu0 0.0
    %110 = vmatprep.subr.mxu0 0.0
    %111 = vmatpush1.msra.mxu0 0.0
    %112 = vmatprep.subr.mxu0 0.0
    %113 = vmatpush1.msra.mxu0 0.0
    %114 = vmatprep.subr.mxu0 0.0
    %115 = vmatpush1.msra.mxu0 0.0
    %116 = vmatprep.subr.mxu0 0.0
    %117 = vmatpush1.msra.mxu0 0.0
    %118 = vmatprep.subr.mxu0 0.0
    %119 = vmatpush1.msra.mxu0 0.0
    %120 = vmatprep.subr.mxu0 0.0
    %121 = vmatpush1.msra.mxu0 0.0
    %122 = vmatprep.subr.mxu0 0.0
    %123 = vmatpush1.msra.mxu0 0.0
    %124 = vmatprep.subr.mxu0 0.0
    %125 = vmatpush1.msra.mxu0 0.0
    %126 = vmatprep.subr.mxu0 0.0
    %127 = vmatpush1.msra.mxu0 0.0
    %128 = vmatprep.subr.mxu0 0.0
    %129 = vmatpush1.msra.mxu0 0.0
    %130 = vmatprep.subr.mxu0 0.0
    %131 = vmatpush1.msra.mxu0 0.0
    %132 = vmatprep.subr.mxu0 0.0
    %133 = vmatpush1.msra.mxu0 0.0
    %134 = vmatprep.subr.mxu0 0.0
    %135 = vmatpush1.msra.mxu0 0.0
    %136 = vmatprep.subr.mxu0 0.0
    %137 = vmatpush1.msra.mxu0 0.0
    %138 = vmatprep.subr.mxu0 0.0
    %139 = vmatpush1.msra.mxu0 0.0
    %140 = vmatprep.mubr.f32.mxu0 0.0
    %141 = vmatmul.mubr.f32.gmra.mrb[0].mxu0 %v71
    %v142 = vpop.f32.mrb[0].mxu0
    %v143 = vadd.f32 0.0, %v142
    %v144 = vpop.f32.mrb[0].mxu0
    %145 = vmatprep.mubr.f32.mxu0 0.0
    %146 = vmatmul.mubr.f32.gmra.mrb[0].mxu0 %v74
    %v147 = vpop.f32.mrb[0].mxu0
    %v148 = vadd.f32 0.0, %v147
    %v149 = vpop.f32.mrb[0].mxu0
    %150 = vdwg.mxu0
    %v151 = vadd.f32 %v61, %v143
    %v152 = vadd.f32 %v62, %v148
    %vm153 = vcmask 785408
    %154 = vst.msk [vmem:[#allocation2] sm:$0xff] %vm153, %v151
    %155 = vst.msk [vmem:[#allocation2 + $0x8] sm:$0xff] %vm153, %v152
    // Predicated region
    $region30: #{parallel_attention_forward.3} parent=1 // pred_check
      %p156 = pneg %p54
    $region31: #{parallel_attention_forward.3} parent=1 // pred_check_branch
      %158 = sbr.rel (%p156) target = $region33
    $region32: #{parallel_attention_forward.3} parent=1 // pred_region
      %v159 = vld [vmem:[#allocation2] sm:$0xff]
      %v160 = vld [vmem:[#allocation2 + $0x8] sm:$0xff]
      %v161 = vld [vmem:[#allocation8] sm:$0x1]
      %v163 = vlaneseq
      %v164 = vshrl.u32 %v163, 7
      %v165 = vsub.s32 0, %v164
      %v166 = vrot.slane %v161, %v165
      %v168 = vadd.f32 %v159, %v166
      %v169 = vadd.f32 %v160, %v166
      %170 = vst.msk [vmem:[#allocation9] sm:$0xff] %vm153, %v168
      %171 = vst.msk [vmem:[#allocation9 + $0x8] sm:$0xff] %vm153, %v169
    $region33: #{parallel_attention_forward.3} parent=1 // pred_fallthru
      _
    // Predicated region
    $region34: #{parallel_attention_forward.3} parent=1 // pred_check
      _
    $region35: #{parallel_attention_forward.3} parent=1 // pred_check_branch
      %173 = sbr.rel (0) target = $region37
    $region36: #{parallel_attention_forward.3} parent=1 // pred_region
      %s175 = ssub.s32 256, 256
      %176 = vsyncadd [#allocation5], %s175
      %s177 = sshll.u32 [#allocation9], 4
      %s178 = int_to_ptr.vmem [resolvable:$true] %s177
      %183 = dma.vmem_to_hbm [thread:$0]  %s178, 256, %s3, [#allocation5], 128, 128, 8
    $region37: #{parallel_attention_forward.3} parent=1 // pred_fallthru
      _
    // Predicated region
    $region38: #{parallel_attention_forward.3} parent=1 // pred_check
      _
    $region39: #{parallel_attention_forward.3} parent=1 // pred_check_branch
      %185 = sbr.rel (0) target = $region41
    $region40: #{parallel_attention_forward.3} parent=1 // pred_region
      %186 = dma.done [#allocation5], 256
    $region41: #{parallel_attention_forward.3} parent=1 // pred_fallthru
      _
    %187 = vsyncpa [#allocation4], 1
    %188 = vsyncpa [#allocation7], 1
    %189 = vsyncpa [#allocation5], 1

// kernel: parallel_attention_forward.4
$region0: #{parallel_attention_forward.4}
  #allocation0 [shape = 'u32[]', space=smem, size = 0x4, offset = 0x4, fixed_abs, tag = 'smem constant byte address 0x4 - core index']
  #allocation1 [shape = 'u32[144,128]{1,0:T(1,128)}', space=vmem, size = 0x12000, scoped, tag = 'internal scratch']
  #allocation2 [shape = 'f32[8,4]{1,0:T(8,128)}', space=vmem, size = 0x1000, scoped, tag = 'scratch operand']
  #allocation3 [shape = 'f32[8,4]{1,0:T(8,128)}', space=vmem, size = 0x1000, scoped, tag = 'scratch operand']
  #allocation4 [shape = 'f32[8,32]{1,0:T(8,128)}', space=vmem, size = 0x1000, scoped, tag = 'scratch operand']
  %s0 = inlined_call_operand.vmem [shape: f32[8,2,3,1,32], index: 0, kind: input, shape index: {}, may-alias: {0,1,2}]
  %s1 = inlined_call_operand.vmem [shape: f32[8,2,3,1,32], index: 1, kind: input, shape index: {}, may-alias: {0,1,2}]
  %s2 = inlined_call_operand.vmem [shape: f32[8,2,3,1,32], index: 2, kind: input, shape index: {}, may-alias: {0,1,2}]
  %s3 = inlined_call_operand.vmem [shape: s8[2,8,8], index: 3, kind: input, shape index: {}]
  %s4 = inlined_call_operand.hbm [shape: f32[8,2,1,32], index: 4, kind: output, shape index: {}]
  %s5 = sld [smem:[#allocation0]]
  $region180: #{parallel_attention_forward.4} parent=0
    _
  %s7 = ssub.s32 1, %s5
  %s8 = scalar_select 0, %s7, %s5
  $region1: #{parallel_attention_forward.4} parent=0
    #allocation5 [shape = 'u8[8192]{0}', space=vmem, size = 0x2000, scoped, tag = 'input window, operand 0']
    #allocation6 [shape = 'u8[8192]{0}', space=vmem, size = 0x2000, scoped, tag = 'input window, operand 1']
    #allocation7 [shape = 'u8[8192]{0}', space=vmem, size = 0x2000, scoped, tag = 'input window, operand 2']
    #allocation8 [shape = 'u8[8192]{0}', space=vmem, size = 0x2000, scoped, tag = 'output window, operand 0']
    #allocation9 [shape = 's32[2]{0}', space=sflag, size = 0x8, scoped, tag = 'scoped memory for parallel_attention_forward.4']
    %9 = vsyncpa [#allocation9], 0
    %s10 = scalar_lea.sflag [#allocation9], 1
    %11 = vsyncpa %s10, 0
    loop: start=0, step=1, limit=4
    $region2: #{parallel_attention_forward.4} parent=1 // loop_pre_header
      _
    $region3: #{parallel_attention_forward.4} parent=1 // loop_header
      %s13 = sphi 0, %s17
      %p14 = scmp.ge.s32.totalorder %s13, 4
      %s20 = sphi 0, %s46
      %s21 = sphi 0, %s42
      %s22 = sphi 0, %s38
      %s23 = sphi 0, %s34
      %s24 = sphi 0, %s20
      %s25 = sphi 0, %s21
      %s26 = sphi 0, %s22
      %s27 = sphi 0, %s23
      %s28 = sphi 0, %s24
      %s29 = sphi 0, %s25
      %s30 = sphi 0, %s26
      %s31 = sphi 0, %s27
      %s53 = sphi 0, %s55
      %s56 = sphi 0, %s53
      %s57 = sphi 0, %s56
      %s73 = sphi 0, %s57
      %s83 = sphi 0, %s85
      %s86 = sphi 0, %s83
      %s87 = sphi 0, %s86
      %s103 = sphi 0, %s87
      %s113 = sphi 0, %s115
      %s116 = sphi 0, %s113
      %s117 = sphi 0, %s116
      %s133 = sphi 0, %s117
      %s143 = sphi 0, %s145
      %s146 = sphi 0, %s143
      %s147 = sphi 0, %s146
      %s163 = sphi 0, %s147
      %s173 = sphi 0, %s175
      %s176 = sphi 0, %s173
      %s177 = sphi 0, %s176
      %s193 = sphi 0, %s177
    $region4: #{parallel_attention_forward.4} parent=1 // loop_header_branch
      %16 = sbr.rel (%p14) target = $region8
    $region5: #{parallel_attention_forward.4} parent=1 // loop_body
      %s18 = ssub.s32 %s13, 1
      %s19 = ssub.s32 %s13, 2
      %s32 = sadd.s32 1, %s23
      %p33 = scmp.ge.s32.totalorder %s32, 1
      %s34 = scalar_select %p33, 0, %s32
      %s35 = sadd.s32 1, %s22
      %s36 = scalar_select %p33, %s35, %s22
      %p37 = scmp.ge.s32.totalorder %s36, 1
      %s38 = scalar_select %p37, 0, %s36
      %s39 = sadd.s32 1, %s21
      %s40 = scalar_select %p37, %s39, %s21
      %p41 = scmp.ge.s32.totalorder %s40, 1
      %s42 = scalar_select %p41, 0, %s40
      %s43 = sadd.s32 1, %s20
      %s44 = scalar_select %p41, %s43, %s20
      %p45 = scmp.ge.s32.totalorder %s44, 2
      %s46 = scalar_select %p45, 0, %s44
      %s47 = ssub.s32 %s22, %s38
      %s48 = ssub.s32 %s20, %s46
      %s49 = sor.u32 %s47, %s48
      %s50 = ssub.s32 %s21, %s42
      %s51 = sor.u32 %s49, %s50
      %p52 = scmp.eq.s32.totalorder %s51, 0
      %s54 = sadd.s32 %s53, 1
      %s55 = scalar_select %p52, %s53, %s54
      %p58 = pneg %p52
      %p59 = scmp.eq.s32.totalorder %s13, 1
      %p60 = por %p58, %p59
      %p61 = scmp.ne.s32.totalorder %s53, %s56
      %p62 = scmp.eq.s32.totalorder %s13, 0
      %p63 = por %p61, %p62
      %p64 = scmp.ne.s32.totalorder %s53, %s56
      %p65 = scmp.eq.s32.totalorder %s18, 1
      %p66 = por %p64, %p65
      %p67 = scmp.ne.s32.totalorder %s56, %s57
      %p68 = scmp.eq.s32.totalorder %s18, 0
      %p69 = por %p67, %p68
      %p70 = scmp.ne.s32.totalorder %s56, %s57
      %p71 = scmp.eq.s32.totalorder %s19, 1
      %p72 = por %p70, %p71
      %p74 = scmp.ne.s32.totalorder %s57, %s73
      %p75 = scmp.eq.s32.totalorder %s19, 0
      %p76 = por %p74, %p75
      %s77 = ssub.s32 %s23, %s34
      %s78 = ssub.s32 %s20, %s46
      %s79 = sor.u32 %s77, %s78
      %s80 = ssub.s32 %s21, %s42
      %s81 = sor.u32 %s79, %s80
      %p82 = scmp.eq.s32.totalorder %s81, 0
      %s84 = sadd.s32 %s83, 1
      %s85 = scalar_select %p82, %s83, %s84
      %p88 = pneg %p82
      %p89 = scmp.eq.s32.totalorder %s13, 1
      %p90 = por %p88, %p89
      %p91 = scmp.ne.s32.totalorder %s83, %s86
      %p92 = scmp.eq.s32.totalorder %s13, 0
      %p93 = por %p91, %p92
      %p94 = scmp.ne.s32.totalorder %s83, %s86
      %p95 = scmp.eq.s32.totalorder %s18, 1
      %p96 = por %p94, %p95
      %p97 = scmp.ne.s32.totalorder %s86, %s87
      %p98 = scmp.eq.s32.totalorder %s18, 0
      %p99 = por %p97, %p98
      %p100 = scmp.ne.s32.totalorder %s86, %s87
      %p101 = scmp.eq.s32.totalorder %s19, 1
      %p102 = por %p100, %p101
      %p104 = scmp.ne.s32.totalorder %s87, %s103
      %p105 = scmp.eq.s32.totalorder %s19, 0
      %p106 = por %p104, %p105
      %s107 = ssub.s32 %s23, %s34
      %s108 = ssub.s32 %s20, %s46
      %s109 = sor.u32 %s107, %s108
      %s110 = ssub.s32 %s21, %s42
      %s111 = sor.u32 %s109, %s110
      %p112 = scmp.eq.s32.totalorder %s111, 0
      %s114 = sadd.s32 %s113, 1
      %s115 = scalar_select %p112, %s113, %s114
      %p118 = pneg %p112
      %p119 = scmp.eq.s32.totalorder %s13, 1
      %p120 = por %p118, %p119
      %p121 = scmp.ne.s32.totalorder %s113, %s116
      %p122 = scmp.eq.s32.totalorder %s13, 0
      %p123 = por %p121, %p122
      %p124 = scmp.ne.s32.totalorder %s113, %s116
      %p125 = scmp.eq.s32.totalorder %s18, 1
      %p126 = por %p124, %p125
      %p127 = scmp.ne.s32.totalorder %s116, %s117
      %p128 = scmp.eq.s32.totalorder %s18, 0
      %p129 = por %p127, %p128
      %p130 = scmp.ne.s32.totalorder %s116, %s117
      %p131 = scmp.eq.s32.totalorder %s19, 1
      %p132 = por %p130, %p131
      %p134 = scmp.ne.s32.totalorder %s117, %s133
      %p135 = scmp.eq.s32.totalorder %s19, 0
      %p136 = por %p134, %p135
      %s137 = ssub.s32 %s20, %s46
      %s138 = ssub.s32 %s22, %s38
      %s139 = sor.u32 %s137, %s138
      %s140 = ssub.s32 %s23, %s34
      %s141 = sor.u32 %s139, %s140
      %p142 = scmp.eq.s32.totalorder %s141, 0
      %s144 = sadd.s32 %s143, 1
      %s145 = scalar_select %p142, %s143, %s144
      %p148 = pneg %p142
      %p149 = scmp.eq.s32.totalorder %s13, 1
      %p150 = por %p148, %p149
      %p151 = scmp.ne.s32.totalorder %s143, %s146
      %p152 = scmp.eq.s32.totalorder %s13, 0
      %p153 = por %p151, %p152
      %p154 = scmp.ne.s32.totalorder %s143, %s146
      %p155 = scmp.eq.s32.totalorder %s18, 1
      %p156 = por %p154, %p155
      %p157 = scmp.ne.s32.totalorder %s146, %s147
      %p158 = scmp.eq.s32.totalorder %s18, 0
      %p159 = por %p157, %p158
      %p160 = scmp.ne.s32.totalorder %s146, %s147
      %p161 = scmp.eq.s32.totalorder %s19, 1
      %p162 = por %p160, %p161
      %p164 = scmp.ne.s32.totalorder %s147, %s163
      %p165 = scmp.eq.s32.totalorder %s19, 0
      %p166 = por %p164, %p165
      %s167 = ssub.s32 %s22, %s38
      %s168 = ssub.s32 %s20, %s46
      %s169 = sor.u32 %s167, %s168
      %s170 = ssub.s32 %s21, %s42
      %s171 = sor.u32 %s169, %s170
      %p172 = scmp.eq.s32.totalorder %s171, 0
      %s174 = sadd.s32 %s173, 1
      %s175 = scalar_select %p172, %s173, %s174
      %p178 = pneg %p172
      %p179 = scmp.eq.s32.totalorder %s13, 1
      %p180 = por %p178, %p179
      %p181 = scmp.ne.s32.totalorder %s173, %s176
      %p182 = scmp.eq.s32.totalorder %s13, 0
      %p183 = por %p181, %p182
      %p184 = scmp.ne.s32.totalorder %s173, %s176
      %p185 = scmp.eq.s32.totalorder %s18, 1
      %p186 = por %p184, %p185
      %p187 = scmp.ne.s32.totalorder %s176, %s177
      %p188 = scmp.eq.s32.totalorder %s18, 0
      %p189 = por %p187, %p188
      %p190 = scmp.ne.s32.totalorder %s176, %s177
      %p191 = scmp.eq.s32.totalorder %s19, 1
      %p192 = por %p190, %p191
      %p194 = scmp.ne.s32.totalorder %s177, %s193
      %p195 = scmp.eq.s32.totalorder %s19, 0
      %p196 = por %p194, %p195
      %p197 = scmp.le.s32.totalorder 1, %s13
      %p198 = scmp.lt.s32.totalorder %s13, 3
      %p199 = pnand %p197, %p198
      %p200 = pneg %p199
      // Predicated region
      $region9: #{parallel_attention_forward.4} parent=5 // pred_check
        _
      $region10: #{parallel_attention_forward.4} parent=5 // pred_check_branch
        %202 = sbr.rel (%p199) target = $region12
      $region11: #{parallel_attention_forward.4} parent=5 // pred_region
        %s203 = ssub.s32 %s13, 1
      $region12: #{parallel_attention_forward.4} parent=5 // pred_fallthru
        _
      %p204 = scmp.lt.s32.totalorder %s13, 2
      // Predicated region
      $region13: #{parallel_attention_forward.4} parent=5 // pred_check
        %p205 = pneg %p204
      $region14: #{parallel_attention_forward.4} parent=5 // pred_check_branch
        %207 = sbr.rel (%p205) target = $region16
      $region15: #{parallel_attention_forward.4} parent=5 // pred_region
        // Predicated region
        $region17: #{parallel_attention_forward.4} parent=15 // pred_check
          %p208 = pneg %p63
        $region18: #{parallel_attention_forward.4} parent=15 // pred_check_branch
          %210 = sbr.rel (%p208) target = $region20
        $region19: #{parallel_attention_forward.4} parent=15 // pred_region
          %s211 = sand.u32 %s53, 1
          %s212 = sand.u32 %s53, 1
          %s213 = smul.addr %s212, 8
          %s214 = scalar_lea.vmem [#allocation5], %s213
          %s215 = smul.u32 8, %s22
          %s216 = smul.addr %s20, 3
          %s217 = sadd.s32 %s21, %s216
          %s218 = smul.addr %s215, 6
          %s219 = sadd.s32 %s217, %s218
          %s220 = scalar_lea.vmem %s0, %s219
          // Predicated region
          $region21: #{parallel_attention_forward.4} parent=19 // pred_check
            _
          $region22: #{parallel_attention_forward.4} parent=19 // pred_check_branch
            %222 = sbr.rel (0) target = $region24
          $region23: #{parallel_attention_forward.4} parent=19 // pred_region
            // Predicated region
            $region25: #{parallel_attention_forward.4} parent=23 // pred_check
              _
            $region26: #{parallel_attention_forward.4} parent=23 // pred_check_branch
              %224 = sbr.rel target = $region28
            $region27: #{parallel_attention_forward.4} parent=23 // pred_region
              // Predicated region
              $region40: #{parallel_attention_forward.4} parent=27 // pred_check
                _
              $region41: #{parallel_attention_forward.4} parent=27 // pred_check_branch
                %253 = sbr.rel (0) target = $region43
              $region42: #{parallel_attention_forward.4} parent=27 // pred_region
                loop: start=0, step=1, limit=1
                $region44: #{parallel_attention_forward.4} parent=42 // loop_pre_header
                  _
                $region45: #{parallel_attention_forward.4} parent=42 // loop_header
                  %s255 = sphi 0, %s259
                  %p256 = scmp.ge.s32.totalorder %s255, 1
                  %s260 = sphi %s220, %s220
                  %s261 = sphi %s214, %s214
                $region46: #{parallel_attention_forward.4} parent=42 // loop_header_branch
                  %258 = sbr.rel (%p256) target = $region50
                $region47: #{parallel_attention_forward.4} parent=42 // loop_body
                  _
                $region48: #{parallel_attention_forward.4} parent=42 // loop_footer
                  %s259 = sadd.s32 1, %s255
                $region49: #{parallel_attention_forward.4} parent=42 // loop_footer_branch
                  %254 = sbr.rel target = $region45
                $region50: #{parallel_attention_forward.4} parent=42 // loop_exit
                  _
                loop: start=0, step=1, limit=1
                $region51: #{parallel_attention_forward.4} parent=42 // loop_pre_header
                  _
                $region52: #{parallel_attention_forward.4} parent=42 // loop_header
                  %s264 = sphi 0, %s268
                  %p265 = scmp.ge.s32.totalorder %s264, 1
                  %s269 = sphi %s220, %s220
                  %s270 = sphi %s214, %s214
                $region53: #{parallel_attention_forward.4} parent=42 // loop_header_branch
                  %267 = sbr.rel (%p265) target = $region57
                $region54: #{parallel_attention_forward.4} parent=42 // loop_body
                  %v271 = vld [vmem:[%s269] sm:$0x1]
                  %272 = vst [vmem:[%s270] sm:$0x1] %v271
                  %v273 = vld [vmem:[%s269 + $0x6] sm:$0x1]
                  %274 = vst [vmem:[%s270 + $0x1] sm:$0x1] %v273
                  %v275 = vld [vmem:[%s269 + $0xc] sm:$0x1]
                  %276 = vst [vmem:[%s270 + $0x2] sm:$0x1] %v275
                  %v277 = vld [vmem:[%s269 + $0x12] sm:$0x1]
                  %278 = vst [vmem:[%s270 + $0x3] sm:$0x1] %v277
                  %v279 = vld [vmem:[%s269 + $0x18] sm:$0x1]
                  %280 = vst [vmem:[%s270 + $0x4] sm:$0x1] %v279
                  %v281 = vld [vmem:[%s269 + $0x1e] sm:$0x1]
                  %282 = vst [vmem:[%s270 + $0x5] sm:$0x1] %v281
                  %v283 = vld [vmem:[%s269 + $0x24] sm:$0x1]
                  %284 = vst [vmem:[%s270 + $0x6] sm:$0x1] %v283
                  %v285 = vld [vmem:[%s269 + $0x2a] sm:$0x1]
                  %286 = vst [vmem:[%s270 + $0x7] sm:$0x1] %v285
                $region55: #{parallel_attention_forward.4} parent=42 // loop_footer
                  %s268 = sadd.s32 1, %s264
                $region56: #{parallel_attention_forward.4} parent=42 // loop_footer_branch
                  %263 = sbr.rel target = $region52
                $region57: #{parallel_attention_forward.4} parent=42 // loop_exit
                  _
              $region43: #{parallel_attention_forward.4} parent=27 // pred_fallthru
                _
            $region28: #{parallel_attention_forward.4} parent=23 // pred_fallthru
              _
            // Predicated region
            $region29: #{parallel_attention_forward.4} parent=23 // pred_check
              _
            $region30: #{parallel_attention_forward.4} parent=23 // pred_check_branch
              %226 = sbr.rel (0) target = $region32
            $region31: #{parallel_attention_forward.4} parent=23 // pred_region
              loop: start=0, step=1, limit=1
              $region33: #{parallel_attention_forward.4} parent=31 // loop_pre_header
                _
              $region34: #{parallel_attention_forward.4} parent=31 // loop_header
                %s229 = sphi 0, %s233
                %p230 = scmp.ge.s32.totalorder %s229, 1
                %s234 = sphi %s220, %s220
                %s235 = sphi %s214, %s214
              $region35: #{parallel_attention_forward.4} parent=31 // loop_header_branch
                %232 = sbr.rel (%p230) target = $region39
              $region36: #{parallel_attention_forward.4} parent=31 // loop_body
                %v236 = vld [vmem:[%s234] sm:$0x1]
                %237 = vst [vmem:[%s235] sm:$0x1] %v236
                %v238 = vld [vmem:[%s234 + $0x6] sm:$0x1]
                %239 = vst [vmem:[%s235 + $0x1] sm:$0x1] %v238
                %v240 = vld [vmem:[%s234 + $0xc] sm:$0x1]
                %241 = vst [vmem:[%s235 + $0x2] sm:$0x1] %v240
                %v242 = vld [vmem:[%s234 + $0x12] sm:$0x1]
                %243 = vst [vmem:[%s235 + $0x3] sm:$0x1] %v242
                %v244 = vld [vmem:[%s234 + $0x18] sm:$0x1]
                %245 = vst [vmem:[%s235 + $0x4] sm:$0x1] %v244
                %v246 = vld [vmem:[%s234 + $0x1e] sm:$0x1]
                %247 = vst [vmem:[%s235 + $0x5] sm:$0x1] %v246
                %v248 = vld [vmem:[%s234 + $0x24] sm:$0x1]
                %249 = vst [vmem:[%s235 + $0x6] sm:$0x1] %v248
                %v250 = vld [vmem:[%s234 + $0x2a] sm:$0x1]
                %251 = vst [vmem:[%s235 + $0x7] sm:$0x1] %v250
              $region37: #{parallel_attention_forward.4} parent=31 // loop_footer
                %s233 = sadd.s32 1, %s229
              $region38: #{parallel_attention_forward.4} parent=31 // loop_footer_branch
                %228 = sbr.rel target = $region34
              $region39: #{parallel_attention_forward.4} parent=31 // loop_exit
                _
            $region32: #{parallel_attention_forward.4} parent=23 // pred_fallthru
              _
          $region24: #{parallel_attention_forward.4} parent=19 // pred_fallthru
            _
          %287 = vnop
        $region20: #{parallel_attention_forward.4} parent=15 // pred_fallthru
          _
        // Predicated region
        $region58: #{parallel_attention_forward.4} parent=15 // pred_check
          %p288 = pneg %p93
        $region59: #{parallel_attention_forward.4} parent=15 // pred_check_branch
          %290 = sbr.rel (%p288) target = $region61
        $region60: #{parallel_attention_forward.4} parent=15 // pred_region
          %s291 = sand.u32 %s83, 1
          %s292 = sand.u32 %s83, 1
          %s293 = smul.addr %s292, 8
          %s294 = scalar_lea.vmem [#allocation6], %s293
          %s295 = smul.u32 8, %s23
          %s296 = sadd.s32 %s21, 1
          %s297 = smul.addr %s20, 3
          %s298 = sadd.s32 %s296, %s297
          %s299 = smul.addr %s295, 6
          %s300 = sadd.s32 %s298, %s299
          %s301 = scalar_lea.vmem %s1, %s300
          // Predicated region
          $region62: #{parallel_attention_forward.4} parent=60 // pred_check
            _
          $region63: #{parallel_attention_forward.4} parent=60 // pred_check_branch
            %303 = sbr.rel (0) target = $region65
          $region64: #{parallel_attention_forward.4} parent=60 // pred_region
            // Predicated region
            $region66: #{parallel_attention_forward.4} parent=64 // pred_check
              _
            $region67: #{parallel_attention_forward.4} parent=64 // pred_check_branch
              %305 = sbr.rel target = $region69
            $region68: #{parallel_attention_forward.4} parent=64 // pred_region
              // Predicated region
              $region81: #{parallel_attention_forward.4} parent=68 // pred_check
                _
              $region82: #{parallel_attention_forward.4} parent=68 // pred_check_branch
                %334 = sbr.rel (0) target = $region84
              $region83: #{parallel_attention_forward.4} parent=68 // pred_region
                loop: start=0, step=1, limit=1
                $region85: #{parallel_attention_forward.4} parent=83 // loop_pre_header
                  _
                $region86: #{parallel_attention_forward.4} parent=83 // loop_header
                  %s336 = sphi 0, %s340
                  %p337 = scmp.ge.s32.totalorder %s336, 1
                  %s341 = sphi %s301, %s301
                  %s342 = sphi %s294, %s294
                $region87: #{parallel_attention_forward.4} parent=83 // loop_header_branch
                  %339 = sbr.rel (%p337) target = $region91
                $region88: #{parallel_attention_forward.4} parent=83 // loop_body
                  _
                $region89: #{parallel_attention_forward.4} parent=83 // loop_footer
                  %s340 = sadd.s32 1, %s336
                $region90: #{parallel_attention_forward.4} parent=83 // loop_footer_branch
                  %335 = sbr.rel target = $region86
                $region91: #{parallel_attention_forward.4} parent=83 // loop_exit
                  _
                loop: start=0, step=1, limit=1
                $region92: #{parallel_attention_forward.4} parent=83 // loop_pre_header
                  _
                $region93: #{parallel_attention_forward.4} parent=83 // loop_header
                  %s345 = sphi 0, %s349
                  %p346 = scmp.ge.s32.totalorder %s345, 1
                  %s350 = sphi %s301, %s301
                  %s351 = sphi %s294, %s294
                $region94: #{parallel_attention_forward.4} parent=83 // loop_header_branch
                  %348 = sbr.rel (%p346) target = $region98
                $region95: #{parallel_attention_forward.4} parent=83 // loop_body
                  %v352 = vld [vmem:[%s350] sm:$0x1]
                  %353 = vst [vmem:[%s351] sm:$0x1] %v352
                  %v354 = vld [vmem:[%s350 + $0x6] sm:$0x1]
                  %355 = vst [vmem:[%s351 + $0x1] sm:$0x1] %v354
                  %v356 = vld [vmem:[%s350 + $0xc] sm:$0x1]
                  %357 = vst [vmem:[%s351 + $0x2] sm:$0x1] %v356
                  %v358 = vld [vmem:[%s350 + $0x12] sm:$0x1]
                  %359 = vst [vmem:[%s351 + $0x3] sm:$0x1] %v358
                  %v360 = vld [vmem:[%s350 + $0x18] sm:$0x1]
                  %361 = vst [vmem:[%s351 + $0x4] sm:$0x1] %v360
                  %v362 = vld [vmem:[%s350 + $0x1e] sm:$0x1]
                  %363 = vst [vmem:[%s351 + $0x5] sm:$0x1] %v362
                  %v364 = vld [vmem:[%s350 + $0x24] sm:$0x1]
                  %365 = vst [vmem:[%s351 + $0x6] sm:$0x1] %v364
                  %v366 = vld [vmem:[%s350 + $0x2a] sm:$0x1]
                  %367 = vst [vmem:[%s351 + $0x7] sm:$0x1] %v366
                $region96: #{parallel_attention_forward.4} parent=83 // loop_footer
                  %s349 = sadd.s32 1, %s345
                $region97: #{parallel_attention_forward.4} parent=83 // loop_footer_branch
                  %344 = sbr.rel target = $region93
                $region98: #{parallel_attention_forward.4} parent=83 // loop_exit
                  _
              $region84: #{parallel_attention_forward.4} parent=68 // pred_fallthru
                _
            $region69: #{parallel_attention_forward.4} parent=64 // pred_fallthru
              _
            // Predicated region
            $region70: #{parallel_attention_forward.4} parent=64 // pred_check
              _
            $region71: #{parallel_attention_forward.4} parent=64 // pred_check_branch
              %307 = sbr.rel (0) target = $region73
            $region72: #{parallel_attention_forward.4} parent=64 // pred_region
              loop: start=0, step=1, limit=1
              $region74: #{parallel_attention_forward.4} parent=72 // loop_pre_header
                _
              $region75: #{parallel_attention_forward.4} parent=72 // loop_header
                %s310 = sphi 0, %s314
                %p311 = scmp.ge.s32.totalorder %s310, 1
                %s315 = sphi %s301, %s301
                %s316 = sphi %s294, %s294
              $region76: #{parallel_attention_forward.4} parent=72 // loop_header_branch
                %313 = sbr.rel (%p311) target = $region80
              $region77: #{parallel_attention_forward.4} parent=72 // loop_body
                %v317 = vld [vmem:[%s315] sm:$0x1]
                %318 = vst [vmem:[%s316] sm:$0x1] %v317
                %v319 = vld [vmem:[%s315 + $0x6] sm:$0x1]
                %320 = vst [vmem:[%s316 + $0x1] sm:$0x1] %v319
                %v321 = vld [vmem:[%s315 + $0xc] sm:$0x1]
                %322 = vst [vmem:[%s316 + $0x2] sm:$0x1] %v321
                %v323 = vld [vmem:[%s315 + $0x12] sm:$0x1]
                %324 = vst [vmem:[%s316 + $0x3] sm:$0x1] %v323
                %v325 = vld [vmem:[%s315 + $0x18] sm:$0x1]
                %326 = vst [vmem:[%s316 + $0x4] sm:$0x1] %v325
                %v327 = vld [vmem:[%s315 + $0x1e] sm:$0x1]
                %328 = vst [vmem:[%s316 + $0x5] sm:$0x1] %v327
                %v329 = vld [vmem:[%s315 + $0x24] sm:$0x1]
                %330 = vst [vmem:[%s316 + $0x6] sm:$0x1] %v329
                %v331 = vld [vmem:[%s315 + $0x2a] sm:$0x1]
                %332 = vst [vmem:[%s316 + $0x7] sm:$0x1] %v331
              $region78: #{parallel_attention_forward.4} parent=72 // loop_footer
                %s314 = sadd.s32 1, %s310
              $region79: #{parallel_attention_forward.4} parent=72 // loop_footer_branch
                %309 = sbr.rel target = $region75
              $region80: #{parallel_attention_forward.4} parent=72 // loop_exit
                _
            $region73: #{parallel_attention_forward.4} parent=64 // pred_fallthru
              _
          $region65: #{parallel_attention_forward.4} parent=60 // pred_fallthru
            _
          %368 = vnop
        $region61: #{parallel_attention_forward.4} parent=15 // pred_fallthru
          _
        // Predicated region
        $region99: #{parallel_attention_forward.4} parent=15 // pred_check
          %p369 = pneg %p123
        $region100: #{parallel_attention_forward.4} parent=15 // pred_check_branch
          %371 = sbr.rel (%p369) target = $region102
        $region101: #{parallel_attention_forward.4} parent=15 // pred_region
          %s372 = sand.u32 %s113, 1
          %s373 = sand.u32 %s113, 1
          %s374 = smul.addr %s373, 8
          %s375 = scalar_lea.vmem [#allocation7], %s374
          %s376 = smul.u32 8, %s23
          %s377 = sadd.s32 %s21, 2
          %s378 = smul.addr %s20, 3
          %s379 = sadd.s32 %s377, %s378
          %s380 = smul.addr %s376, 6
          %s381 = sadd.s32 %s379, %s380
          %s382 = scalar_lea.vmem %s2, %s381
          // Predicated region
          $region103: #{parallel_attention_forward.4} parent=101 // pred_check
            _
          $region104: #{parallel_attention_forward.4} parent=101 // pred_check_branch
            %384 = sbr.rel (0) target = $region106
          $region105: #{parallel_attention_forward.4} parent=101 // pred_region
            // Predicated region
            $region107: #{parallel_attention_forward.4} parent=105 // pred_check
              _
            $region108: #{parallel_attention_forward.4} parent=105 // pred_check_branch
              %386 = sbr.rel target = $region110
            $region109: #{parallel_attention_forward.4} parent=105 // pred_region
              // Predicated region
              $region122: #{parallel_attention_forward.4} parent=109 // pred_check
                _
              $region123: #{parallel_attention_forward.4} parent=109 // pred_check_branch
                %415 = sbr.rel (0) target = $region125
              $region124: #{parallel_attention_forward.4} parent=109 // pred_region
                loop: start=0, step=1, limit=1
                $region126: #{parallel_attention_forward.4} parent=124 // loop_pre_header
                  _
                $region127: #{parallel_attention_forward.4} parent=124 // loop_header
                  %s417 = sphi 0, %s421
                  %p418 = scmp.ge.s32.totalorder %s417, 1
                  %s422 = sphi %s382, %s382
                  %s423 = sphi %s375, %s375
                $region128: #{parallel_attention_forward.4} parent=124 // loop_header_branch
                  %420 = sbr.rel (%p418) target = $region132
                $region129: #{parallel_attention_forward.4} parent=124 // loop_body
                  _
                $region130: #{parallel_attention_forward.4} parent=124 // loop_footer
                  %s421 = sadd.s32 1, %s417
                $region131: #{parallel_attention_forward.4} parent=124 // loop_footer_branch
                  %416 = sbr.rel target = $region127
                $region132: #{parallel_attention_forward.4} parent=124 // loop_exit
                  _
                loop: start=0, step=1, limit=1
                $region133: #{parallel_attention_forward.4} parent=124 // loop_pre_header
                  _
                $region134: #{parallel_attention_forward.4} parent=124 // loop_header
                  %s426 = sphi 0, %s430
                  %p427 = scmp.ge.s32.totalorder %s426, 1
                  %s431 = sphi %s382, %s382
                  %s432 = sphi %s375, %s375
                $region135: #{parallel_attention_forward.4} parent=124 // loop_header_branch
                  %429 = sbr.rel (%p427) target = $region139
                $region136: #{parallel_attention_forward.4} parent=124 // loop_body
                  %v433 = vld [vmem:[%s431] sm:$0x1]
                  %434 = vst [vmem:[%s432] sm:$0x1] %v433
                  %v435 = vld [vmem:[%s431 + $0x6] sm:$0x1]
                  %436 = vst [vmem:[%s432 + $0x1] sm:$0x1] %v435
                  %v437 = vld [vmem:[%s431 + $0xc] sm:$0x1]
                  %438 = vst [vmem:[%s432 + $0x2] sm:$0x1] %v437
                  %v439 = vld [vmem:[%s431 + $0x12] sm:$0x1]
                  %440 = vst [vmem:[%s432 + $0x3] sm:$0x1] %v439
                  %v441 = vld [vmem:[%s431 + $0x18] sm:$0x1]
                  %442 = vst [vmem:[%s432 + $0x4] sm:$0x1] %v441
                  %v443 = vld [vmem:[%s431 + $0x1e] sm:$0x1]
                  %444 = vst [vmem:[%s432 + $0x5] sm:$0x1] %v443
                  %v445 = vld [vmem:[%s431 + $0x24] sm:$0x1]
                  %446 = vst [vmem:[%s432 + $0x6] sm:$0x1] %v445
                  %v447 = vld [vmem:[%s431 + $0x2a] sm:$0x1]
                  %448 = vst [vmem:[%s432 + $0x7] sm:$0x1] %v447
                $region137: #{parallel_attention_forward.4} parent=124 // loop_footer
                  %s430 = sadd.s32 1, %s426
                $region138: #{parallel_attention_forward.4} parent=124 // loop_footer_branch
                  %425 = sbr.rel target = $region134
                $region139: #{parallel_attention_forward.4} parent=124 // loop_exit
                  _
              $region125: #{parallel_attention_forward.4} parent=109 // pred_fallthru
                _
            $region110: #{parallel_attention_forward.4} parent=105 // pred_fallthru
              _
            // Predicated region
            $region111: #{parallel_attention_forward.4} parent=105 // pred_check
              _
            $region112: #{parallel_attention_forward.4} parent=105 // pred_check_branch
              %388 = sbr.rel (0) target = $region114
            $region113: #{parallel_attention_forward.4} parent=105 // pred_region
              loop: start=0, step=1, limit=1
              $region115: #{parallel_attention_forward.4} parent=113 // loop_pre_header
                _
              $region116: #{parallel_attention_forward.4} parent=113 // loop_header
                %s391 = sphi 0, %s395
                %p392 = scmp.ge.s32.totalorder %s391, 1
                %s396 = sphi %s382, %s382
                %s397 = sphi %s375, %s375
              $region117: #{parallel_attention_forward.4} parent=113 // loop_header_branch
                %394 = sbr.rel (%p392) target = $region121
              $region118: #{parallel_attention_forward.4} parent=113 // loop_body
                %v398 = vld [vmem:[%s396] sm:$0x1]
                %399 = vst [vmem:[%s397] sm:$0x1] %v398
                %v400 = vld [vmem:[%s396 + $0x6] sm:$0x1]
                %401 = vst [vmem:[%s397 + $0x1] sm:$0x1] %v400
                %v402 = vld [vmem:[%s396 + $0xc] sm:$0x1]
                %403 = vst [vmem:[%s397 + $0x2] sm:$0x1] %v402
                %v404 = vld [vmem:[%s396 + $0x12] sm:$0x1]
                %405 = vst [vmem:[%s397 + $0x3] sm:$0x1] %v404
                %v406 = vld [vmem:[%s396 + $0x18] sm:$0x1]
                %407 = vst [vmem:[%s397 + $0x4] sm:$0x1] %v406
                %v408 = vld [vmem:[%s396 + $0x1e] sm:$0x1]
                %409 = vst [vmem:[%s397 + $0x5] sm:$0x1] %v408
                %v410 = vld [vmem:[%s396 + $0x24] sm:$0x1]
                %411 = vst [vmem:[%s397 + $0x6] sm:$0x1] %v410
                %v412 = vld [vmem:[%s396 + $0x2a] sm:$0x1]
                %413 = vst [vmem:[%s397 + $0x7] sm:$0x1] %v412
              $region119: #{parallel_attention_forward.4} parent=113 // loop_footer
                %s395 = sadd.s32 1, %s391
              $region120: #{parallel_attention_forward.4} parent=113 // loop_footer_branch
                %390 = sbr.rel target = $region116
              $region121: #{parallel_attention_forward.4} parent=113 // loop_exit
                _
            $region114: #{parallel_attention_forward.4} parent=105 // pred_fallthru
              _
          $region106: #{parallel_attention_forward.4} parent=101 // pred_fallthru
            _
          %449 = vnop
        $region102: #{parallel_attention_forward.4} parent=15 // pred_fallthru
          _
        // Predicated region
        $region140: #{parallel_attention_forward.4} parent=15 // pred_check
          %p450 = pneg %p153
        $region141: #{parallel_attention_forward.4} parent=15 // pred_check_branch
          %452 = sbr.rel (%p450) target = $region143
        $region142: #{parallel_attention_forward.4} parent=15 // pred_region
          %p453 = scmp.lt.s32.totalorder %s20, 1
          %s454 = scalar_select %p453, %s20, 1
          %p455 = scmp.lt.s32.totalorder %s22, 0
          %s456 = scalar_select %p455, %s22, 0
          %p457 = scmp.lt.s32.totalorder %s23, 0
          %s458 = scalar_select %p457, %s23, 0
          %s459 = sadd.s32 %s458, %s456
          %s460 = sadd.s32 %s459, %s454
          %s461 = smul.addr %s460, 2
          %s462 = scalar_lea.vmem %s3, %s461
        $region143: #{parallel_attention_forward.4} parent=15 // pred_fallthru
          _
      $region16: #{parallel_attention_forward.4} parent=5 // pred_fallthru
        _
      %p463 = scmp.le.s32.totalorder 1, %s13
      %p464 = scmp.lt.s32.totalorder %s13, 3
      %p465 = pnand %p463, %p464
      %p466 = pneg %p465
      // Predicated region
      $region144: #{parallel_attention_forward.4} parent=5 // pred_check
        _
      $region145: #{parallel_attention_forward.4} parent=5 // pred_check_branch
        %468 = sbr.rel (%p465) target = $region147
      $region146: #{parallel_attention_forward.4} parent=5 // pred_region
        %s469 = ssub.s32 %s13, 1
        %s470 = sand.u32 %s56, 1
        %s471 = sand.u32 %s56, 1
        %s472 = smul.addr %s471, 8
        %s473 = scalar_lea.vmem [#allocation5], %s472
        // Predicated region
        $region148: #{parallel_attention_forward.4} parent=146 // pred_check
          %p474 = pneg %p69
        $region149: #{parallel_attention_forward.4} parent=146 // pred_check_branch
          %476 = sbr.rel (%p474) target = $region151
        $region150: #{parallel_attention_forward.4} parent=146 // pred_region
          _
        $region151: #{parallel_attention_forward.4} parent=146 // pred_fallthru
          _
        %s477 = sand.u32 %s86, 1
        %s478 = sand.u32 %s86, 1
        %s479 = smul.addr %s478, 8
        %s480 = scalar_lea.vmem [#allocation6], %s479
        // Predicated region
        $region152: #{parallel_attention_forward.4} parent=146 // pred_check
          %p481 = pneg %p99
        $region153: #{parallel_attention_forward.4} parent=146 // pred_check_branch
          %483 = sbr.rel (%p481) target = $region155
        $region154: #{parallel_attention_forward.4} parent=146 // pred_region
          _
        $region155: #{parallel_attention_forward.4} parent=146 // pred_fallthru
          _
        %s484 = sand.u32 %s116, 1
        %s485 = sand.u32 %s116, 1
        %s486 = smul.addr %s485, 8
        %s487 = scalar_lea.vmem [#allocation7], %s486
        // Predicated region
        $region156: #{parallel_attention_forward.4} parent=146 // pred_check
          %p488 = pneg %p129
        $region157: #{parallel_attention_forward.4} parent=146 // pred_check_branch
          %490 = sbr.rel (%p488) target = $region159
        $region158: #{parallel_attention_forward.4} parent=146 // pred_region
          _
        $region159: #{parallel_attention_forward.4} parent=146 // pred_fallthru
          _
        %s491 = sand.u32 %s56, 1
        %s492 = sand.u32 %s56, 1
        %s493 = smul.addr %s492, 8
        %s494 = scalar_lea.vmem [#allocation5], %s493
        %p495 = pneg %p69
        %p496 = pneg %p66
        %s497 = sand.u32 %s86, 1
        %s498 = sand.u32 %s86, 1
        %s499 = smul.addr %s498, 8
        %s500 = scalar_lea.vmem [#allocation6], %s499
        %p501 = pneg %p99
        %p502 = pneg %p96
        %s503 = sand.u32 %s116, 1
        %s504 = sand.u32 %s116, 1
        %s505 = smul.addr %s504, 8
        %s506 = scalar_lea.vmem [#allocation7], %s505
        %p507 = pneg %p129
        %p508 = pneg %p126
        %p509 = scmp.lt.s32.totalorder %s24, 1
        %s510 = scalar_select %p509, %s24, 1
        %p511 = scmp.lt.s32.totalorder %s26, 0
        %s512 = scalar_select %p511, %s26, 0
        %p513 = scmp.lt.s32.totalorder %s27, 0
        %s514 = scalar_select %p513, %s27, 0
        %s515 = sadd.s32 %s514, %s512
        %s516 = sadd.s32 %s515, %s510
        %s517 = smul.addr %s516, 2
        %s518 = scalar_lea.vmem %s3, %s517
        %p519 = pneg %p159
        %p520 = pneg %p156
        %p521 = pneg %p189
        %p522 = pneg %p186
        %s523 = sand.u32 %s176, 1
        %s524 = scalar_lea.sflag [#allocation9], %s523
        %s525 = sand.u32 %s176, 1
        %s526 = smul.addr %s525, 8
        %s527 = scalar_lea.vmem [#allocation8], %s526
        %s528 = smul.u32 8, %s26
        %s529 = smul.u32 8, %s27
        %s530 = smul.u32 8, %s27
        %p531 = scmp.lt.s32.totalorder %s24, 1
        %s532 = scalar_select %p531, %s24, 1
        %p533 = scmp.lt.s32.totalorder %s26, 0
        %s534 = scalar_select %p533, %s26, 0
        %p535 = scmp.lt.s32.totalorder %s27, 0
        %s536 = scalar_select %p535, %s27, 0
        %s537 = sadd.s32 %s536, %s534
        %s538 = sadd.s32 %s537, %s532
        %s539 = smul.addr %s538, 2
        %s540 = scalar_lea.vmem %s3, %s539
        %s541 = smul.u32 8, %s26
        %p544 = scmp.eq.s32.totalorder %s27, 0
        // Predicated region
        $region160: #{parallel_attention_forward.4} parent=146 // pred_check
          %p545 = pneg %p544
        $region161: #{parallel_attention_forward.4} parent=146 // pred_check_branch
          %547 = sbr.rel (%p545) target = $region163
        $region162: #{parallel_attention_forward.4} parent=146 // pred_region
          %vm548 = vcmask 31744
          %549 = vst.msk [vmem:[#allocation2] sm:$0xff] %vm548, -inf
          %550 = vst.msk [vmem:[#allocation3] sm:$0xff] %vm548, 0.0
          %vm551 = vcmask 261120
          %552 = vst.msk [vmem:[#allocation4] sm:$0xff] %vm551, 0.0
        $region163: #{parallel_attention_forward.4} parent=146 // pred_fallthru
          _
        %v553 = vld [vmem:[%s540] sm:$0x3]
        %vm554 = vnez %v553
        %v555 = vld [vmem:[%s473] sm:$0x1]
        %v556 = vld [vmem:[%s473 + $0x1] sm:$0x1]
        %v557 = vld [vmem:[%s473 + $0x2] sm:$0x1]
        %v558 = vld [vmem:[%s473 + $0x3] sm:$0x1]
        %v559 = vld [vmem:[%s473 + $0x4] sm:$0x1]
        %v560 = vld [vmem:[%s473 + $0x5] sm:$0x1]
        %v561 = vld [vmem:[%s473 + $0x6] sm:$0x1]
        %v562 = vld [vmem:[%s473 + $0x7] sm:$0x1]
        %v563 = vld [vmem:[%s480] sm:$0x1]
        %v564 = vld [vmem:[%s480 + $0x1] sm:$0x1]
        %v565 = vld [vmem:[%s480 + $0x2] sm:$0x1]
        %v566 = vld [vmem:[%s480 + $0x3] sm:$0x1]
        %v567 = vld [vmem:[%s480 + $0x4] sm:$0x1]
        %v568 = vld [vmem:[%s480 + $0x5] sm:$0x1]
        %v569 = vld [vmem:[%s480 + $0x6] sm:$0x1]
        %v570 = vld [vmem:[%s480 + $0x7] sm:$0x1]
        %v571 = vld [vmem:[%s487] sm:$0x1]
        %v572 = vld [vmem:[%s487 + $0x1] sm:$0x1]
        %v573 = vld [vmem:[%s487 + $0x2] sm:$0x1]
        %v574 = vld [vmem:[%s487 + $0x3] sm:$0x1]
        %v575 = vld [vmem:[%s487 + $0x4] sm:$0x1]
        %v576 = vld [vmem:[%s487 + $0x5] sm:$0x1]
        %v577 = vld [vmem:[%s487 + $0x6] sm:$0x1]
        %v578 = vld [vmem:[%s487 + $0x7] sm:$0x1]
        %v587 = vcombine.low %v555, %v556
        %v588 = vcombine.low %v557, %v558
        %v589 = vcombine.low %v559, %v560
        %v590 = vcombine.low %v561, %v562
        %v592 = vunpack.c.l.s4 1966171168
        %v593 = vunpack.c.0.s8 %v592
        %v594 = vlaneseq
        %v595 = vshrl.u32 %v594, 7
        %v596 = vsub.s32 %v593, %v595
        %v597 = vrot.slane %v587, %v596
        %v599 = vunpack.c.l.s4 1966171168
        %v600 = vunpack.c.0.s8 %v599
        %v601 = vlaneseq
        %v602 = vshrl.u32 %v601, 7
        %v603 = vsub.s32 %v600, %v602
        %v604 = vrot.slane %v588, %v603
        %v606 = vunpack.c.l.s4 1966171168
        %v607 = vunpack.c.0.s8 %v606
        %v608 = vlaneseq
        %v609 = vshrl.u32 %v608, 7
        %v610 = vsub.s32 %v607, %v609
        %v611 = vrot.slane %v589, %v610
        %v613 = vunpack.c.l.s4 1966171168
        %v614 = vunpack.c.0.s8 %v613
        %v615 = vlaneseq
        %v616 = vshrl.u32 %v615, 7
        %v617 = vsub.s32 %v614, %v616
        %v618 = vrot.slane %v590, %v617
        %v619 = vcombine.low %v597, %v604
        %v620 = vcombine.low %v611, %v618
        %v622 = vunpack.c.l.s4 1966171168
        %v623 = vunpack.c.0.s8 %v622
        %v624 = vlaneseq
        %v625 = vshrl.u32 %v624, 7
        %v626 = vsub.s32 %v623, %v625
        %v627 = vrot.slane %v619, %v626
        %v629 = vunpack.c.l.s4 1966171168
        %v630 = vunpack.c.0.s8 %v629
        %v631 = vlaneseq
        %v632 = vshrl.u32 %v631, 7
        %v633 = vsub.s32 %v630, %v632
        %v634 = vrot.slane %v620, %v633
        %v635 = vcombine.low %v627, %v634
        %v644 = vcombine.low %v563, %v564
        %v645 = vcombine.low %v565, %v566
        %v646 = vcombine.low %v567, %v568
        %v647 = vcombine.low %v569, %v570
        %v649 = vunpack.c.l.s4 1966171168
        %v650 = vunpack.c.0.s8 %v649
        %v651 = vlaneseq
        %v652 = vshrl.u32 %v651, 7
        %v653 = vsub.s32 %v650, %v652
        %v654 = vrot.slane %v644, %v653
        %v656 = vunpack.c.l.s4 1966171168
        %v657 = vunpack.c.0.s8 %v656
        %v658 = vlaneseq
        %v659 = vshrl.u32 %v658, 7
        %v660 = vsub.s32 %v657, %v659
        %v661 = vrot.slane %v645, %v660
        %v663 = vunpack.c.l.s4 1966171168
        %v664 = vunpack.c.0.s8 %v663
        %v665 = vlaneseq
        %v666 = vshrl.u32 %v665, 7
        %v667 = vsub.s32 %v664, %v666
        %v668 = vrot.slane %v646, %v667
        %v670 = vunpack.c.l.s4 1966171168
        %v671 = vunpack.c.0.s8 %v670
        %v672 = vlaneseq
        %v673 = vshrl.u32 %v672, 7
        %v674 = vsub.s32 %v671, %v673
        %v675 = vrot.slane %v647, %v674
        %v676 = vcombine.low %v654, %v661
        %v677 = vcombine.low %v668, %v675
        %v679 = vunpack.c.l.s4 1966171168
        %v680 = vunpack.c.0.s8 %v679
        %v681 = vlaneseq
        %v682 = vshrl.u32 %v681, 7
        %v683 = vsub.s32 %v680, %v682
        %v684 = vrot.slane %v676, %v683
        %v686 = vunpack.c.l.s4 1966171168
        %v687 = vunpack.c.0.s8 %v686
        %v688 = vlaneseq
        %v689 = vshrl.u32 %v688, 7
        %v690 = vsub.s32 %v687, %v689
        %v691 = vrot.slane %v677, %v690
        %v692 = vcombine.low %v684, %v691
        %vm693 = vcmask 64512
        %v694 = vsel %vm693, %v635, 0
        %v696 = vsel %vm693, %v692, 0
        %698 = vmatprep.subr.mxu0 0.0
        %699 = vmatpush1.xpose.msra.mxu0 %v696
        %700 = vmatprep.subr.mxu0 0.0
        %701 = vmatpush1.xpose.msra.mxu0 0.0
        %702 = vmatprep.subr.mxu0 0.0
        %703 = vmatpush1.xpose.msra.mxu0 0.0
        %704 = vmatprep.subr.mxu0 0.0
        %705 = vmatpush1.xpose.msra.mxu0 0.0
        %706 = vmatprep.subr.mxu0 0.0
        %707 = vmatpush1.xpose.msra.mxu0 0.0
        %708 = vmatprep.subr.mxu0 0.0
        %709 = vmatpush1.xpose.msra.mxu0 0.0
        %710 = vmatprep.subr.mxu0 0.0
        %711 = vmatpush1.xpose.msra.mxu0 0.0
        %712 = vmatprep.subr.mxu0 0.0
        %713 = vmatpush1.xpose.msra.mxu0 0.0
        %714 = vmatprep.subr.mxu0 0.0
        %715 = vmatpush1.xpose.msra.mxu0 0.0
        %716 = vmatprep.subr.mxu0 0.0
        %717 = vmatpush1.xpose.msra.mxu0 0.0
        %718 = vmatprep.subr.mxu0 0.0
        %719 = vmatpush1.xpose.msra.mxu0 0.0
        %720 = vmatprep.subr.mxu0 0.0
        %721 = vmatpush1.xpose.msra.mxu0 0.0
        %722 = vmatprep.subr.mxu0 0.0
        %723 = vmatpush1.xpose.msra.mxu0 0.0
        %724 = vmatprep.subr.mxu0 0.0
        %725 = vmatpush1.xpose.msra.mxu0 0.0
        %726 = vmatprep.subr.mxu0 0.0
        %727 = vmatpush1.xpose.msra.mxu0 0.0
        %728 = vmatprep.subr.mxu0 0.0
        %729 = vmatpush1.xpose.msra.mxu0 0.0
        %730 = vmatprep.subr.mxu0 0.0
        %731 = vmatpush1.xpose.msra.mxu0 0.0
        %732 = vmatprep.subr.mxu0 0.0
        %733 = vmatpush1.xpose.msra.mxu0 0.0
        %734 = vmatprep.subr.mxu0 0.0
        %735 = vmatpush1.xpose.msra.mxu0 0.0
        %736 = vmatprep.subr.mxu0 0.0
        %737 = vmatpush1.xpose.msra.mxu0 0.0
        %738 = vmatprep.subr.mxu0 0.0
        %739 = vmatpush1.xpose.msra.mxu0 0.0
        %740 = vmatprep.subr.mxu0 0.0
        %741 = vmatpush1.xpose.msra.mxu0 0.0
        %742 = vmatprep.subr.mxu0 0.0
        %743 = vmatpush1.xpose.msra.mxu0 0.0
        %744 = vmatprep.subr.mxu0 0.0
        %745 = vmatpush1.xpose.msra.mxu0 0.0
        %746 = vmatprep.subr.mxu0 0.0
        %747 = vmatpush1.xpose.msra.mxu0 0.0
        %748 = vmatprep.subr.mxu0 0.0
        %749 = vmatpush1.xpose.msra.mxu0 0.0
        %750 = vmatprep.subr.mxu0 0.0
        %751 = vmatpush1.xpose.msra.mxu0 0.0
        %752 = vmatprep.subr.mxu0 0.0
        %753 = vmatpush1.xpose.msra.mxu0 0.0
        %754 = vmatprep.subr.mxu0 0.0
        %755 = vmatpush1.xpose.msra.mxu0 0.0
        %756 = vmatprep.subr.mxu0 0.0
        %757 = vmatpush1.xpose.msra.mxu0 0.0
        %758 = vmatprep.subr.mxu0 0.0
        %759 = vmatpush1.xpose.msra.mxu0 0.0
        %760 = vmatprep.subr.mxu0 0.0
        %761 = vmatpush1.xpose.msra.mxu0 0.0
        %762 = vmatprep.mubr.f32.mxu0 0.0
        %763 = vmatmul.mubr.f32.gmra.mrb[0].mxu0 %v694
        %v764 = vpop.f32.mrb[0].mxu0
        %v765 = vadd.f32 0.0, %v764
        %v766 = vpop.f32.mrb[0].mxu0
        %767 = vdwg.mxu0
        %v768 = vsel %vm554, 16843009, 0
        %v769 = vunpack.c.0.s8 %v768
        %vm770 = vcmp.ne.s32.totalorder %v769, 0
        %v771 = vsel %vm770, -10000.0, %v765
        %v772 = vld [vmem:[#allocation2] sm:$0xff]
        %v773 = vsel %vm693, %v771, -inf
        %774 = vmax.xlane.f32.xlu0 %v773
        %v775 = vpop.xlane.xlu0 %774
        %v776 = vmax.f32 %v772, %v775
        %v777 = vsub.f32 %v772, %v776
        %v778 = vmul.f32 %v777, 1.442695
        %v779 = vpow.pop %v778
        %781 = vset.pattern.permute.xlu0 0
        %782 = vperm.xlu0 %781, %v776
        %v783 = vpop.permute.xlu0 %782
        %v785 = vsub.f32 %v771, %v783
        %v786 = vmul.f32 %v785, 1.442695
        %v787 = vpow.pop %v786
        %v788 = vld [vmem:[#allocation3] sm:$0xff]
        %v789 = vmul.f32 %v779, %v788
        %v790 = vsel %vm693, %v787, 0.0
        %791 = vadd.xlane.f32.xlu0 %v790
        %v792 = vpop.xlane.xlu0 %791
        %v793 = vadd.f32 %v789, %v792
        %vm794 = vcmask 7168
        %795 = vst.msk [vmem:[#allocation3] sm:$0xff] %vm794, %v793
        %v796 = vld [vmem:[#allocation4] sm:$0xff]
        %798 = vset.pattern.permute.xlu0 0
        %799 = vperm.xlu0 %798, %v779
        %v800 = vpop.permute.xlu0 %799
        %v802 = vmul.f32 %v800, %v796
        %v811 = vcombine.low %v571, %v572
        %v812 = vcombine.low %v573, %v574
        %v813 = vcombine.low %v575, %v576
        %v814 = vcombine.low %v577, %v578
        %v816 = vunpack.c.l.s4 1966171168
        %v817 = vunpack.c.0.s8 %v816
        %v818 = vlaneseq
        %v819 = vshrl.u32 %v818, 7
        %v820 = vsub.s32 %v817, %v819
        %v821 = vrot.slane %v811, %v820
        %v823 = vunpack.c.l.s4 1966171168
        %v824 = vunpack.c.0.s8 %v823
        %v825 = vlaneseq
        %v826 = vshrl.u32 %v825, 7
        %v827 = vsub.s32 %v824, %v826
        %v828 = vrot.slane %v812, %v827
        %v830 = vunpack.c.l.s4 1966171168
        %v831 = vunpack.c.0.s8 %v830
        %v832 = vlaneseq
        %v833 = vshrl.u32 %v832, 7
        %v834 = vsub.s32 %v831, %v833
        %v835 = vrot.slane %v813, %v834
        %v837 = vunpack.c.l.s4 1966171168
        %v838 = vunpack.c.0.s8 %v837
        %v839 = vlaneseq
        %v840 = vshrl.u32 %v839, 7
        %v841 = vsub.s32 %v838, %v840
        %v842 = vrot.slane %v814, %v841
        %v843 = vcombine.low %v821, %v828
        %v844 = vcombine.low %v835, %v842
        %v846 = vunpack.c.l.s4 1966171168
        %v847 = vunpack.c.0.s8 %v846
        %v848 = vlaneseq
        %v849 = vshrl.u32 %v848, 7
        %v850 = vsub.s32 %v847, %v849
        %v851 = vrot.slane %v843, %v850
        %v853 = vunpack.c.l.s4 1966171168
        %v854 = vunpack.c.0.s8 %v853
        %v855 = vlaneseq
        %v856 = vshrl.u32 %v855, 7
        %v857 = vsub.s32 %v854, %v856
        %v858 = vrot.slane %v844, %v857
        %v859 = vcombine.low %v851, %v858
        %v862 = vsel %vm693, %v787, 0
        %864 = vmatprep.subr.mxu0 0.0
        %865 = vmatpush1.msra.mxu0 %v859
        %866 = vmatprep.subr.mxu0 0.0
        %867 = vmatpush1.msra.mxu0 0.0
        %868 = vmatprep.subr.mxu0 0.0
        %869 = vmatpush1.msra.mxu0 0.0
        %870 = vmatprep.subr.mxu0 0.0
        %871 = vmatpush1.msra.mxu0 0.0
        %872 = vmatprep.subr.mxu0 0.0
        %873 = vmatpush1.msra.mxu0 0.0
        %874 = vmatprep.subr.mxu0 0.0
        %875 = vmatpush1.msra.mxu0 0.0
        %876 = vmatprep.subr.mxu0 0.0
        %877 = vmatpush1.msra.mxu0 0.0
        %878 = vmatprep.subr.mxu0 0.0
        %879 = vmatpush1.msra.mxu0 0.0
        %880 = vmatprep.subr.mxu0 0.0
        %881 = vmatpush1.msra.mxu0 0.0
        %882 = vmatprep.subr.mxu0 0.0
        %883 = vmatpush1.msra.mxu0 0.0
        %884 = vmatprep.subr.mxu0 0.0
        %885 = vmatpush1.msra.mxu0 0.0
        %886 = vmatprep.subr.mxu0 0.0
        %887 = vmatpush1.msra.mxu0 0.0
        %888 = vmatprep.subr.mxu0 0.0
        %889 = vmatpush1.msra.mxu0 0.0
        %890 = vmatprep.subr.mxu0 0.0
        %891 = vmatpush1.msra.mxu0 0.0
        %892 = vmatprep.subr.mxu0 0.0
        %893 = vmatpush1.msra.mxu0 0.0
        %894 = vmatprep.subr.mxu0 0.0
        %895 = vmatpush1.msra.mxu0 0.0
        %896 = vmatprep.subr.mxu0 0.0
        %897 = vmatpush1.msra.mxu0 0.0
        %898 = vmatprep.subr.mxu0 0.0
        %899 = vmatpush1.msra.mxu0 0.0
        %900 = vmatprep.subr.mxu0 0.0
        %901 = vmatpush1.msra.mxu0 0.0
        %902 = vmatprep.subr.mxu0 0.0
        %903 = vmatpush1.msra.mxu0 0.0
        %904 = vmatprep.subr.mxu0 0.0
        %905 = vmatpush1.msra.mxu0 0.0
        %906 = vmatprep.subr.mxu0 0.0
        %907 = vmatpush1.msra.mxu0 0.0
        %908 = vmatprep.subr.mxu0 0.0
        %909 = vmatpush1.msra.mxu0 0.0
        %910 = vmatprep.subr.mxu0 0.0
        %911 = vmatpush1.msra.mxu0 0.0
        %912 = vmatprep.subr.mxu0 0.0
        %913 = vmatpush1.msra.mxu0 0.0
        %914 = vmatprep.subr.mxu0 0.0
        %915 = vmatpush1.msra.mxu0 0.0
        %916 = vmatprep.subr.mxu0 0.0
        %917 = vmatpush1.msra.mxu0 0.0
        %918 = vmatprep.subr.mxu0 0.0
        %919 = vmatpush1.msra.mxu0 0.0
        %920 = vmatprep.subr.mxu0 0.0
        %921 = vmatpush1.msra.mxu0 0.0
        %922 = vmatprep.subr.mxu0 0.0
        %923 = vmatpush1.msra.mxu0 0.0
        %924 = vmatprep.subr.mxu0 0.0
        %925 = vmatpush1.msra.mxu0 0.0
        %926 = vmatprep.subr.mxu0 0.0
        %927 = vmatpush1.msra.mxu0 0.0
        %928 = vmatprep.mubr.f32.mxu0 0.0
        %929 = vmatmul.mubr.f32.gmra.mrb[0].mxu0 %v862
        %v930 = vpop.f32.mrb[0].mxu0
        %v931 = vadd.f32 0.0, %v930
        %v932 = vpop.f32.mrb[0].mxu0
        %933 = vdwg.mxu0
        %v934 = vadd.f32 %v802, %v931
        %935 = vst.msk [vmem:[#allocation4] sm:$0xff] %vm693, %v934
        %936 = vst.msk [vmem:[#allocation2] sm:$0xff] %vm794, %v776
        %v937 = vld [vmem:[%s473] sm:$0x1]
        %v938 = vld [vmem:[%s473 + $0x1] sm:$0x1]
        %v939 = vld [vmem:[%s473 + $0x2] sm:$0x1]
        %v940 = vld [vmem:[%s473 + $0x3] sm:$0x1]
        %v941 = vld [vmem:[%s473 + $0x4] sm:$0x1]
        %v942 = vld [vmem:[%s473 + $0x5] sm:$0x1]
        %v943 = vld [vmem:[%s473 + $0x6] sm:$0x1]
        %v944 = vld [vmem:[%s473 + $0x7] sm:$0x1]
        %v945 = vld [vmem:[%s480] sm:$0x1]
        %v946 = vld [vmem:[%s480 + $0x1] sm:$0x1]
        %v947 = vld [vmem:[%s480 + $0x2] sm:$0x1]
        %v948 = vld [vmem:[%s480 + $0x3] sm:$0x1]
        %v949 = vld [vmem:[%s480 + $0x4] sm:$0x1]
        %v950 = vld [vmem:[%s480 + $0x5] sm:$0x1]
        %v951 = vld [vmem:[%s480 + $0x6] sm:$0x1]
        %v952 = vld [vmem:[%s480 + $0x7] sm:$0x1]
        %v953 = vld [vmem:[%s487] sm:$0x1]
        %v954 = vld [vmem:[%s487 + $0x1] sm:$0x1]
        %v955 = vld [vmem:[%s487 + $0x2] sm:$0x1]
        %v956 = vld [vmem:[%s487 + $0x3] sm:$0x1]
        %v957 = vld [vmem:[%s487 + $0x4] sm:$0x1]
        %v958 = vld [vmem:[%s487 + $0x5] sm:$0x1]
        %v959 = vld [vmem:[%s487 + $0x6] sm:$0x1]
        %v960 = vld [vmem:[%s487 + $0x7] sm:$0x1]
        %v969 = vcombine.low %v937, %v938
        %v970 = vcombine.low %v939, %v940
        %v971 = vcombine.low %v941, %v942
        %v972 = vcombine.low %v943, %v944
        %v974 = vunpack.c.l.s4 1966171168
        %v975 = vunpack.c.0.s8 %v974
        %v976 = vlaneseq
        %v977 = vshrl.u32 %v976, 7
        %v978 = vsub.s32 %v975, %v977
        %v979 = vrot.slane %v969, %v978
        %v981 = vunpack.c.l.s4 1966171168
        %v982 = vunpack.c.0.s8 %v981
        %v983 = vlaneseq
        %v984 = vshrl.u32 %v983, 7
        %v985 = vsub.s32 %v982, %v984
        %v986 = vrot.slane %v970, %v985
        %v988 = vunpack.c.l.s4 1966171168
        %v989 = vunpack.c.0.s8 %v988
        %v990 = vlaneseq
        %v991 = vshrl.u32 %v990, 7
        %v992 = vsub.s32 %v989, %v991
        %v993 = vrot.slane %v971, %v992
        %v995 = vunpack.c.l.s4 1966171168
        %v996 = vunpack.c.0.s8 %v995
        %v997 = vlaneseq
        %v998 = vshrl.u32 %v997, 7
        %v999 = vsub.s32 %v996, %v998
        %v1000 = vrot.slane %v972, %v999
        %v1001 = vcombine.low %v979, %v986
        %v1002 = vcombine.low %v993, %v1000
        %v1004 = vunpack.c.l.s4 1966171168
        %v1005 = vunpack.c.0.s8 %v1004
        %v1006 = vlaneseq
        %v1007 = vshrl.u32 %v1006, 7
        %v1008 = vsub.s32 %v1005, %v1007
        %v1009 = vrot.slane %v1001, %v1008
        %v1011 = vunpack.c.l.s4 1966171168
        %v1012 = vunpack.c.0.s8 %v1011
        %v1013 = vlaneseq
        %v1014 = vshrl.u32 %v1013, 7
        %v1015 = vsub.s32 %v1012, %v1014
        %v1016 = vrot.slane %v1002, %v1015
        %v1017 = vcombine.low %v1009, %v1016
        %1018 = vrot.lane.b32.xlu0 %v1017, 120
        %v1019 = vpop.permute.xlu0 %1018
        %v1028 = vcombine.low %v945, %v946
        %v1029 = vcombine.low %v947, %v948
        %v1030 = vcombine.low %v949, %v950
        %v1031 = vcombine.low %v951, %v952
        %v1033 = vunpack.c.l.s4 1966171168
        %v1034 = vunpack.c.0.s8 %v1033
        %v1035 = vlaneseq
        %v1036 = vshrl.u32 %v1035, 7
        %v1037 = vsub.s32 %v1034, %v1036
        %v1038 = vrot.slane %v1028, %v1037
        %v1040 = vunpack.c.l.s4 1966171168
        %v1041 = vunpack.c.0.s8 %v1040
        %v1042 = vlaneseq
        %v1043 = vshrl.u32 %v1042, 7
        %v1044 = vsub.s32 %v1041, %v1043
        %v1045 = vrot.slane %v1029, %v1044
        %v1047 = vunpack.c.l.s4 1966171168
        %v1048 = vunpack.c.0.s8 %v1047
        %v1049 = vlaneseq
        %v1050 = vshrl.u32 %v1049, 7
        %v1051 = vsub.s32 %v1048, %v1050
        %v1052 = vrot.slane %v1030, %v1051
        %v1054 = vunpack.c.l.s4 1966171168
        %v1055 = vunpack.c.0.s8 %v1054
        %v1056 = vlaneseq
        %v1057 = vshrl.u32 %v1056, 7
        %v1058 = vsub.s32 %v1055, %v1057
        %v1059 = vrot.slane %v1031, %v1058
        %v1060 = vcombine.low %v1038, %v1045
        %v1061 = vcombine.low %v1052, %v1059
        %v1063 = vunpack.c.l.s4 1966171168
        %v1064 = vunpack.c.0.s8 %v1063
        %v1065 = vlaneseq
        %v1066 = vshrl.u32 %v1065, 7
        %v1067 = vsub.s32 %v1064, %v1066
        %v1068 = vrot.slane %v1060, %v1067
        %v1070 = vunpack.c.l.s4 1966171168
        %v1071 = vunpack.c.0.s8 %v1070
        %v1072 = vlaneseq
        %v1073 = vshrl.u32 %v1072, 7
        %v1074 = vsub.s32 %v1071, %v1073
        %v1075 = vrot.slane %v1061, %v1074
        %v1076 = vcombine.low %v1068, %v1075
        %1077 = vrot.lane.b32.xlu0 %v1076, 120
        %v1078 = vpop.permute.xlu0 %1077
        %v1079 = vsel %vm693, %v1019, 0
        %v1081 = vsel %vm693, %v1078, 0
        %1083 = vmatprep.subr.mxu0 0.0
        %1084 = vmatpush1.xpose.msra.mxu0 %v1081
        %1085 = vmatprep.subr.mxu0 0.0
        %1086 = vmatpush1.xpose.msra.mxu0 0.0
        %1087 = vmatprep.subr.mxu0 0.0
        %1088 = vmatpush1.xpose.msra.mxu0 0.0
        %1089 = vmatprep.subr.mxu0 0.0
        %1090 = vmatpush1.xpose.msra.mxu0 0.0
        %1091 = vmatprep.subr.mxu0 0.0
        %1092 = vmatpush1.xpose.msra.mxu0 0.0
        %1093 = vmatprep.subr.mxu0 0.0
        %1094 = vmatpush1.xpose.msra.mxu0 0.0
        %1095 = vmatprep.subr.mxu0 0.0
        %1096 = vmatpush1.xpose.msra.mxu0 0.0
        %1097 = vmatprep.subr.mxu0 0.0
        %1098 = vmatpush1.xpose.msra.mxu0 0.0
        %1099 = vmatprep.subr.mxu0 0.0
        %1100 = vmatpush1.xpose.msra.mxu0 0.0
        %1101 = vmatprep.subr.mxu0 0.0
        %1102 = vmatpush1.xpose.msra.mxu0 0.0
        %1103 = vmatprep.subr.mxu0 0.0
        %1104 = vmatpush1.xpose.msra.mxu0 0.0
        %1105 = vmatprep.subr.mxu0 0.0
        %1106 = vmatpush1.xpose.msra.mxu0 0.0
        %1107 = vmatprep.subr.mxu0 0.0
        %1108 = vmatpush1.xpose.msra.mxu0 0.0
        %1109 = vmatprep.subr.mxu0 0.0
        %1110 = vmatpush1.xpose.msra.mxu0 0.0
        %1111 = vmatprep.subr.mxu0 0.0
        %1112 = vmatpush1.xpose.msra.mxu0 0.0
        %1113 = vmatprep.subr.mxu0 0.0
        %1114 = vmatpush1.xpose.msra.mxu0 0.0
        %1115 = vmatprep.subr.mxu0 0.0
        %1116 = vmatpush1.xpose.msra.mxu0 0.0
        %1117 = vmatprep.subr.mxu0 0.0
        %1118 = vmatpush1.xpose.msra.mxu0 0.0
        %1119 = vmatprep.subr.mxu0 0.0
        %1120 = vmatpush1.xpose.msra.mxu0 0.0
        %1121 = vmatprep.subr.mxu0 0.0
        %1122 = vmatpush1.xpose.msra.mxu0 0.0
        %1123 = vmatprep.subr.mxu0 0.0
        %1124 = vmatpush1.xpose.msra.mxu0 0.0
        %1125 = vmatprep.subr.mxu0 0.0
        %1126 = vmatpush1.xpose.msra.mxu0 0.0
        %1127 = vmatprep.subr.mxu0 0.0
        %1128 = vmatpush1.xpose.msra.mxu0 0.0
        %1129 = vmatprep.subr.mxu0 0.0
        %1130 = vmatpush1.xpose.msra.mxu0 0.0
        %1131 = vmatprep.subr.mxu0 0.0
        %1132 = vmatpush1.xpose.msra.mxu0 0.0
        %1133 = vmatprep.subr.mxu0 0.0
        %1134 = vmatpush1.xpose.msra.mxu0 0.0
        %1135 = vmatprep.subr.mxu0 0.0
        %1136 = vmatpush1.xpose.msra.mxu0 0.0
        %1137 = vmatprep.subr.mxu0 0.0
        %1138 = vmatpush1.xpose.msra.mxu0 0.0
        %1139 = vmatprep.subr.mxu0 0.0
        %1140 = vmatpush1.xpose.msra.mxu0 0.0
        %1141 = vmatprep.subr.mxu0 0.0
        %1142 = vmatpush1.xpose.msra.mxu0 0.0
        %1143 = vmatprep.subr.mxu0 0.0
        %1144 = vmatpush1.xpose.msra.mxu0 0.0
        %1145 = vmatprep.subr.mxu0 0.0
        %1146 = vmatpush1.xpose.msra.mxu0 0.0
        %1147 = vmatprep.mubr.f32.mxu0 0.0
        %1148 = vmatmul.mubr.f32.gmra.mrb[0].mxu0 %v1079
        %v1149 = vpop.f32.mrb[0].mxu0
        %v1150 = vadd.f32 0.0, %v1149
        %v1151 = vpop.f32.mrb[0].mxu0
        %1152 = vdwg.mxu0
        %v1153 = vsel %vm770, -10000.0, %v1150
        %v1154 = vld [vmem:[#allocation2] sm:$0xff]
        %v1155 = vsel %vm693, %v1153, -inf
        %1156 = vmax.xlane.f32.xlu0 %v1155
        %v1157 = vpop.xlane.xlu0 %1156
        %v1158 = vmax.f32 %v1154, %v1157
        %v1159 = vsub.f32 %v1154, %v1158
        %v1160 = vmul.f32 %v1159, 1.442695
        %v1161 = vpow.pop %v1160
        %1163 = vset.pattern.permute.xlu0 1
        %1164 = vperm.xlu0 %1163, %v1158
        %v1165 = vpop.permute.xlu0 %1164
        %v1167 = vsub.f32 %v1153, %v1165
        %v1168 = vmul.f32 %v1167, 1.442695
        %v1169 = vpow.pop %v1168
        %v1170 = vld [vmem:[#allocation3] sm:$0xff]
        %v1171 = vmul.f32 %v1161, %v1170
        %v1172 = vsel %vm693, %v1169, 0.0
        %1173 = vadd.xlane.f32.xlu0 %v1172
        %v1174 = vpop.xlane.xlu0 %1173
        %v1175 = vadd.f32 %v1171, %v1174
        %vm1176 = vcmask 15368
        %1177 = vst.msk [vmem:[#allocation3] sm:$0xff] %vm1176, %v1175
        %v1178 = vld [vmem:[#allocation4] sm:$0xff]
        %1180 = vset.pattern.permute.xlu0 1
        %1181 = vperm.xlu0 %1180, %v1161
        %v1182 = vpop.permute.xlu0 %1181
        %v1184 = vmul.f32 %v1182, %v1178
        %v1193 = vcombine.low %v953, %v954
        %v1194 = vcombine.low %v955, %v956
        %v1195 = vcombine.low %v957, %v958
        %v1196 = vcombine.low %v959, %v960
        %v1198 = vunpack.c.l.s4 1966171168
        %v1199 = vunpack.c.0.s8 %v1198
        %v1200 = vlaneseq
        %v1201 = vshrl.u32 %v1200, 7
        %v1202 = vsub.s32 %v1199, %v1201
        %v1203 = vrot.slane %v1193, %v1202
        %v1205 = vunpack.c.l.s4 1966171168
        %v1206 = vunpack.c.0.s8 %v1205
        %v1207 = vlaneseq
        %v1208 = vshrl.u32 %v1207, 7
        %v1209 = vsub.s32 %v1206, %v1208
        %v1210 = vrot.slane %v1194, %v1209
        %v1212 = vunpack.c.l.s4 1966171168
        %v1213 = vunpack.c.0.s8 %v1212
        %v1214 = vlaneseq
        %v1215 = vshrl.u32 %v1214, 7
        %v1216 = vsub.s32 %v1213, %v1215
        %v1217 = vrot.slane %v1195, %v1216
        %v1219 = vunpack.c.l.s4 1966171168
        %v1220 = vunpack.c.0.s8 %v1219
        %v1221 = vlaneseq
        %v1222 = vshrl.u32 %v1221, 7
        %v1223 = vsub.s32 %v1220, %v1222
        %v1224 = vrot.slane %v1196, %v1223
        %v1225 = vcombine.low %v1203, %v1210
        %v1226 = vcombine.low %v1217, %v1224
        %v1228 = vunpack.c.l.s4 1966171168
        %v1229 = vunpack.c.0.s8 %v1228
        %v1230 = vlaneseq
        %v1231 = vshrl.u32 %v1230, 7
        %v1232 = vsub.s32 %v1229, %v1231
        %v1233 = vrot.slane %v1225, %v1232
        %v1235 = vunpack.c.l.s4 1966171168
        %v1236 = vunpack.c.0.s8 %v1235
        %v1237 = vlaneseq
        %v1238 = vshrl.u32 %v1237, 7
        %v1239 = vsub.s32 %v1236, %v1238
        %v1240 = vrot.slane %v1226, %v1239
        %v1241 = vcombine.low %v1233, %v1240
        %1242 = vrot.lane.b32.xlu0 %v1241, 120
        %v1243 = vpop.permute.xlu0 %1242
        %v1246 = vsel %vm693, %v1169, 0
        %1248 = vmatprep.subr.mxu0 0.0
        %1249 = vmatpush1.msra.mxu0 %v1243
        %1250 = vmatprep.subr.mxu0 0.0
        %1251 = vmatpush1.msra.mxu0 0.0
        %1252 = vmatprep.subr.mxu0 0.0
        %1253 = vmatpush1.msra.mxu0 0.0
        %1254 = vmatprep.subr.mxu0 0.0
        %1255 = vmatpush1.msra.mxu0 0.0
        %1256 = vmatprep.subr.mxu0 0.0
        %1257 = vmatpush1.msra.mxu0 0.0
        %1258 = vmatprep.subr.mxu0 0.0
        %1259 = vmatpush1.msra.mxu0 0.0
        %1260 = vmatprep.subr.mxu0 0.0
        %1261 = vmatpush1.msra.mxu0 0.0
        %1262 = vmatprep.subr.mxu0 0.0
        %1263 = vmatpush1.msra.mxu0 0.0
        %1264 = vmatprep.subr.mxu0 0.0
        %1265 = vmatpush1.msra.mxu0 0.0
        %1266 = vmatprep.subr.mxu0 0.0
        %1267 = vmatpush1.msra.mxu0 0.0
        %1268 = vmatprep.subr.mxu0 0.0
        %1269 = vmatpush1.msra.mxu0 0.0
        %1270 = vmatprep.subr.mxu0 0.0
        %1271 = vmatpush1.msra.mxu0 0.0
        %1272 = vmatprep.subr.mxu0 0.0
        %1273 = vmatpush1.msra.mxu0 0.0
        %1274 = vmatprep.subr.mxu0 0.0
        %1275 = vmatpush1.msra.mxu0 0.0
        %1276 = vmatprep.subr.mxu0 0.0
        %1277 = vmatpush1.msra.mxu0 0.0
        %1278 = vmatprep.subr.mxu0 0.0
        %1279 = vmatpush1.msra.mxu0 0.0
        %1280 = vmatprep.subr.mxu0 0.0
        %1281 = vmatpush1.msra.mxu0 0.0
        %1282 = vmatprep.subr.mxu0 0.0
        %1283 = vmatpush1.msra.mxu0 0.0
        %1284 = vmatprep.subr.mxu0 0.0
        %1285 = vmatpush1.msra.mxu0 0.0
        %1286 = vmatprep.subr.mxu0 0.0
        %1287 = vmatpush1.msra.mxu0 0.0
        %1288 = vmatprep.subr.mxu0 0.0
        %1289 = vmatpush1.msra.mxu0 0.0
        %1290 = vmatprep.subr.mxu0 0.0
        %1291 = vmatpush1.msra.mxu0 0.0
        %1292 = vmatprep.subr.mxu0 0.0
        %1293 = vmatpush1.msra.mxu0 0.0
        %1294 = vmatprep.subr.mxu0 0.0
        %1295 = vmatpush1.msra.mxu0 0.0
        %1296 = vmatprep.subr.mxu0 0.0
        %1297 = vmatpush1.msra.mxu0 0.0
        %1298 = vmatprep.subr.mxu0 0.0
        %1299 = vmatpush1.msra.mxu0 0.0
        %1300 = vmatprep.subr.mxu0 0.0
        %1301 = vmatpush1.msra.mxu0 0.0
        %1302 = vmatprep.subr.mxu0 0.0
        %1303 = vmatpush1.msra.mxu0 0.0
        %1304 = vmatprep.subr.mxu0 0.0
        %1305 = vmatpush1.msra.mxu0 0.0
        %1306 = vmatprep.subr.mxu0 0.0
        %1307 = vmatpush1.msra.mxu0 0.0
        %1308 = vmatprep.subr.mxu0 0.0
        %1309 = vmatpush1.msra.mxu0 0.0
        %1310 = vmatprep.subr.mxu0 0.0
        %1311 = vmatpush1.msra.mxu0 0.0
        %1312 = vmatprep.mubr.f32.mxu0 0.0
        %1313 = vmatmul.mubr.f32.gmra.mrb[0].mxu0 %v1246
        %v1314 = vpop.f32.mrb[0].mxu0
        %v1315 = vadd.f32 0.0, %v1314
        %v1316 = vpop.f32.mrb[0].mxu0
        %1317 = vdwg.mxu0
        %1319 = vrot.lane.b32.xlu0 %v1315, 8
        %v1320 = vpop.permute.xlu0 %1319
        %v1322 = vadd.f32 %v1184, %v1320
        %vm1323 = vcmask 130112
        %1324 = vst.msk [vmem:[#allocation4] sm:$0xff] %vm1323, %v1322
        %1325 = vst.msk [vmem:[#allocation2] sm:$0xff] %vm1176, %v1158
        %v1326 = vld [vmem:[%s473] sm:$0x1]
        %v1327 = vld [vmem:[%s473 + $0x1] sm:$0x1]
        %v1328 = vld [vmem:[%s473 + $0x2] sm:$0x1]
        %v1329 = vld [vmem:[%s473 + $0x3] sm:$0x1]
        %v1330 = vld [vmem:[%s473 + $0x4] sm:$0x1]
        %v1331 = vld [vmem:[%s473 + $0x5] sm:$0x1]
        %v1332 = vld [vmem:[%s473 + $0x6] sm:$0x1]
        %v1333 = vld [vmem:[%s473 + $0x7] sm:$0x1]
        %v1334 = vld [vmem:[%s480] sm:$0x1]
        %v1335 = vld [vmem:[%s480 + $0x1] sm:$0x1]
        %v1336 = vld [vmem:[%s480 + $0x2] sm:$0x1]
        %v1337 = vld [vmem:[%s480 + $0x3] sm:$0x1]
        %v1338 = vld [vmem:[%s480 + $0x4] sm:$0x1]
        %v1339 = vld [vmem:[%s480 + $0x5] sm:$0x1]
        %v1340 = vld [vmem:[%s480 + $0x6] sm:$0x1]
        %v1341 = vld [vmem:[%s480 + $0x7] sm:$0x1]
        %v1342 = vld [vmem:[%s487] sm:$0x1]
        %v1343 = vld [vmem:[%s487 + $0x1] sm:$0x1]
        %v1344 = vld [vmem:[%s487 + $0x2] sm:$0x1]
        %v1345 = vld [vmem:[%s487 + $0x3] sm:$0x1]
        %v1346 = vld [vmem:[%s487 + $0x4] sm:$0x1]
        %v1347 = vld [vmem:[%s487 + $0x5] sm:$0x1]
        %v1348 = vld [vmem:[%s487 + $0x6] sm:$0x1]
        %v1349 = vld [vmem:[%s487 + $0x7] sm:$0x1]
        %v1358 = vcombine.low %v1326, %v1327
        %v1359 = vcombine.low %v1328, %v1329
        %v1360 = vcombine.low %v1330, %v1331
        %v1361 = vcombine.low %v1332, %v1333
        %v1363 = vunpack.c.l.s4 1966171168
        %v1364 = vunpack.c.0.s8 %v1363
        %v1365 = vlaneseq
        %v1366 = vshrl.u32 %v1365, 7
        %v1367 = vsub.s32 %v1364, %v1366
        %v1368 = vrot.slane %v1358, %v1367
        %v1370 = vunpack.c.l.s4 1966171168
        %v1371 = vunpack.c.0.s8 %v1370
        %v1372 = vlaneseq
        %v1373 = vshrl.u32 %v1372, 7
        %v1374 = vsub.s32 %v1371, %v1373
        %v1375 = vrot.slane %v1359, %v1374
        %v1377 = vunpack.c.l.s4 1966171168
        %v1378 = vunpack.c.0.s8 %v1377
        %v1379 = vlaneseq
        %v1380 = vshrl.u32 %v1379, 7
        %v1381 = vsub.s32 %v1378, %v1380
        %v1382 = vrot.slane %v1360, %v1381
        %v1384 = vunpack.c.l.s4 1966171168
        %v1385 = vunpack.c.0.s8 %v1384
        %v1386 = vlaneseq
        %v1387 = vshrl.u32 %v1386, 7
        %v1388 = vsub.s32 %v1385, %v1387
        %v1389 = vrot.slane %v1361, %v1388
        %v1390 = vcombine.low %v1368, %v1375
        %v1391 = vcombine.low %v1382, %v1389
        %v1393 = vunpack.c.l.s4 1966171168
        %v1394 = vunpack.c.0.s8 %v1393
        %v1395 = vlaneseq
        %v1396 = vshrl.u32 %v1395, 7
        %v1397 = vsub.s32 %v1394, %v1396
        %v1398 = vrot.slane %v1390, %v1397
        %v1400 = vunpack.c.l.s4 1966171168
        %v1401 = vunpack.c.0.s8 %v1400
        %v1402 = vlaneseq
        %v1403 = vshrl.u32 %v1402, 7
        %v1404 = vsub.s32 %v1401, %v1403
        %v1405 = vrot.slane %v1391, %v1404
        %v1406 = vcombine.low %v1398, %v1405
        %1407 = vrot.lane.b32.xlu0 %v1406, 112
        %v1408 = vpop.permute.xlu0 %1407
        %v1417 = vcombine.low %v1334, %v1335
        %v1418 = vcombine.low %v1336, %v1337
        %v1419 = vcombine.low %v1338, %v1339
        %v1420 = vcombine.low %v1340, %v1341
        %v1422 = vunpack.c.l.s4 1966171168
        %v1423 = vunpack.c.0.s8 %v1422
        %v1424 = vlaneseq
        %v1425 = vshrl.u32 %v1424, 7
        %v1426 = vsub.s32 %v1423, %v1425
        %v1427 = vrot.slane %v1417, %v1426
        %v1429 = vunpack.c.l.s4 1966171168
        %v1430 = vunpack.c.0.s8 %v1429
        %v1431 = vlaneseq
        %v1432 = vshrl.u32 %v1431, 7
        %v1433 = vsub.s32 %v1430, %v1432
        %v1434 = vrot.slane %v1418, %v1433
        %v1436 = vunpack.c.l.s4 1966171168
        %v1437 = vunpack.c.0.s8 %v1436
        %v1438 = vlaneseq
        %v1439 = vshrl.u32 %v1438, 7
        %v1440 = vsub.s32 %v1437, %v1439
        %v1441 = vrot.slane %v1419, %v1440
        %v1443 = vunpack.c.l.s4 1966171168
        %v1444 = vunpack.c.0.s8 %v1443
        %v1445 = vlaneseq
        %v1446 = vshrl.u32 %v1445, 7
        %v1447 = vsub.s32 %v1444, %v1446
        %v1448 = vrot.slane %v1420, %v1447
        %v1449 = vcombine.low %v1427, %v1434
        %v1450 = vcombine.low %v1441, %v1448
        %v1452 = vunpack.c.l.s4 1966171168
        %v1453 = vunpack.c.0.s8 %v1452
        %v1454 = vlaneseq
        %v1455 = vshrl.u32 %v1454, 7
        %v1456 = vsub.s32 %v1453, %v1455
        %v1457 = vrot.slane %v1449, %v1456
        %v1459 = vunpack.c.l.s4 1966171168
        %v1460 = vunpack.c.0.s8 %v1459
        %v1461 = vlaneseq
        %v1462 = vshrl.u32 %v1461, 7
        %v1463 = vsub.s32 %v1460, %v1462
        %v1464 = vrot.slane %v1450, %v1463
        %v1465 = vcombine.low %v1457, %v1464
        %1466 = vrot.lane.b32.xlu0 %v1465, 112
        %v1467 = vpop.permute.xlu0 %1466
        %v1468 = vsel %vm693, %v1408, 0
        %v1470 = vsel %vm693, %v1467, 0
        %1472 = vmatprep.subr.mxu0 0.0
        %1473 = vmatpush1.xpose.msra.mxu0 %v1470
        %1474 = vmatprep.subr.mxu0 0.0
        %1475 = vmatpush1.xpose.msra.mxu0 0.0
        %1476 = vmatprep.subr.mxu0 0.0
        %1477 = vmatpush1.xpose.msra.mxu0 0.0
        %1478 = vmatprep.subr.mxu0 0.0
        %1479 = vmatpush1.xpose.msra.mxu0 0.0
        %1480 = vmatprep.subr.mxu0 0.0
        %1481 = vmatpush1.xpose.msra.mxu0 0.0
        %1482 = vmatprep.subr.mxu0 0.0
        %1483 = vmatpush1.xpose.msra.mxu0 0.0
        %1484 = vmatprep.subr.mxu0 0.0
        %1485 = vmatpush1.xpose.msra.mxu0 0.0
        %1486 = vmatprep.subr.mxu0 0.0
        %1487 = vmatpush1.xpose.msra.mxu0 0.0
        %1488 = vmatprep.subr.mxu0 0.0
        %1489 = vmatpush1.xpose.msra.mxu0 0.0
        %1490 = vmatprep.subr.mxu0 0.0
        %1491 = vmatpush1.xpose.msra.mxu0 0.0
        %1492 = vmatprep.subr.mxu0 0.0
        %1493 = vmatpush1.xpose.msra.mxu0 0.0
        %1494 = vmatprep.subr.mxu0 0.0
        %1495 = vmatpush1.xpose.msra.mxu0 0.0
        %1496 = vmatprep.subr.mxu0 0.0
        %1497 = vmatpush1.xpose.msra.mxu0 0.0
        %1498 = vmatprep.subr.mxu0 0.0
        %1499 = vmatpush1.xpose.msra.mxu0 0.0
        %1500 = vmatprep.subr.mxu0 0.0
        %1501 = vmatpush1.xpose.msra.mxu0 0.0
        %1502 = vmatprep.subr.mxu0 0.0
        %1503 = vmatpush1.xpose.msra.mxu0 0.0
        %1504 = vmatprep.subr.mxu0 0.0
        %1505 = vmatpush1.xpose.msra.mxu0 0.0
        %1506 = vmatprep.subr.mxu0 0.0
        %1507 = vmatpush1.xpose.msra.mxu0 0.0
        %1508 = vmatprep.subr.mxu0 0.0
        %1509 = vmatpush1.xpose.msra.mxu0 0.0
        %1510 = vmatprep.subr.mxu0 0.0
        %1511 = vmatpush1.xpose.msra.mxu0 0.0
        %1512 = vmatprep.subr.mxu0 0.0
        %1513 = vmatpush1.xpose.msra.mxu0 0.0
        %1514 = vmatprep.subr.mxu0 0.0
        %1515 = vmatpush1.xpose.msra.mxu0 0.0
        %1516 = vmatprep.subr.mxu0 0.0
        %1517 = vmatpush1.xpose.msra.mxu0 0.0
        %1518 = vmatprep.subr.mxu0 0.0
        %1519 = vmatpush1.xpose.msra.mxu0 0.0
        %1520 = vmatprep.subr.mxu0 0.0
        %1521 = vmatpush1.xpose.msra.mxu0 0.0
        %1522 = vmatprep.subr.mxu0 0.0
        %1523 = vmatpush1.xpose.msra.mxu0 0.0
        %1524 = vmatprep.subr.mxu0 0.0
        %1525 = vmatpush1.xpose.msra.mxu0 0.0
        %1526 = vmatprep.subr.mxu0 0.0
        %1527 = vmatpush1.xpose.msra.mxu0 0.0
        %1528 = vmatprep.subr.mxu0 0.0
        %1529 = vmatpush1.xpose.msra.mxu0 0.0
        %1530 = vmatprep.subr.mxu0 0.0
        %1531 = vmatpush1.xpose.msra.mxu0 0.0
        %1532 = vmatprep.subr.mxu0 0.0
        %1533 = vmatpush1.xpose.msra.mxu0 0.0
        %1534 = vmatprep.subr.mxu0 0.0
        %1535 = vmatpush1.xpose.msra.mxu0 0.0
        %1536 = vmatprep.mubr.f32.mxu0 0.0
        %1537 = vmatmul.mubr.f32.gmra.mrb[0].mxu0 %v1468
        %v1538 = vpop.f32.mrb[0].mxu0
        %v1539 = vadd.f32 0.0, %v1538
        %v1540 = vpop.f32.mrb[0].mxu0
        %1541 = vdwg.mxu0
        %v1542 = vsel %vm770, -10000.0, %v1539
        %v1543 = vld [vmem:[#allocation2] sm:$0xff]
        %v1544 = vsel %vm693, %v1542, -inf
        %1545 = vmax.xlane.f32.xlu0 %v1544
        %v1546 = vpop.xlane.xlu0 %1545
        %v1547 = vmax.f32 %v1543, %v1546
        %v1548 = vsub.f32 %v1543, %v1547
        %v1549 = vmul.f32 %v1548, 1.442695
        %v1550 = vpow.pop %v1549
        %1552 = vset.pattern.permute.xlu0 2
        %1553 = vperm.xlu0 %1552, %v1547
        %v1554 = vpop.permute.xlu0 %1553
        %v1556 = vsub.f32 %v1542, %v1554
        %v1557 = vmul.f32 %v1556, 1.442695
        %v1558 = vpow.pop %v1557
        %v1559 = vld [vmem:[#allocation3] sm:$0xff]
        %v1560 = vmul.f32 %v1550, %v1559
        %v1561 = vsel %vm693, %v1558, 0.0
        %1562 = vadd.xlane.f32.xlu0 %v1561
        %v1563 = vpop.xlane.xlu0 %1562
        %v1564 = vadd.f32 %v1560, %v1563
        %vm1565 = vcmask 23568
        %1566 = vst.msk [vmem:[#allocation3] sm:$0xff] %vm1565, %v1564
        %v1567 = vld [vmem:[#allocation4] sm:$0xff]
        %1569 = vset.pattern.permute.xlu0 2
        %1570 = vperm.xlu0 %1569, %v1550
        %v1571 = vpop.permute.xlu0 %1570
        %v1573 = vmul.f32 %v1571, %v1567
        %v1582 = vcombine.low %v1342, %v1343
        %v1583 = vcombine.low %v1344, %v1345
        %v1584 = vcombine.low %v1346, %v1347
        %v1585 = vcombine.low %v1348, %v1349
        %v1587 = vunpack.c.l.s4 1966171168
        %v1588 = vunpack.c.0.s8 %v1587
        %v1589 = vlaneseq
        %v1590 = vshrl.u32 %v1589, 7
        %v1591 = vsub.s32 %v1588, %v1590
        %v1592 = vrot.slane %v1582, %v1591
        %v1594 = vunpack.c.l.s4 1966171168
        %v1595 = vunpack.c.0.s8 %v1594
        %v1596 = vlaneseq
        %v1597 = vshrl.u32 %v1596, 7
        %v1598 = vsub.s32 %v1595, %v1597
        %v1599 = vrot.slane %v1583, %v1598
        %v1601 = vunpack.c.l.s4 1966171168
        %v1602 = vunpack.c.0.s8 %v1601
        %v1603 = vlaneseq
        %v1604 = vshrl.u32 %v1603, 7
        %v1605 = vsub.s32 %v1602, %v1604
        %v1606 = vrot.slane %v1584, %v1605
        %v1608 = vunpack.c.l.s4 1966171168
        %v1609 = vunpack.c.0.s8 %v1608
        %v1610 = vlaneseq
        %v1611 = vshrl.u32 %v1610, 7
        %v1612 = vsub.s32 %v1609, %v1611
        %v1613 = vrot.slane %v1585, %v1612
        %v1614 = vcombine.low %v1592, %v1599
        %v1615 = vcombine.low %v1606, %v1613
        %v1617 = vunpack.c.l.s4 1966171168
        %v1618 = vunpack.c.0.s8 %v1617
        %v1619 = vlaneseq
        %v1620 = vshrl.u32 %v1619, 7
        %v1621 = vsub.s32 %v1618, %v1620
        %v1622 = vrot.slane %v1614, %v1621
        %v1624 = vunpack.c.l.s4 1966171168
        %v1625 = vunpack.c.0.s8 %v1624
        %v1626 = vlaneseq
        %v1627 = vshrl.u32 %v1626, 7
        %v1628 = vsub.s32 %v1625, %v1627
        %v1629 = vrot.slane %v1615, %v1628
        %v1630 = vcombine.low %v1622, %v1629
        %1631 = vrot.lane.b32.xlu0 %v1630, 112
        %v1632 = vpop.permute.xlu0 %1631
        %v1635 = vsel %vm693, %v1558, 0
        %1637 = vmatprep.subr.mxu0 0.0
        %1638 = vmatpush1.msra.mxu0 %v1632
        %1639 = vmatprep.subr.mxu0 0.0
        %1640 = vmatpush1.msra.mxu0 0.0
        %1641 = vmatprep.subr.mxu0 0.0
        %1642 = vmatpush1.msra.mxu0 0.0
        %1643 = vmatprep.subr.mxu0 0.0
        %1644 = vmatpush1.msra.mxu0 0.0
        %1645 = vmatprep.subr.mxu0 0.0
        %1646 = vmatpush1.msra.mxu0 0.0
        %1647 = vmatprep.subr.mxu0 0.0
        %1648 = vmatpush1.msra.mxu0 0.0
        %1649 = vmatprep.subr.mxu0 0.0
        %1650 = vmatpush1.msra.mxu0 0.0
        %1651 = vmatprep.subr.mxu0 0.0
        %1652 = vmatpush1.msra.mxu0 0.0
        %1653 = vmatprep.subr.mxu0 0.0
        %1654 = vmatpush1.msra.mxu0 0.0
        %1655 = vmatprep.subr.mxu0 0.0
        %1656 = vmatpush1.msra.mxu0 0.0
        %1657 = vmatprep.subr.mxu0 0.0
        %1658 = vmatpush1.msra.mxu0 0.0
        %1659 = vmatprep.subr.mxu0 0.0
        %1660 = vmatpush1.msra.mxu0 0.0
        %1661 = vmatprep.subr.mxu0 0.0
        %1662 = vmatpush1.msra.mxu0 0.0
        %1663 = vmatprep.subr.mxu0 0.0
        %1664 = vmatpush1.msra.mxu0 0.0
        %1665 = vmatprep.subr.mxu0 0.0
        %1666 = vmatpush1.msra.mxu0 0.0
        %1667 = vmatprep.subr.mxu0 0.0
        %1668 = vmatpush1.msra.mxu0 0.0
        %1669 = vmatprep.subr.mxu0 0.0
        %1670 = vmatpush1.msra.mxu0 0.0
        %1671 = vmatprep.subr.mxu0 0.0
        %1672 = vmatpush1.msra.mxu0 0.0
        %1673 = vmatprep.subr.mxu0 0.0
        %1674 = vmatpush1.msra.mxu0 0.0
        %1675 = vmatprep.subr.mxu0 0.0
        %1676 = vmatpush1.msra.mxu0 0.0
        %1677 = vmatprep.subr.mxu0 0.0
        %1678 = vmatpush1.msra.mxu0 0.0
        %1679 = vmatprep.subr.mxu0 0.0
        %1680 = vmatpush1.msra.mxu0 0.0
        %1681 = vmatprep.subr.mxu0 0.0
        %1682 = vmatpush1.msra.mxu0 0.0
        %1683 = vmatprep.subr.mxu0 0.0
        %1684 = vmatpush1.msra.mxu0 0.0
        %1685 = vmatprep.subr.mxu0 0.0
        %1686 = vmatpush1.msra.mxu0 0.0
        %1687 = vmatprep.subr.mxu0 0.0
        %1688 = vmatpush1.msra.mxu0 0.0
        %1689 = vmatprep.subr.mxu0 0.0
        %1690 = vmatpush1.msra.mxu0 0.0
        %1691 = vmatprep.subr.mxu0 0.0
        %1692 = vmatpush1.msra.mxu0 0.0
        %1693 = vmatprep.subr.mxu0 0.0
        %1694 = vmatpush1.msra.mxu0 0.0
        %1695 = vmatprep.subr.mxu0 0.0
        %1696 = vmatpush1.msra.mxu0 0.0
        %1697 = vmatprep.subr.mxu0 0.0
        %1698 = vmatpush1.msra.mxu0 0.0
        %1699 = vmatprep.subr.mxu0 0.0
        %1700 = vmatpush1.msra.mxu0 0.0
        %1701 = vmatprep.mubr.f32.mxu0 0.0
        %1702 = vmatmul.mubr.f32.gmra.mrb[0].mxu0 %v1635
        %v1703 = vpop.f32.mrb[0].mxu0
        %v1704 = vadd.f32 0.0, %v1703
        %v1705 = vpop.f32.mrb[0].mxu0
        %1706 = vdwg.mxu0
        %1708 = vrot.lane.b32.xlu0 %v1704, 16
        %v1709 = vpop.permute.xlu0 %1708
        %v1711 = vadd.f32 %v1573, %v1709
        %vm1712 = vcmask 195712
        %1713 = vst.msk [vmem:[#allocation4] sm:$0xff] %vm1712, %v1711
        %1714 = vst.msk [vmem:[#allocation2] sm:$0xff] %vm1565, %v1547
        %v1715 = vld [vmem:[%s473] sm:$0x1]
        %v1716 = vld [vmem:[%s473 + $0x1] sm:$0x1]
        %v1717 = vld [vmem:[%s473 + $0x2] sm:$0x1]
        %v1718 = vld [vmem:[%s473 + $0x3] sm:$0x1]
        %v1719 = vld [vmem:[%s473 + $0x4] sm:$0x1]
        %v1720 = vld [vmem:[%s473 + $0x5] sm:$0x1]
        %v1721 = vld [vmem:[%s473 + $0x6] sm:$0x1]
        %v1722 = vld [vmem:[%s473 + $0x7] sm:$0x1]
        %v1723 = vld [vmem:[%s480] sm:$0x1]
        %v1724 = vld [vmem:[%s480 + $0x1] sm:$0x1]
        %v1725 = vld [vmem:[%s480 + $0x2] sm:$0x1]
        %v1726 = vld [vmem:[%s480 + $0x3] sm:$0x1]
        %v1727 = vld [vmem:[%s480 + $0x4] sm:$0x1]
        %v1728 = vld [vmem:[%s480 + $0x5] sm:$0x1]
        %v1729 = vld [vmem:[%s480 + $0x6] sm:$0x1]
        %v1730 = vld [vmem:[%s480 + $0x7] sm:$0x1]
        %v1731 = vld [vmem:[%s487] sm:$0x1]
        %v1732 = vld [vmem:[%s487 + $0x1] sm:$0x1]
        %v1733 = vld [vmem:[%s487 + $0x2] sm:$0x1]
        %v1734 = vld [vmem:[%s487 + $0x3] sm:$0x1]
        %v1735 = vld [vmem:[%s487 + $0x4] sm:$0x1]
        %v1736 = vld [vmem:[%s487 + $0x5] sm:$0x1]
        %v1737 = vld [vmem:[%s487 + $0x6] sm:$0x1]
        %v1738 = vld [vmem:[%s487 + $0x7] sm:$0x1]
        %v1747 = vcombine.low %v1715, %v1716
        %v1748 = vcombine.low %v1717, %v1718
        %v1749 = vcombine.low %v1719, %v1720
        %v1750 = vcombine.low %v1721, %v1722
        %v1752 = vunpack.c.l.s4 1966171168
        %v1753 = vunpack.c.0.s8 %v1752
        %v1754 = vlaneseq
        %v1755 = vshrl.u32 %v1754, 7
        %v1756 = vsub.s32 %v1753, %v1755
        %v1757 = vrot.slane %v1747, %v1756
        %v1759 = vunpack.c.l.s4 1966171168
        %v1760 = vunpack.c.0.s8 %v1759
        %v1761 = vlaneseq
        %v1762 = vshrl.u32 %v1761, 7
        %v1763 = vsub.s32 %v1760, %v1762
        %v1764 = vrot.slane %v1748, %v1763
        %v1766 = vunpack.c.l.s4 1966171168
        %v1767 = vunpack.c.0.s8 %v1766
        %v1768 = vlaneseq
        %v1769 = vshrl.u32 %v1768, 7
        %v1770 = vsub.s32 %v1767, %v1769
        %v1771 = vrot.slane %v1749, %v1770
        %v1773 = vunpack.c.l.s4 1966171168
        %v1774 = vunpack.c.0.s8 %v1773
        %v1775 = vlaneseq
        %v1776 = vshrl.u32 %v1775, 7
        %v1777 = vsub.s32 %v1774, %v1776
        %v1778 = vrot.slane %v1750, %v1777
        %v1779 = vcombine.low %v1757, %v1764
        %v1780 = vcombine.low %v1771, %v1778
        %v1782 = vunpack.c.l.s4 1966171168
        %v1783 = vunpack.c.0.s8 %v1782
        %v1784 = vlaneseq
        %v1785 = vshrl.u32 %v1784, 7
        %v1786 = vsub.s32 %v1783, %v1785
        %v1787 = vrot.slane %v1779, %v1786
        %v1789 = vunpack.c.l.s4 1966171168
        %v1790 = vunpack.c.0.s8 %v1789
        %v1791 = vlaneseq
        %v1792 = vshrl.u32 %v1791, 7
        %v1793 = vsub.s32 %v1790, %v1792
        %v1794 = vrot.slane %v1780, %v1793
        %v1795 = vcombine.low %v1787, %v1794
        %1796 = vrot.lane.b32.xlu0 %v1795, 104
        %v1797 = vpop.permute.xlu0 %1796
        %v1806 = vcombine.low %v1723, %v1724
        %v1807 = vcombine.low %v1725, %v1726
        %v1808 = vcombine.low %v1727, %v1728
        %v1809 = vcombine.low %v1729, %v1730
        %v1811 = vunpack.c.l.s4 1966171168
        %v1812 = vunpack.c.0.s8 %v1811
        %v1813 = vlaneseq
        %v1814 = vshrl.u32 %v1813, 7
        %v1815 = vsub.s32 %v1812, %v1814
        %v1816 = vrot.slane %v1806, %v1815
        %v1818 = vunpack.c.l.s4 1966171168
        %v1819 = vunpack.c.0.s8 %v1818
        %v1820 = vlaneseq
        %v1821 = vshrl.u32 %v1820, 7
        %v1822 = vsub.s32 %v1819, %v1821
        %v1823 = vrot.slane %v1807, %v1822
        %v1825 = vunpack.c.l.s4 1966171168
        %v1826 = vunpack.c.0.s8 %v1825
        %v1827 = vlaneseq
        %v1828 = vshrl.u32 %v1827, 7
        %v1829 = vsub.s32 %v1826, %v1828
        %v1830 = vrot.slane %v1808, %v1829
        %v1832 = vunpack.c.l.s4 1966171168
        %v1833 = vunpack.c.0.s8 %v1832
        %v1834 = vlaneseq
        %v1835 = vshrl.u32 %v1834, 7
        %v1836 = vsub.s32 %v1833, %v1835
        %v1837 = vrot.slane %v1809, %v1836
        %v1838 = vcombine.low %v1816, %v1823
        %v1839 = vcombine.low %v1830, %v1837
        %v1841 = vunpack.c.l.s4 1966171168
        %v1842 = vunpack.c.0.s8 %v1841
        %v1843 = vlaneseq
        %v1844 = vshrl.u32 %v1843, 7
        %v1845 = vsub.s32 %v1842, %v1844
        %v1846 = vrot.slane %v1838, %v1845
        %v1848 = vunpack.c.l.s4 1966171168
        %v1849 = vunpack.c.0.s8 %v1848
        %v1850 = vlaneseq
        %v1851 = vshrl.u32 %v1850, 7
        %v1852 = vsub.s32 %v1849, %v1851
        %v1853 = vrot.slane %v1839, %v1852
        %v1854 = vcombine.low %v1846, %v1853
        %1855 = vrot.lane.b32.xlu0 %v1854, 104
        %v1856 = vpop.permute.xlu0 %1855
        %v1857 = vsel %vm693, %v1797, 0
        %v1859 = vsel %vm693, %v1856, 0
        %1861 = vmatprep.subr.mxu0 0.0
        %1862 = vmatpush1.xpose.msra.mxu0 %v1859
        %1863 = vmatprep.subr.mxu0 0.0
        %1864 = vmatpush1.xpose.msra.mxu0 0.0
        %1865 = vmatprep.subr.mxu0 0.0
        %1866 = vmatpush1.xpose.msra.mxu0 0.0
        %1867 = vmatprep.subr.mxu0 0.0
        %1868 = vmatpush1.xpose.msra.mxu0 0.0
        %1869 = vmatprep.subr.mxu0 0.0
        %1870 = vmatpush1.xpose.msra.mxu0 0.0
        %1871 = vmatprep.subr.mxu0 0.0
        %1872 = vmatpush1.xpose.msra.mxu0 0.0
        %1873 = vmatprep.subr.mxu0 0.0
        %1874 = vmatpush1.xpose.msra.mxu0 0.0
        %1875 = vmatprep.subr.mxu0 0.0
        %1876 = vmatpush1.xpose.msra.mxu0 0.0
        %1877 = vmatprep.subr.mxu0 0.0
        %1878 = vmatpush1.xpose.msra.mxu0 0.0
        %1879 = vmatprep.subr.mxu0 0.0
        %1880 = vmatpush1.xpose.msra.mxu0 0.0
        %1881 = vmatprep.subr.mxu0 0.0
        %1882 = vmatpush1.xpose.msra.mxu0 0.0
        %1883 = vmatprep.subr.mxu0 0.0
        %1884 = vmatpush1.xpose.msra.mxu0 0.0
        %1885 = vmatprep.subr.mxu0 0.0
        %1886 = vmatpush1.xpose.msra.mxu0 0.0
        %1887 = vmatprep.subr.mxu0 0.0
        %1888 = vmatpush1.xpose.msra.mxu0 0.0
        %1889 = vmatprep.subr.mxu0 0.0
        %1890 = vmatpush1.xpose.msra.mxu0 0.0
        %1891 = vmatprep.subr.mxu0 0.0
        %1892 = vmatpush1.xpose.msra.mxu0 0.0
        %1893 = vmatprep.subr.mxu0 0.0
        %1894 = vmatpush1.xpose.msra.mxu0 0.0
        %1895 = vmatprep.subr.mxu0 0.0
        %1896 = vmatpush1.xpose.msra.mxu0 0.0
        %1897 = vmatprep.subr.mxu0 0.0
        %1898 = vmatpush1.xpose.msra.mxu0 0.0
        %1899 = vmatprep.subr.mxu0 0.0
        %1900 = vmatpush1.xpose.msra.mxu0 0.0
        %1901 = vmatprep.subr.mxu0 0.0
        %1902 = vmatpush1.xpose.msra.mxu0 0.0
        %1903 = vmatprep.subr.mxu0 0.0
        %1904 = vmatpush1.xpose.msra.mxu0 0.0
        %1905 = vmatprep.subr.mxu0 0.0
        %1906 = vmatpush1.xpose.msra.mxu0 0.0
        %1907 = vmatprep.subr.mxu0 0.0
        %1908 = vmatpush1.xpose.msra.mxu0 0.0
        %1909 = vmatprep.subr.mxu0 0.0
        %1910 = vmatpush1.xpose.msra.mxu0 0.0
        %1911 = vmatprep.subr.mxu0 0.0
        %1912 = vmatpush1.xpose.msra.mxu0 0.0
        %1913 = vmatprep.subr.mxu0 0.0
        %1914 = vmatpush1.xpose.msra.mxu0 0.0
        %1915 = vmatprep.subr.mxu0 0.0
        %1916 = vmatpush1.xpose.msra.mxu0 0.0
        %1917 = vmatprep.subr.mxu0 0.0
        %1918 = vmatpush1.xpose.msra.mxu0 0.0
        %1919 = vmatprep.subr.mxu0 0.0
        %1920 = vmatpush1.xpose.msra.mxu0 0.0
        %1921 = vmatprep.subr.mxu0 0.0
        %1922 = vmatpush1.xpose.msra.mxu0 0.0
        %1923 = vmatprep.subr.mxu0 0.0
        %1924 = vmatpush1.xpose.msra.mxu0 0.0
        %1925 = vmatprep.mubr.f32.mxu0 0.0
        %1926 = vmatmul.mubr.f32.gmra.mrb[0].mxu0 %v1857
        %v1927 = vpop.f32.mrb[0].mxu0
        %v1928 = vadd.f32 0.0, %v1927
        %v1929 = vpop.f32.mrb[0].mxu0
        %1930 = vdwg.mxu0
        %v1931 = vsel %vm770, -10000.0, %v1928
        %v1932 = vld [vmem:[#allocation2] sm:$0xff]
        %v1933 = vsel %vm693, %v1931, -inf
        %1934 = vmax.xlane.f32.xlu0 %v1933
        %v1935 = vpop.xlane.xlu0 %1934
        %v1936 = vmax.f32 %v1932, %v1935
        %v1937 = vsub.f32 %v1932, %v1936
        %v1938 = vmul.f32 %v1937, 1.442695
        %v1939 = vpow.pop %v1938
        %1941 = vset.pattern.permute.xlu0 3
        %1942 = vperm.xlu0 %1941, %v1936
        %v1943 = vpop.permute.xlu0 %1942
        %v1945 = vsub.f32 %v1931, %v1943
        %v1946 = vmul.f32 %v1945, 1.442695
        %v1947 = vpow.pop %v1946
        %v1948 = vld [vmem:[#allocation3] sm:$0xff]
        %v1949 = vmul.f32 %v1939, %v1948
        %v1950 = vsel %vm693, %v1947, 0.0
        %1951 = vadd.xlane.f32.xlu0 %v1950
        %v1952 = vpop.xlane.xlu0 %1951
        %v1953 = vadd.f32 %v1949, %v1952
        %vm1954 = vcmask 31768
        %1955 = vst.msk [vmem:[#allocation3] sm:$0xff] %vm1954, %v1953
        %v1956 = vld [vmem:[#allocation4] sm:$0xff]
        %1958 = vset.pattern.permute.xlu0 3
        %1959 = vperm.xlu0 %1958, %v1939
        %v1960 = vpop.permute.xlu0 %1959
        %v1962 = vmul.f32 %v1960, %v1956
        %v1971 = vcombine.low %v1731, %v1732
        %v1972 = vcombine.low %v1733, %v1734
        %v1973 = vcombine.low %v1735, %v1736
        %v1974 = vcombine.low %v1737, %v1738
        %v1976 = vunpack.c.l.s4 1966171168
        %v1977 = vunpack.c.0.s8 %v1976
        %v1978 = vlaneseq
        %v1979 = vshrl.u32 %v1978, 7
        %v1980 = vsub.s32 %v1977, %v1979
        %v1981 = vrot.slane %v1971, %v1980
        %v1983 = vunpack.c.l.s4 1966171168
        %v1984 = vunpack.c.0.s8 %v1983
        %v1985 = vlaneseq
        %v1986 = vshrl.u32 %v1985, 7
        %v1987 = vsub.s32 %v1984, %v1986
        %v1988 = vrot.slane %v1972, %v1987
        %v1990 = vunpack.c.l.s4 1966171168
        %v1991 = vunpack.c.0.s8 %v1990
        %v1992 = vlaneseq
        %v1993 = vshrl.u32 %v1992, 7
        %v1994 = vsub.s32 %v1991, %v1993
        %v1995 = vrot.slane %v1973, %v1994
        %v1997 = vunpack.c.l.s4 1966171168
        %v1998 = vunpack.c.0.s8 %v1997
        %v1999 = vlaneseq
        %v2000 = vshrl.u32 %v1999, 7
        %v2001 = vsub.s32 %v1998, %v2000
        %v2002 = vrot.slane %v1974, %v2001
        %v2003 = vcombine.low %v1981, %v1988
        %v2004 = vcombine.low %v1995, %v2002
        %v2006 = vunpack.c.l.s4 1966171168
        %v2007 = vunpack.c.0.s8 %v2006
        %v2008 = vlaneseq
        %v2009 = vshrl.u32 %v2008, 7
        %v2010 = vsub.s32 %v2007, %v2009
        %v2011 = vrot.slane %v2003, %v2010
        %v2013 = vunpack.c.l.s4 1966171168
        %v2014 = vunpack.c.0.s8 %v2013
        %v2015 = vlaneseq
        %v2016 = vshrl.u32 %v2015, 7
        %v2017 = vsub.s32 %v2014, %v2016
        %v2018 = vrot.slane %v2004, %v2017
        %v2019 = vcombine.low %v2011, %v2018
        %2020 = vrot.lane.b32.xlu0 %v2019, 104
        %v2021 = vpop.permute.xlu0 %2020
        %v2024 = vsel %vm693, %v1947, 0
        %2026 = vmatprep.subr.mxu0 0.0
        %2027 = vmatpush1.msra.mxu0 %v2021
        %2028 = vmatprep.subr.mxu0 0.0
        %2029 = vmatpush1.msra.mxu0 0.0
        %2030 = vmatprep.subr.mxu0 0.0
        %2031 = vmatpush1.msra.mxu0 0.0
        %2032 = vmatprep.subr.mxu0 0.0
        %2033 = vmatpush1.msra.mxu0 0.0
        %2034 = vmatprep.subr.mxu0 0.0
        %2035 = vmatpush1.msra.mxu0 0.0
        %2036 = vmatprep.subr.mxu0 0.0
        %2037 = vmatpush1.msra.mxu0 0.0
        %2038 = vmatprep.subr.mxu0 0.0
        %2039 = vmatpush1.msra.mxu0 0.0
        %2040 = vmatprep.subr.mxu0 0.0
        %2041 = vmatpush1.msra.mxu0 0.0
        %2042 = vmatprep.subr.mxu0 0.0
        %2043 = vmatpush1.msra.mxu0 0.0
        %2044 = vmatprep.subr.mxu0 0.0
        %2045 = vmatpush1.msra.mxu0 0.0
        %2046 = vmatprep.subr.mxu0 0.0
        %2047 = vmatpush1.msra.mxu0 0.0
        %2048 = vmatprep.subr.mxu0 0.0
        %2049 = vmatpush1.msra.mxu0 0.0
        %2050 = vmatprep.subr.mxu0 0.0
        %2051 = vmatpush1.msra.mxu0 0.0
        %2052 = vmatprep.subr.mxu0 0.0
        %2053 = vmatpush1.msra.mxu0 0.0
        %2054 = vmatprep.subr.mxu0 0.0
        %2055 = vmatpush1.msra.mxu0 0.0
        %2056 = vmatprep.subr.mxu0 0.0
        %2057 = vmatpush1.msra.mxu0 0.0
        %2058 = vmatprep.subr.mxu0 0.0
        %2059 = vmatpush1.msra.mxu0 0.0
        %2060 = vmatprep.subr.mxu0 0.0
        %2061 = vmatpush1.msra.mxu0 0.0
        %2062 = vmatprep.subr.mxu0 0.0
        %2063 = vmatpush1.msra.mxu0 0.0
        %2064 = vmatprep.subr.mxu0 0.0
        %2065 = vmatpush1.msra.mxu0 0.0
        %2066 = vmatprep.subr.mxu0 0.0
        %2067 = vmatpush1.msra.mxu0 0.0
        %2068 = vmatprep.subr.mxu0 0.0
        %2069 = vmatpush1.msra.mxu0 0.0
        %2070 = vmatprep.subr.mxu0 0.0
        %2071 = vmatpush1.msra.mxu0 0.0
        %2072 = vmatprep.subr.mxu0 0.0
        %2073 = vmatpush1.msra.mxu0 0.0
        %2074 = vmatprep.subr.mxu0 0.0
        %2075 = vmatpush1.msra.mxu0 0.0
        %2076 = vmatprep.subr.mxu0 0.0
        %2077 = vmatpush1.msra.mxu0 0.0
        %2078 = vmatprep.subr.mxu0 0.0
        %2079 = vmatpush1.msra.mxu0 0.0
        %2080 = vmatprep.subr.mxu0 0.0
        %2081 = vmatpush1.msra.mxu0 0.0
        %2082 = vmatprep.subr.mxu0 0.0
        %2083 = vmatpush1.msra.mxu0 0.0
        %2084 = vmatprep.subr.mxu0 0.0
        %2085 = vmatpush1.msra.mxu0 0.0
        %2086 = vmatprep.subr.mxu0 0.0
        %2087 = vmatpush1.msra.mxu0 0.0
        %2088 = vmatprep.subr.mxu0 0.0
        %2089 = vmatpush1.msra.mxu0 0.0
        %2090 = vmatprep.mubr.f32.mxu0 0.0
        %2091 = vmatmul.mubr.f32.gmra.mrb[0].mxu0 %v2024
        %v2092 = vpop.f32.mrb[0].mxu0
        %v2093 = vadd.f32 0.0, %v2092
        %v2094 = vpop.f32.mrb[0].mxu0
        %2095 = vdwg.mxu0
        %2097 = vrot.lane.b32.xlu0 %v2093, 24
        %v2098 = vpop.permute.xlu0 %2097
        %v2100 = vadd.f32 %v1962, %v2098
        %vm2101 = vcmask 261312
        %2102 = vst.msk [vmem:[#allocation4] sm:$0xff] %vm2101, %v2100
        %2103 = vst.msk [vmem:[#allocation2] sm:$0xff] %vm1954, %v1936
        // Predicated region
        $region164: #{parallel_attention_forward.4} parent=146 // pred_check
          %p2104 = pneg %p544
        $region165: #{parallel_attention_forward.4} parent=146 // pred_check_branch
          %2106 = sbr.rel (%p2104) target = $region167
        $region166: #{parallel_attention_forward.4} parent=146 // pred_region
          %v2107 = vld [vmem:[#allocation3] sm:$0xff]
          %v2108 = vrcp.pop %v2107
          %v2109 = vld [vmem:[#allocation4] sm:$0xff]
          %2111 = vset.pattern.permute.xlu0 0
          %2112 = vperm.xlu0 %2111, %v2108
          %v2113 = vpop.permute.xlu0 %2112
          %v2115 = vmul.f32 %v2109, %v2113
          %2116 = vst.msk [vmem:[#allocation4] sm:$0xff] %vm693, %v2115
          %v2117 = vld [vmem:[#allocation4] sm:$0xff]
          %2118 = vset.pattern.permute.xlu0 1
          %2119 = vperm.xlu0 %2118, %v2108
          %v2120 = vpop.permute.xlu0 %2119
          %v2122 = vmul.f32 %v2117, %v2120
          %2123 = vst.msk [vmem:[#allocation4] sm:$0xff] %vm1323, %v2122
          %v2124 = vld [vmem:[#allocation4] sm:$0xff]
          %2125 = vset.pattern.permute.xlu0 2
          %2126 = vperm.xlu0 %2125, %v2108
          %v2127 = vpop.permute.xlu0 %2126
          %v2129 = vmul.f32 %v2124, %v2127
          %2130 = vst.msk [vmem:[#allocation4] sm:$0xff] %vm1712, %v2129
          %v2131 = vld [vmem:[#allocation4] sm:$0xff]
          %2132 = vset.pattern.permute.xlu0 3
          %2133 = vperm.xlu0 %2132, %v2108
          %v2134 = vpop.permute.xlu0 %2133
          %v2136 = vmul.f32 %v2131, %v2134
          %2137 = vst.msk [vmem:[#allocation4] sm:$0xff] %vm2101, %v2136
          %v2138 = vld [vmem:[#allocation4] sm:$0xff]
          %v2140 = vcombine.high %v2138, %v2138
          %v2142 = vunpack.c.l.s4 1966171168
          %v2143 = vunpack.c.0.s8 %v2142
          %v2144 = vlaneseq
          %v2145 = vshrl.u32 %v2144, 7
          %v2146 = vsub.s32 %v2143, %v2145
          %v2147 = vrot.slane %v2138, %v2146
          %v2149 = vunpack.c.l.s4 1966171168
          %v2150 = vunpack.c.0.s8 %v2149
          %v2151 = vlaneseq
          %v2152 = vshrl.u32 %v2151, 7
          %v2153 = vsub.s32 %v2150, %v2152
          %v2154 = vrot.slane %v2140, %v2153
          %v2155 = vcombine.high %v2147, %v2147
          %v2156 = vcombine.high %v2154, %v2154
          %v2158 = vunpack.c.l.s4 1966171168
          %v2159 = vunpack.c.0.s8 %v2158
          %v2160 = vlaneseq
          %v2161 = vshrl.u32 %v2160, 7
          %v2162 = vsub.s32 %v2159, %v2161
          %v2163 = vrot.slane %v2147, %v2162
          %v2165 = vunpack.c.l.s4 1966171168
          %v2166 = vunpack.c.0.s8 %v2165
          %v2167 = vlaneseq
          %v2168 = vshrl.u32 %v2167, 7
          %v2169 = vsub.s32 %v2166, %v2168
          %v2170 = vrot.slane %v2154, %v2169
          %v2172 = vunpack.c.l.s4 1966171168
          %v2173 = vunpack.c.0.s8 %v2172
          %v2174 = vlaneseq
          %v2175 = vshrl.u32 %v2174, 7
          %v2176 = vsub.s32 %v2173, %v2175
          %v2177 = vrot.slane %v2155, %v2176
          %v2179 = vunpack.c.l.s4 1966171168
          %v2180 = vunpack.c.0.s8 %v2179
          %v2181 = vlaneseq
          %v2182 = vshrl.u32 %v2181, 7
          %v2183 = vsub.s32 %v2180, %v2182
          %v2184 = vrot.slane %v2156, %v2183
          %v2185 = vcombine.high %v2163, %v2163
          %v2186 = vcombine.high %v2170, %v2170
          %v2187 = vcombine.high %v2177, %v2177
          %v2188 = vcombine.high %v2184, %v2184
          %vm2197 = vcmask 253952
          %2198 = vst.msk [vmem:[%s527] sm:$0x1] %vm2197, %v2163
          %2199 = vst.msk [vmem:[%s527 + $0x1] sm:$0x1] %vm2197, %v2177
          %2200 = vst.msk [vmem:[%s527 + $0x2] sm:$0x1] %vm2197, %v2185
          %2201 = vst.msk [vmem:[%s527 + $0x3] sm:$0x1] %vm2197, %v2187
          %2202 = vst.msk [vmem:[%s527 + $0x4] sm:$0x1] %vm2197, %v2170
          %2203 = vst.msk [vmem:[%s527 + $0x5] sm:$0x1] %vm2197, %v2184
          %2204 = vst.msk [vmem:[%s527 + $0x6] sm:$0x1] %vm2197, %v2186
          %2205 = vst.msk [vmem:[%s527 + $0x7] sm:$0x1] %vm2197, %v2188
        $region167: #{parallel_attention_forward.4} parent=146 // pred_fallthru
          _
        %s2206 = sand.u32 %s176, 1
        %s2207 = scalar_lea.sflag [#allocation9], %s2206
        %s2208 = sand.u32 %s176, 1
        %s2209 = smul.addr %s2208, 8
        %s2210 = scalar_lea.vmem [#allocation8], %s2209
        // Predicated region
        $region168: #{parallel_attention_forward.4} parent=146 // pred_check
          %p2211 = pneg %p186
        $region169: #{parallel_attention_forward.4} parent=146 // pred_check_branch
          %2213 = sbr.rel (%p2211) target = $region171
        $region170: #{parallel_attention_forward.4} parent=146 // pred_region
          %s2214 = smul.u32 8, %s26
          %s2216 = ssub.s32 128, 128
          %2217 = vsyncadd %s2207, %s2216
          %s2218 = sadd.s32 %s25, %s24
          %s2219 = smul.addr %s2214, 2
          %s2220 = sadd.s32 %s2218, %s2219
          %s2221 = smul.addr %s2220, 16
          %s2222 = scalar_lea.hbm %s4, %s2221
          %s2223 = sshll.u32 %s2210, 4
          %s2224 = int_to_ptr.vmem [resolvable:$true] %s2223
          %2229 = dma.vmem_to_hbm [thread:$0]  %s2224, 128, %s2222, %s2207, 16, 32, 1
        $region171: #{parallel_attention_forward.4} parent=146 // pred_fallthru
          _
      $region147: #{parallel_attention_forward.4} parent=5 // pred_fallthru
        _
      %p2230 = scmp.le.s32.totalorder 2, %s13
      // Predicated region
      $region172: #{parallel_attention_forward.4} parent=5 // pred_check
        %p2231 = pneg %p2230
      $region173: #{parallel_attention_forward.4} parent=5 // pred_check_branch
        %2233 = sbr.rel (%p2231) target = $region175
      $region174: #{parallel_attention_forward.4} parent=5 // pred_region
        %s2234 = ssub.s32 %s13, 2
        // Predicated region
        $region176: #{parallel_attention_forward.4} parent=174 // pred_check
          %p2235 = pneg %p192
        $region177: #{parallel_attention_forward.4} parent=174 // pred_check_branch
          %2237 = sbr.rel (%p2235) target = $region179
        $region178: #{parallel_attention_forward.4} parent=174 // pred_region
          %s2238 = sand.u32 %s177, 1
          %s2239 = scalar_lea.sflag [#allocation9], %s2238
          %s2240 = sand.u32 %s177, 1
          %s2241 = smul.addr %s2240, 8
          %s2242 = scalar_lea.vmem [#allocation8], %s2241
          %2243 = dma.done %s2239, 128
        $region179: #{parallel_attention_forward.4} parent=174 // pred_fallthru
          _
      $region175: #{parallel_attention_forward.4} parent=5 // pred_fallthru
        _
    $region6: #{parallel_attention_forward.4} parent=1 // loop_footer
      %s17 = sadd.s32 1, %s13
    $region7: #{parallel_attention_forward.4} parent=1 // loop_footer_branch
      %12 = sbr.rel target = $region3
    $region8: #{parallel_attention_forward.4} parent=1 // loop_exit
      _
    %2244 = vsyncpa [#allocation9], 1
    %s2245 = scalar_lea.sflag [#allocation9], 1
    %2246 = vsyncpa %s2245, 1

</llo_original>
